<compile_context>
chip_gen: v7x
topology: tpu7x:2x2x1
jax: 0.10.0
libtpu: 0.0.40
codegen_flags: <defaults>
</compile_context>

<pallas_src>
import functools

import jax
import jax.numpy as jnp
from jax import lax
from jax.experimental import pallas as pl
from jax.experimental.pallas import tpu as pltpu


def _chemp_kernel(p_ref, j_ref, z_ref, jd_ref, sym_row_ref, sym_col_ref, sv_ref,
                  h0_ref, *rest):
    """Fused CHEMP forward for one batch element (grid axis = batch).

    rest = [w_ih_l, w_hh_l, b_gi_l, b_gh_l] * R      packed GRU weights
         + [w_head (H, L+1), b_head (1, L+1)]        fused likelihood|delta head
         + out_p_ref (1, L, N), out_h_ref (1, R, H)
    """
    f32 = jnp.float32
    L, N = p_ref.shape[1], p_ref.shape[2]
    R, H = h0_ref.shape[1], h0_ref.shape[2]
    n_w = 4 * R + 2
    w_refs = rest[:n_w]
    out_p_ref = rest[n_w]
    out_h_ref = rest[n_w + 1]

    p_pre = p_ref[0]                      # [L, N]
    j = j_ref[0]                          # [N, N]
    z = z_ref[0]                          # [1, N]
    jd = jd_ref[0]                        # [1, N]  diag(J), precomputed host-side
    sym = sym_row_ref[...]                # [2, L]  rows: symbols, symbols**2
    sym_col = sym_col_ref[...]            # [L, 2]  cols: s_add, s_minor
    sv = sv_ref[...]                      # [1, 1]  sigma_square_v

    # ------------------- moment matching / likelihood -------------------
    nt = (((1,), (1,)), ((), ()))         # contract on axis 1 of both operands
    expectation = jnp.dot(sym[0:1, :], p_pre, preferred_element_type=f32)   # [1, N]
    second_mom = jnp.dot(sym[1:2, :], p_pre, preferred_element_type=f32)    # [1, N]
    var = second_mom - expectation * expectation                            # [1, N]
    mu = lax.dot_general(expectation, j, nt, preferred_element_type=f32) \
        - expectation * jd                                                  # [1, N]
    # sigma_sq >= sv for valid p_pre (the subtracted diagonal term is part of the
    # sum), so no clamp is added -- matches the unclamped PyTorch reference.
    sigma_sq = lax.dot_general(var, j * j, nt, preferred_element_type=f32) \
        + sv - var * (jd * jd)                                              # [1, N]

    zm = 2.0 * (z - mu)                                                     # [1, N]
    s_add = sym_col[:, 0:1]                                                 # [L, 1]
    s_minor = sym_col[:, 1:2]                                               # [L, 1]
    inv_2sig = 0.5 * pl.reciprocal(sigma_sq, approx=True)                   # EUP slot
    lik = (zm - s_add * jd) * (s_minor * jd) * inv_2sig                     # [L, N]
    lik = jnp.where(lik > 88.0, 88.0, lik)

    # GRU consumes the sequence time-major; single in-vreg (4,8) transpose.
    x = lik.T                                                               # [N, L]

    # ------------- multi-layer GRU: layer-outer / time-inner -------------
    h0 = h0_ref[0]                        # [R, H]
    h_finals = []
    for layer in range(R):
        w_ih = w_refs[4 * layer + 0][...]   # [in_l, 3H]  gate columns [r | z | n]
        w_hh = w_refs[4 * layer + 1][...]   # [H, 3H]
        b_gi = w_refs[4 * layer + 2][...]   # [1, 3H] = b_ih + [b_hh_r | b_hh_z | 0]
        b_gh = w_refs[4 * layer + 3][...]   # [1, 3H] = [0 | 0 | b_hh_n]

        # Hoisted input projection: one fused-gate matmul for the whole sequence.
        gi_all = jnp.dot(x, w_ih, preferred_element_type=f32) + b_gi        # [N, 3H]

        h = h0[layer:layer + 1, :]                                          # [1, H]
        outs = []
        for t in range(N):                # static unroll: only h @ W_hh stays serial
            gi = gi_all[t:t + 1, :]                                         # [1, 3H]
            gh = jnp.dot(h, w_hh, preferred_element_type=f32) + b_gh        # [1, 3H]
            r = jax.nn.sigmoid(gi[:, :H] + gh[:, :H])
            zg = jax.nn.sigmoid(gi[:, H:2 * H] + gh[:, H:2 * H])
            ng = jnp.tanh(gi[:, 2 * H:] + r * gh[:, 2 * H:])
            h = (1.0 - zg) * ng + zg * h
            outs.append(h)
        h_finals.append(h)
        x = jnp.concatenate(outs, axis=0)                                   # [N, H]

    out_h_ref[0] = jnp.concatenate(h_finals, axis=0)                        # [R, H]

    # ---------- fused output heads + softmax over L + blend ----------
    w_head = w_refs[4 * R + 0][...]       # [H, L + 1]  (likelihood cols | delta col)
    b_head = w_refs[4 * R + 1][...]       # [1, L + 1]
    lt_d = jnp.dot(x, w_head, preferred_element_type=f32) + b_head          # [N, L+1]
    lt_raw = lt_d[:, :L]
    lt = jnp.where(lt_raw > 88.0, 88.0, lt_raw)                             # [N, L]
    delta = jax.nn.sigmoid(lt_d[:, L:L + 1])                                # [N, 1]

    m = jnp.max(lt, axis=1, keepdims=True)
    e = jnp.exp(lt - m)
    p_tilde = e * pl.reciprocal(jnp.sum(e, axis=1, keepdims=True), approx=True)

    d_row = delta.T                                                         # [1, N]
    # Blend and store directly in the module's native [B, L, N] layout.
    out_p_ref[0] = p_tilde.T * (1.0 - d_row) + p_pre * d_row                # [L, N]


# ---------------------------------------------------------------------------
# Wrapper
# ---------------------------------------------------------------------------
def chemp_forward(packed, z, j_matrix, p_pre, h_pre, sigma_square_v):
    f32 = jnp.float32
    B, L, N = p_pre.shape
    R, _, H = h_pre.shape

    # Tiny host-graph prep only (O(B*N) / O(R*B*H) scalars; no [B,L,N] round trips).
    z3 = z.astype(f32).reshape(B, 1, N)
    jd3 = jnp.diagonal(j_matrix.astype(f32), axis1=1, axis2=2).reshape(B, 1, N)
    sv = jnp.asarray(sigma_square_v, f32).reshape(1, 1)
    # [R,B,H] -> [B,R,H] (512 B) so the hidden state blocks per batch element.
    h0 = jnp.transpose(h_pre.astype(f32), (1, 0, 2))

    weight_args = []
    weight_specs = []
    for layer in range(R):
        for name in ("w_ih", "w_hh", "b_gi", "b_gh"):
            w = packed[f"{name}_{layer}"]
            weight_args.append(w)
            weight_specs.append(pl.BlockSpec(w.shape, lambda b, nd=w.ndim: (0,) * nd))
    for name in ("w_head", "b_head"):
        w = packed[name]
        weight_args.append(w)
        weight_specs.append(pl.BlockSpec(w.shape, lambda b, nd=w.ndim: (0,) * nd))

    p, h_out = pl.pallas_call(
        _chemp_kernel,
        out_shape=(
            jax.ShapeDtypeStruct((B, L, N), f32),
            jax.ShapeDtypeStruct((B, R, H), f32),
        ),
        grid_spec=pltpu.PrefetchScalarGridSpec(
            num_scalar_prefetch=0,
            grid=(B,),
            in_specs=[
                pl.BlockSpec((1, L, N), lambda b: (b, 0, 0)),   # p_pre
                pl.BlockSpec((1, N, N), lambda b: (b, 0, 0)),   # j_matrix
                pl.BlockSpec((1, 1, N), lambda b: (b, 0, 0)),   # z
                pl.BlockSpec((1, 1, N), lambda b: (b, 0, 0)),   # diag(J)
                pl.BlockSpec((2, L), lambda b: (0, 0)),         # [symbols; symbols^2]
                pl.BlockSpec((L, 2), lambda b: (0, 0)),         # [s_add, s_minor]
                pl.BlockSpec((1, 1), lambda b: (0, 0)),         # sigma_square_v
                pl.BlockSpec((1, R, H), lambda b: (b, 0, 0)),   # h_pre (batch-major)
            ] + weight_specs,
            out_specs=[
                pl.BlockSpec((1, L, N), lambda b: (b, 0, 0)),   # p (native layout)
                pl.BlockSpec((1, R, H), lambda b: (b, 0, 0)),   # h (batch-major)
            ],
        ),
        compiler_params=pltpu.CompilerParams(
            # Batch elements are fully independent: shards over the 2 TCs on v7x,
            # plain 2-iteration loop (~0.7 us total grid overhead) on v5e/v6e.
            dimension_semantics=("parallel",)),
    )(p_pre.astype(f32), j_matrix.astype(f32), z3, jd3,
      packed["sym_row"], packed["sym_col"], sv, h0, *weight_args)

    # Back to the torch.nn.GRU hidden-state convention [R, B, H] (512 B relayout).
    return p, jnp.transpose(h_out, (1, 0, 2))


# ---------------------------------------------------------------------------
# One-time packing of torch-convention parameters into kernel-friendly layout.
# torch.nn.GRU stores weight_ih_l{k} as [3H, in] with gate order (r, z, n).
# ---------------------------------------------------------------------------
def pack_params(raw, length, hidden_size, rnn_layers):
    f32 = jnp.float32
    H = hidden_size
    symbols = raw["symbols"].astype(f32)
    packed = {
        "sym_row": jnp.stack([symbols, symbols * symbols], axis=0),                  # [2, L]
        "sym_col": jnp.stack([symbols + symbols[0], symbols - symbols[0]], axis=1),  # [L, 2]
        # fused head: L likelihood columns + 1 delta column
        "w_head": jnp.concatenate(
            [raw["w_likelihood"].T, raw["w_delta"].T], axis=1).astype(f32),          # [H, L+1]
        "b_head": jnp.concatenate(
            [raw["b_likelihood"], raw["b_delta"]]).reshape(1, length + 1).astype(f32),
    }
    for l in range(rnn_layers):
        w_ih = raw[f"weight_ih_l{l}"].astype(f32)    # [3H, in_l], gates (r, z, n)
        w_hh = raw[f"weight_hh_l{l}"].astype(f32)    # [3H, H]
        b_ih = raw[f"bias_ih_l{l}"].astype(f32)      # [3H]
        b_hh = raw[f"bias_hh_l{l}"].astype(f32)      # [3H]
        packed[f"w_ih_{l}"] = w_ih.T                 # [in_l, 3H], columns = [r | z | n]
        packed[f"w_hh_{l}"] = w_hh.T                 # [H, 3H]
        # b_hh for r/z commutes with the gate sum -> fold into the hoisted input
        # projection; only the n-gate b_hh must stay inside the r-modulated term.
        b_gi = b_ih + jnp.concatenate([b_hh[:2 * H], jnp.zeros((H,), f32)])
        b_gh = jnp.concatenate([jnp.zeros((2 * H,), f32), b_hh[2 * H:]])
        packed[f"b_gi_{l}"] = b_gi.reshape(1, 3 * H)
        packed[f"b_gh_{l}"] = b_gh.reshape(1, 3 * H)
    return packed


# ---------------------------------------------------------------------------
# Deterministic synthetic init matching CHEMPLayer.__init__ / torch.nn.GRU shapes.
# ---------------------------------------------------------------------------
def init_params(key, length, hidden_size, rnn_layers):
    f32 = jnp.float32
    keys = jax.random.split(key, 2 + 4 * rnn_layers)
    raw = {
        "symbols": jnp.linspace(1 - length, length - 1, length, dtype=f32),
        "w_likelihood": jax.random.normal(keys[0], (length, hidden_size), f32),
        "b_likelihood": jnp.zeros((length,), f32),
        "w_delta": jax.random.normal(keys[1], (1, hidden_size), f32),
        "b_delta": jnp.zeros((1,), f32),
    }
    k = 1.0 / float(hidden_size) ** 0.5
    for l in range(rnn_layers):
        in_l = length if l == 0 else hidden_size
        base = 2 + 4 * l
        raw[f"weight_ih_l{l}"] = jax.random.uniform(
            keys[base + 0], (3 * hidden_size, in_l), f32, -k, k)
        raw[f"weight_hh_l{l}"] = jax.random.uniform(
            keys[base + 1], (3 * hidden_size, hidden_size), f32, -k, k)
        raw[f"bias_ih_l{l}"] = jax.random.uniform(
            keys[base + 2], (3 * hidden_size,), f32, -k, k)
        raw[f"bias_hh_l{l}"] = jax.random.uniform(
            keys[base + 3], (3 * hidden_size,), f32, -k, k)
    return raw


if __name__ == "__main__":
    B, L, N, H, R = 2, 4, 8, 32, 2   # batch, alphabet length, streams (seq), hidden, layers

    key = jax.random.PRNGKey(0)
    kp, kz, kj, kpp, kh = jax.random.split(key, 5)

    raw_params = init_params(kp, L, H, R)
    packed = pack_params(raw_params, L, H, R)

    z = jax.random.normal(kz, (B, N), jnp.float32)
    j_matrix = jax.random.normal(kj, (B, N, N), jnp.float32)
    p_pre = jax.nn.softmax(jax.random.normal(kpp, (B, L, N), jnp.float32), axis=1)
    h_pre = jax.random.normal(kh, (R, B, H), jnp.float32)
    sigma_square_v = 0.5

    fwd = jax.jit(functools.partial(chemp_forward, packed))
    p, h = fwd(z, j_matrix, p_pre, h_pre, sigma_square_v)
    jax.block_until_ready((p, h))

    assert p.shape == (B, L, N) and h.shape == (R, B, H)
    assert bool(jnp.all(jnp.isfinite(p))) and bool(jnp.all(jnp.isfinite(h)))
    print("KERNEL_OK")
</pallas_src>

<mosaic_0001>
module attributes {stable_mosaic.version = 11 : i64} {
  func.func @_chemp_kernel(%arg0: i32, %arg1: memref<1x4x8xf32, #tpu.memory_space<vmem>>, %arg2: memref<1x8x8xf32, #tpu.memory_space<vmem>>, %arg3: memref<1x1x8xf32, #tpu.memory_space<vmem>>, %arg4: memref<1x1x8xf32, #tpu.memory_space<vmem>>, %arg5: memref<2x4xf32, #tpu.memory_space<vmem>>, %arg6: memref<4x2xf32, #tpu.memory_space<vmem>>, %arg7: memref<1x1xf32, #tpu.memory_space<vmem>>, %arg8: memref<1x2x32xf32, #tpu.memory_space<vmem>>, %arg9: memref<4x96xf32, #tpu.memory_space<vmem>>, %arg10: memref<32x96xf32, #tpu.memory_space<vmem>>, %arg11: memref<1x96xf32, #tpu.memory_space<vmem>>, %arg12: memref<1x96xf32, #tpu.memory_space<vmem>>, %arg13: memref<32x96xf32, #tpu.memory_space<vmem>>, %arg14: memref<32x96xf32, #tpu.memory_space<vmem>>, %arg15: memref<1x96xf32, #tpu.memory_space<vmem>>, %arg16: memref<1x96xf32, #tpu.memory_space<vmem>>, %arg17: memref<32x5xf32, #tpu.memory_space<vmem>>, %arg18: memref<1x5xf32, #tpu.memory_space<vmem>>, %arg19: memref<1x4x8xf32, #tpu.memory_space<vmem>>, %arg20: memref<1x2x32xf32, #tpu.memory_space<vmem>>) attributes {dimension_semantics = [#tpu.dimension_semantics<parallel>], iteration_bounds = array<i64: 2>, scalar_prefetch = 0 : i64, scratch_operands = 0 : i64, tpu.core_type = #tpu.core_type<tc>, window_params = [{transform_indices = @transform_0, window_bounds = array<i64: 1, 4, 8>}, {transform_indices = @transform_1, window_bounds = array<i64: 1, 8, 8>}, {transform_indices = @transform_2, window_bounds = array<i64: 1, 1, 8>}, {transform_indices = @transform_3, window_bounds = array<i64: 1, 1, 8>}, {pipeline_mode = #tpu.pipeline_mode<synchronous>, transform_indices = @transform_4, window_bounds = array<i64: 2, 4>}, {pipeline_mode = #tpu.pipeline_mode<synchronous>, transform_indices = @transform_5, window_bounds = array<i64: 4, 2>}, {pipeline_mode = #tpu.pipeline_mode<synchronous>, transform_indices = @transform_6, window_bounds = array<i64: 1, 1>}, {transform_indices = @transform_7, window_bounds = array<i64: 1, 2, 32>}, {pipeline_mode = #tpu.pipeline_mode<synchronous>, transform_indices = @transform_8, window_bounds = array<i64: 4, 96>}, {pipeline_mode = #tpu.pipeline_mode<synchronous>, transform_indices = @transform_9, window_bounds = array<i64: 32, 96>}, {pipeline_mode = #tpu.pipeline_mode<synchronous>, transform_indices = @transform_10, window_bounds = array<i64: 1, 96>}, {pipeline_mode = #tpu.pipeline_mode<synchronous>, transform_indices = @transform_11, window_bounds = array<i64: 1, 96>}, {pipeline_mode = #tpu.pipeline_mode<synchronous>, transform_indices = @transform_12, window_bounds = array<i64: 32, 96>}, {pipeline_mode = #tpu.pipeline_mode<synchronous>, transform_indices = @transform_13, window_bounds = array<i64: 32, 96>}, {pipeline_mode = #tpu.pipeline_mode<synchronous>, transform_indices = @transform_14, window_bounds = array<i64: 1, 96>}, {pipeline_mode = #tpu.pipeline_mode<synchronous>, transform_indices = @transform_15, window_bounds = array<i64: 1, 96>}, {pipeline_mode = #tpu.pipeline_mode<synchronous>, transform_indices = @transform_16, window_bounds = array<i64: 32, 5>}, {pipeline_mode = #tpu.pipeline_mode<synchronous>, transform_indices = @transform_17, window_bounds = array<i64: 1, 5>}, {transform_indices = @transform_18, window_bounds = array<i64: 1, 4, 8>}, {transform_indices = @transform_19, window_bounds = array<i64: 1, 2, 32>}]} {
    %c0 = arith.constant 0 : index
    %c0_0 = arith.constant 0 : index
    %c0_1 = arith.constant 0 : index
    %0 = vector.load %arg1[%c0, %c0_0, %c0_1] : memref<1x4x8xf32, #tpu.memory_space<vmem>>, vector<1x4x8xf32>
    %1 = vector.shape_cast %0 : vector<1x4x8xf32> to vector<4x8xf32>
    %c0_2 = arith.constant 0 : index
    %c0_3 = arith.constant 0 : index
    %c0_4 = arith.constant 0 : index
    %2 = vector.load %arg2[%c0_2, %c0_3, %c0_4] : memref<1x8x8xf32, #tpu.memory_space<vmem>>, vector<1x8x8xf32>
    %3 = vector.shape_cast %2 : vector<1x8x8xf32> to vector<8x8xf32>
    %c0_5 = arith.constant 0 : index
    %c0_6 = arith.constant 0 : index
    %c0_7 = arith.constant 0 : index
    %4 = vector.load %arg3[%c0_5, %c0_6, %c0_7] : memref<1x1x8xf32, #tpu.memory_space<vmem>>, vector<1x1x8xf32>
    %5 = vector.shape_cast %4 : vector<1x1x8xf32> to vector<1x8xf32>
    %c0_8 = arith.constant 0 : index
    %c0_9 = arith.constant 0 : index
    %c0_10 = arith.constant 0 : index
    %6 = vector.load %arg4[%c0_8, %c0_9, %c0_10] : memref<1x1x8xf32, #tpu.memory_space<vmem>>, vector<1x1x8xf32>
    %7 = vector.shape_cast %6 : vector<1x1x8xf32> to vector<1x8xf32>
    %c0_11 = arith.constant 0 : index
    %c0_12 = arith.constant 0 : index
    %8 = vector.load %arg5[%c0_11, %c0_12] : memref<2x4xf32, #tpu.memory_space<vmem>>, vector<2x4xf32>
    %c0_13 = arith.constant 0 : index
    %c0_14 = arith.constant 0 : index
    %9 = vector.load %arg6[%c0_13, %c0_14] : memref<4x2xf32, #tpu.memory_space<vmem>>, vector<4x2xf32>
    %c0_15 = arith.constant 0 : index
    %c0_16 = arith.constant 0 : index
    %10 = vector.load %arg7[%c0_15, %c0_16] : memref<1x1xf32, #tpu.memory_space<vmem>>, vector<1x1xf32>
    %11 = vector.extract_strided_slice %8 {offsets = [0, 0], sizes = [1, 4], strides = [1, 1]} : vector<2x4xf32> to vector<1x4xf32>
    %cst = arith.constant dense<0.000000e+00> : vector<1x8xf32>
    %12 = tpu.matmul %11, %1, %cst {dimension_numbers = #tpu.dot_dimension_numbers<[1], [0], [0], [1], [0, 0, 1, 1], [], []>} : vector<1x4xf32>, vector<4x8xf32>, vector<1x8xf32> -> vector<1x8xf32>
    %13 = vector.extract_strided_slice %8 {offsets = [1, 0], sizes = [1, 4], strides = [1, 1]} : vector<2x4xf32> to vector<1x4xf32>
    %cst_17 = arith.constant dense<0.000000e+00> : vector<1x8xf32>
    %14 = tpu.matmul %13, %1, %cst_17 {dimension_numbers = #tpu.dot_dimension_numbers<[1], [0], [0], [1], [0, 0, 1, 1], [], []>} : vector<1x4xf32>, vector<4x8xf32>, vector<1x8xf32> -> vector<1x8xf32>
    %15 = arith.mulf %12, %12 : vector<1x8xf32>
    %16 = arith.subf %14, %15 : vector<1x8xf32>
    %cst_18 = arith.constant dense<0.000000e+00> : vector<1x8xf32>
    %17 = tpu.matmul %12, %3, %cst_18 {dimension_numbers = #tpu.dot_dimension_numbers<[1], [1], [0], [0], [0, 0, 1, 0], [], []>} : vector<1x8xf32>, vector<8x8xf32>, vector<1x8xf32> -> vector<1x8xf32>
    %18 = arith.mulf %12, %7 : vector<1x8xf32>
    %19 = arith.subf %17, %18 : vector<1x8xf32>
    %20 = arith.mulf %3, %3 : vector<8x8xf32>
    %cst_19 = arith.constant dense<0.000000e+00> : vector<1x8xf32>
    %21 = tpu.matmul %16, %20, %cst_19 {dimension_numbers = #tpu.dot_dimension_numbers<[1], [1], [0], [0], [0, 0, 1, 0], [], []>} : vector<1x8xf32>, vector<8x8xf32>, vector<1x8xf32> -> vector<1x8xf32>
    %22 = vector.broadcast %10 : vector<1x1xf32> to vector<1x8xf32>
    %23 = arith.addf %21, %22 : vector<1x8xf32>
    %24 = arith.mulf %7, %7 : vector<1x8xf32>
    %25 = arith.mulf %16, %24 : vector<1x8xf32>
    %26 = arith.subf %23, %25 : vector<1x8xf32>
    %27 = arith.subf %5, %19 : vector<1x8xf32>
    %cst_20 = arith.constant 2.000000e+00 : f32
    %28 = vector.broadcast %cst_20 : f32 to vector<1x8xf32>
    %29 = arith.mulf %28, %27 : vector<1x8xf32>
    %30 = vector.extract_strided_slice %9 {offsets = [0, 0], sizes = [4, 1], strides = [1, 1]} : vector<4x2xf32> to vector<4x1xf32>
    %31 = vector.extract_strided_slice %9 {offsets = [0, 1], sizes = [4, 1], strides = [1, 1]} : vector<4x2xf32> to vector<4x1xf32>
    %32 = tpu.reciprocal %26 {approx = true} : vector<1x8xf32> -> vector<1x8xf32>
    %cst_21 = arith.constant 5.000000e-01 : f32
    %33 = vector.broadcast %cst_21 : f32 to vector<1x8xf32>
    %34 = arith.mulf %33, %32 : vector<1x8xf32>
    %35 = vector.broadcast %30 : vector<4x1xf32> to vector<4x8xf32>
    %36 = vector.broadcast %7 : vector<1x8xf32> to vector<4x8xf32>
    %37 = arith.mulf %35, %36 : vector<4x8xf32>
    %38 = vector.broadcast %29 : vector<1x8xf32> to vector<4x8xf32>
    %39 = arith.subf %38, %37 : vector<4x8xf32>
    %40 = vector.broadcast %31 : vector<4x1xf32> to vector<4x8xf32>
    %41 = vector.broadcast %7 : vector<1x8xf32> to vector<4x8xf32>
    %42 = arith.mulf %40, %41 : vector<4x8xf32>
    %43 = arith.mulf %39, %42 : vector<4x8xf32>
    %44 = vector.broadcast %34 : vector<1x8xf32> to vector<4x8xf32>
    %45 = arith.mulf %43, %44 : vector<4x8xf32>
    %cst_22 = arith.constant 8.800000e+01 : f32
    %46 = vector.broadcast %cst_22 : f32 to vector<4x8xf32>
    %47 = arith.cmpf ogt, %45, %46 : vector<4x8xf32>
    %cst_23 = arith.constant 8.800000e+01 : f32
    %48 = vector.broadcast %cst_23 : f32 to vector<4x8xf32>
    %49 = arith.select %47, %48, %45 : vector<4x8xi1>, vector<4x8xf32>
    %50 = tpu.transpose %49, [1, 0] : vector<4x8xf32> -> vector<8x4xf32>
    %c0_24 = arith.constant 0 : index
    %c0_25 = arith.constant 0 : index
    %c0_26 = arith.constant 0 : index
    %51 = vector.load %arg8[%c0_24, %c0_25, %c0_26] : memref<1x2x32xf32, #tpu.memory_space<vmem>>, vector<1x2x32xf32>
    %52 = vector.shape_cast %51 : vector<1x2x32xf32> to vector<2x32xf32>
    %c0_27 = arith.constant 0 : index
    %c0_28 = arith.constant 0 : index
    %53 = vector.load %arg9[%c0_27, %c0_28] : memref<4x96xf32, #tpu.memory_space<vmem>>, vector<4x96xf32>
    %c0_29 = arith.constant 0 : index
    %c0_30 = arith.constant 0 : index
    %54 = vector.load %arg10[%c0_29, %c0_30] : memref<32x96xf32, #tpu.memory_space<vmem>>, vector<32x96xf32>
    %c0_31 = arith.constant 0 : index
    %c0_32 = arith.constant 0 : index
    %55 = vector.load %arg11[%c0_31, %c0_32] : memref<1x96xf32, #tpu.memory_space<vmem>>, vector<1x96xf32>
    %c0_33 = arith.constant 0 : index
    %c0_34 = arith.constant 0 : index
    %56 = vector.load %arg12[%c0_33, %c0_34] : memref<1x96xf32, #tpu.memory_space<vmem>>, vector<1x96xf32>
    %cst_35 = arith.constant dense<0.000000e+00> : vector<8x96xf32>
    %57 = tpu.matmul %50, %53, %cst_35 {dimension_numbers = #tpu.dot_dimension_numbers<[1], [0], [0], [1], [0, 0, 1, 1], [], []>} : vector<8x4xf32>, vector<4x96xf32>, vector<8x96xf32> -> vector<8x96xf32>
    %58 = vector.broadcast %55 : vector<1x96xf32> to vector<8x96xf32>
    %59 = arith.addf %57, %58 : vector<8x96xf32>
    %60 = vector.extract_strided_slice %52 {offsets = [0, 0], sizes = [1, 32], strides = [1, 1]} : vector<2x32xf32> to vector<1x32xf32>
    %61 = vector.extract_strided_slice %59 {offsets = [0, 0], sizes = [1, 96], strides = [1, 1]} : vector<8x96xf32> to vector<1x96xf32>
    %cst_36 = arith.constant dense<0.000000e+00> : vector<1x96xf32>
    %62 = tpu.matmul %60, %54, %cst_36 {dimension_numbers = #tpu.dot_dimension_numbers<[1], [0], [0], [1], [0, 0, 1, 1], [], []>} : vector<1x32xf32>, vector<32x96xf32>, vector<1x96xf32> -> vector<1x96xf32>
    %63 = arith.addf %62, %56 : vector<1x96xf32>
    %64 = vector.extract_strided_slice %61 {offsets = [0, 0], sizes = [1, 32], strides = [1, 1]} : vector<1x96xf32> to vector<1x32xf32>
    %65 = vector.extract_strided_slice %63 {offsets = [0, 0], sizes = [1, 32], strides = [1, 1]} : vector<1x96xf32> to vector<1x32xf32>
    %66 = arith.addf %64, %65 : vector<1x32xf32>
    %67 = arith.negf %66 : vector<1x32xf32>
    %68 = math.exp %67 : vector<1x32xf32>
    %cst_37 = arith.constant 1.000000e+00 : f32
    %69 = vector.broadcast %cst_37 : f32 to vector<1x32xf32>
    %70 = arith.addf %69, %68 : vector<1x32xf32>
    %71 = arith.divf %69, %70 : vector<1x32xf32>
    %72 = vector.extract_strided_slice %61 {offsets = [0, 32], sizes = [1, 32], strides = [1, 1]} : vector<1x96xf32> to vector<1x32xf32>
    %73 = vector.extract_strided_slice %63 {offsets = [0, 32], sizes = [1, 32], strides = [1, 1]} : vector<1x96xf32> to vector<1x32xf32>
    %74 = arith.addf %72, %73 : vector<1x32xf32>
    %75 = arith.negf %74 : vector<1x32xf32>
    %76 = math.exp %75 : vector<1x32xf32>
    %cst_38 = arith.constant 1.000000e+00 : f32
    %77 = vector.broadcast %cst_38 : f32 to vector<1x32xf32>
    %78 = arith.addf %77, %76 : vector<1x32xf32>
    %79 = arith.divf %77, %78 : vector<1x32xf32>
    %80 = vector.extract_strided_slice %61 {offsets = [0, 64], sizes = [1, 32], strides = [1, 1]} : vector<1x96xf32> to vector<1x32xf32>
    %81 = vector.extract_strided_slice %63 {offsets = [0, 64], sizes = [1, 32], strides = [1, 1]} : vector<1x96xf32> to vector<1x32xf32>
    %82 = arith.mulf %71, %81 : vector<1x32xf32>
    %83 = arith.addf %80, %82 : vector<1x32xf32>
    %84 = math.tanh %83 : vector<1x32xf32>
    %cst_39 = arith.constant 1.000000e+00 : f32
    %85 = vector.broadcast %cst_39 : f32 to vector<1x32xf32>
    %86 = arith.subf %85, %79 : vector<1x32xf32>
    %87 = arith.mulf %86, %84 : vector<1x32xf32>
    %88 = arith.mulf %79, %60 : vector<1x32xf32>
    %89 = arith.addf %87, %88 : vector<1x32xf32>
    %90 = vector.extract_strided_slice %59 {offsets = [1, 0], sizes = [1, 96], strides = [1, 1]} : vector<8x96xf32> to vector<1x96xf32>
    %cst_40 = arith.constant dense<0.000000e+00> : vector<1x96xf32>
    %91 = tpu.matmul %89, %54, %cst_40 {dimension_numbers = #tpu.dot_dimension_numbers<[1], [0], [0], [1], [0, 0, 1, 1], [], []>} : vector<1x32xf32>, vector<32x96xf32>, vector<1x96xf32> -> vector<1x96xf32>
    %92 = arith.addf %91, %56 : vector<1x96xf32>
    %93 = vector.extract_strided_slice %90 {offsets = [0, 0], sizes = [1, 32], strides = [1, 1]} : vector<1x96xf32> to vector<1x32xf32>
    %94 = vector.extract_strided_slice %92 {offsets = [0, 0], sizes = [1, 32], strides = [1, 1]} : vector<1x96xf32> to vector<1x32xf32>
    %95 = arith.addf %93, %94 : vector<1x32xf32>
    %96 = arith.negf %95 : vector<1x32xf32>
    %97 = math.exp %96 : vector<1x32xf32>
    %cst_41 = arith.constant 1.000000e+00 : f32
    %98 = vector.broadcast %cst_41 : f32 to vector<1x32xf32>
    %99 = arith.addf %98, %97 : vector<1x32xf32>
    %100 = arith.divf %98, %99 : vector<1x32xf32>
    %101 = vector.extract_strided_slice %90 {offsets = [0, 32], sizes = [1, 32], strides = [1, 1]} : vector<1x96xf32> to vector<1x32xf32>
    %102 = vector.extract_strided_slice %92 {offsets = [0, 32], sizes = [1, 32], strides = [1, 1]} : vector<1x96xf32> to vector<1x32xf32>
    %103 = arith.addf %101, %102 : vector<1x32xf32>
    %104 = arith.negf %103 : vector<1x32xf32>
    %105 = math.exp %104 : vector<1x32xf32>
    %cst_42 = arith.constant 1.000000e+00 : f32
    %106 = vector.broadcast %cst_42 : f32 to vector<1x32xf32>
    %107 = arith.addf %106, %105 : vector<1x32xf32>
    %108 = arith.divf %106, %107 : vector<1x32xf32>
    %109 = vector.extract_strided_slice %90 {offsets = [0, 64], sizes = [1, 32], strides = [1, 1]} : vector<1x96xf32> to vector<1x32xf32>
    %110 = vector.extract_strided_slice %92 {offsets = [0, 64], sizes = [1, 32], strides = [1, 1]} : vector<1x96xf32> to vector<1x32xf32>
    %111 = arith.mulf %100, %110 : vector<1x32xf32>
    %112 = arith.addf %109, %111 : vector<1x32xf32>
    %113 = math.tanh %112 : vector<1x32xf32>
    %cst_43 = arith.constant 1.000000e+00 : f32
    %114 = vector.broadcast %cst_43 : f32 to vector<1x32xf32>
    %115 = arith.subf %114, %108 : vector<1x32xf32>
    %116 = arith.mulf %115, %113 : vector<1x32xf32>
    %117 = arith.mulf %108, %89 : vector<1x32xf32>
    %118 = arith.addf %116, %117 : vector<1x32xf32>
    %119 = vector.extract_strided_slice %59 {offsets = [2, 0], sizes = [1, 96], strides = [1, 1]} : vector<8x96xf32> to vector<1x96xf32>
    %cst_44 = arith.constant dense<0.000000e+00> : vector<1x96xf32>
    %120 = tpu.matmul %118, %54, %cst_44 {dimension_numbers = #tpu.dot_dimension_numbers<[1], [0], [0], [1], [0, 0, 1, 1], [], []>} : vector<1x32xf32>, vector<32x96xf32>, vector<1x96xf32> -> vector<1x96xf32>
    %121 = arith.addf %120, %56 : vector<1x96xf32>
    %122 = vector.extract_strided_slice %119 {offsets = [0, 0], sizes = [1, 32], strides = [1, 1]} : vector<1x96xf32> to vector<1x32xf32>
    %123 = vector.extract_strided_slice %121 {offsets = [0, 0], sizes = [1, 32], strides = [1, 1]} : vector<1x96xf32> to vector<1x32xf32>
    %124 = arith.addf %122, %123 : vector<1x32xf32>
    %125 = arith.negf %124 : vector<1x32xf32>
    %126 = math.exp %125 : vector<1x32xf32>
    %cst_45 = arith.constant 1.000000e+00 : f32
    %127 = vector.broadcast %cst_45 : f32 to vector<1x32xf32>
    %128 = arith.addf %127, %126 : vector<1x32xf32>
    %129 = arith.divf %127, %128 : vector<1x32xf32>
    %130 = vector.extract_strided_slice %119 {offsets = [0, 32], sizes = [1, 32], strides = [1, 1]} : vector<1x96xf32> to vector<1x32xf32>
    %131 = vector.extract_strided_slice %121 {offsets = [0, 32], sizes = [1, 32], strides = [1, 1]} : vector<1x96xf32> to vector<1x32xf32>
    %132 = arith.addf %130, %131 : vector<1x32xf32>
    %133 = arith.negf %132 : vector<1x32xf32>
    %134 = math.exp %133 : vector<1x32xf32>
    %cst_46 = arith.constant 1.000000e+00 : f32
    %135 = vector.broadcast %cst_46 : f32 to vector<1x32xf32>
    %136 = arith.addf %135, %134 : vector<1x32xf32>
    %137 = arith.divf %135, %136 : vector<1x32xf32>
    %138 = vector.extract_strided_slice %119 {offsets = [0, 64], sizes = [1, 32], strides = [1, 1]} : vector<1x96xf32> to vector<1x32xf32>
    %139 = vector.extract_strided_slice %121 {offsets = [0, 64], sizes = [1, 32], strides = [1, 1]} : vector<1x96xf32> to vector<1x32xf32>
    %140 = arith.mulf %129, %139 : vector<1x32xf32>
    %141 = arith.addf %138, %140 : vector<1x32xf32>
    %142 = math.tanh %141 : vector<1x32xf32>
    %cst_47 = arith.constant 1.000000e+00 : f32
    %143 = vector.broadcast %cst_47 : f32 to vector<1x32xf32>
    %144 = arith.subf %143, %137 : vector<1x32xf32>
    %145 = arith.mulf %144, %142 : vector<1x32xf32>
    %146 = arith.mulf %137, %118 : vector<1x32xf32>
    %147 = arith.addf %145, %146 : vector<1x32xf32>
    %148 = vector.extract_strided_slice %59 {offsets = [3, 0], sizes = [1, 96], strides = [1, 1]} : vector<8x96xf32> to vector<1x96xf32>
    %cst_48 = arith.constant dense<0.000000e+00> : vector<1x96xf32>
    %149 = tpu.matmul %147, %54, %cst_48 {dimension_numbers = #tpu.dot_dimension_numbers<[1], [0], [0], [1], [0, 0, 1, 1], [], []>} : vector<1x32xf32>, vector<32x96xf32>, vector<1x96xf32> -> vector<1x96xf32>
    %150 = arith.addf %149, %56 : vector<1x96xf32>
    %151 = vector.extract_strided_slice %148 {offsets = [0, 0], sizes = [1, 32], strides = [1, 1]} : vector<1x96xf32> to vector<1x32xf32>
    %152 = vector.extract_strided_slice %150 {offsets = [0, 0], sizes = [1, 32], strides = [1, 1]} : vector<1x96xf32> to vector<1x32xf32>
    %153 = arith.addf %151, %152 : vector<1x32xf32>
    %154 = arith.negf %153 : vector<1x32xf32>
    %155 = math.exp %154 : vector<1x32xf32>
    %cst_49 = arith.constant 1.000000e+00 : f32
    %156 = vector.broadcast %cst_49 : f32 to vector<1x32xf32>
    %157 = arith.addf %156, %155 : vector<1x32xf32>
    %158 = arith.divf %156, %157 : vector<1x32xf32>
    %159 = vector.extract_strided_slice %148 {offsets = [0, 32], sizes = [1, 32], strides = [1, 1]} : vector<1x96xf32> to vector<1x32xf32>
    %160 = vector.extract_strided_slice %150 {offsets = [0, 32], sizes = [1, 32], strides = [1, 1]} : vector<1x96xf32> to vector<1x32xf32>
    %161 = arith.addf %159, %160 : vector<1x32xf32>
    %162 = arith.negf %161 : vector<1x32xf32>
    %163 = math.exp %162 : vector<1x32xf32>
    %cst_50 = arith.constant 1.000000e+00 : f32
    %164 = vector.broadcast %cst_50 : f32 to vector<1x32xf32>
    %165 = arith.addf %164, %163 : vector<1x32xf32>
    %166 = arith.divf %164, %165 : vector<1x32xf32>
    %167 = vector.extract_strided_slice %148 {offsets = [0, 64], sizes = [1, 32], strides = [1, 1]} : vector<1x96xf32> to vector<1x32xf32>
    %168 = vector.extract_strided_slice %150 {offsets = [0, 64], sizes = [1, 32], strides = [1, 1]} : vector<1x96xf32> to vector<1x32xf32>
    %169 = arith.mulf %158, %168 : vector<1x32xf32>
    %170 = arith.addf %167, %169 : vector<1x32xf32>
    %171 = math.tanh %170 : vector<1x32xf32>
    %cst_51 = arith.constant 1.000000e+00 : f32
    %172 = vector.broadcast %cst_51 : f32 to vector<1x32xf32>
    %173 = arith.subf %172, %166 : vector<1x32xf32>
    %174 = arith.mulf %173, %171 : vector<1x32xf32>
    %175 = arith.mulf %166, %147 : vector<1x32xf32>
    %176 = arith.addf %174, %175 : vector<1x32xf32>
    %177 = vector.extract_strided_slice %59 {offsets = [4, 0], sizes = [1, 96], strides = [1, 1]} : vector<8x96xf32> to vector<1x96xf32>
    %cst_52 = arith.constant dense<0.000000e+00> : vector<1x96xf32>
    %178 = tpu.matmul %176, %54, %cst_52 {dimension_numbers = #tpu.dot_dimension_numbers<[1], [0], [0], [1], [0, 0, 1, 1], [], []>} : vector<1x32xf32>, vector<32x96xf32>, vector<1x96xf32> -> vector<1x96xf32>
    %179 = arith.addf %178, %56 : vector<1x96xf32>
    %180 = vector.extract_strided_slice %177 {offsets = [0, 0], sizes = [1, 32], strides = [1, 1]} : vector<1x96xf32> to vector<1x32xf32>
    %181 = vector.extract_strided_slice %179 {offsets = [0, 0], sizes = [1, 32], strides = [1, 1]} : vector<1x96xf32> to vector<1x32xf32>
    %182 = arith.addf %180, %181 : vector<1x32xf32>
    %183 = arith.negf %182 : vector<1x32xf32>
    %184 = math.exp %183 : vector<1x32xf32>
    %cst_53 = arith.constant 1.000000e+00 : f32
    %185 = vector.broadcast %cst_53 : f32 to vector<1x32xf32>
    %186 = arith.addf %185, %184 : vector<1x32xf32>
    %187 = arith.divf %185, %186 : vector<1x32xf32>
    %188 = vector.extract_strided_slice %177 {offsets = [0, 32], sizes = [1, 32], strides = [1, 1]} : vector<1x96xf32> to vector<1x32xf32>
    %189 = vector.extract_strided_slice %179 {offsets = [0, 32], sizes = [1, 32], strides = [1, 1]} : vector<1x96xf32> to vector<1x32xf32>
    %190 = arith.addf %188, %189 : vector<1x32xf32>
    %191 = arith.negf %190 : vector<1x32xf32>
    %192 = math.exp %191 : vector<1x32xf32>
    %cst_54 = arith.constant 1.000000e+00 : f32
    %193 = vector.broadcast %cst_54 : f32 to vector<1x32xf32>
    %194 = arith.addf %193, %192 : vector<1x32xf32>
    %195 = arith.divf %193, %194 : vector<1x32xf32>
    %196 = vector.extract_strided_slice %177 {offsets = [0, 64], sizes = [1, 32], strides = [1, 1]} : vector<1x96xf32> to vector<1x32xf32>
    %197 = vector.extract_strided_slice %179 {offsets = [0, 64], sizes = [1, 32], strides = [1, 1]} : vector<1x96xf32> to vector<1x32xf32>
    %198 = arith.mulf %187, %197 : vector<1x32xf32>
    %199 = arith.addf %196, %198 : vector<1x32xf32>
    %200 = math.tanh %199 : vector<1x32xf32>
    %cst_55 = arith.constant 1.000000e+00 : f32
    %201 = vector.broadcast %cst_55 : f32 to vector<1x32xf32>
    %202 = arith.subf %201, %195 : vector<1x32xf32>
    %203 = arith.mulf %202, %200 : vector<1x32xf32>
    %204 = arith.mulf %195, %176 : vector<1x32xf32>
    %205 = arith.addf %203, %204 : vector<1x32xf32>
    %206 = vector.extract_strided_slice %59 {offsets = [5, 0], sizes = [1, 96], strides = [1, 1]} : vector<8x96xf32> to vector<1x96xf32>
    %cst_56 = arith.constant dense<0.000000e+00> : vector<1x96xf32>
    %207 = tpu.matmul %205, %54, %cst_56 {dimension_numbers = #tpu.dot_dimension_numbers<[1], [0], [0], [1], [0, 0, 1, 1], [], []>} : vector<1x32xf32>, vector<32x96xf32>, vector<1x96xf32> -> vector<1x96xf32>
    %208 = arith.addf %207, %56 : vector<1x96xf32>
    %209 = vector.extract_strided_slice %206 {offsets = [0, 0], sizes = [1, 32], strides = [1, 1]} : vector<1x96xf32> to vector<1x32xf32>
    %210 = vector.extract_strided_slice %208 {offsets = [0, 0], sizes = [1, 32], strides = [1, 1]} : vector<1x96xf32> to vector<1x32xf32>
    %211 = arith.addf %209, %210 : vector<1x32xf32>
    %212 = arith.negf %211 : vector<1x32xf32>
    %213 = math.exp %212 : vector<1x32xf32>
    %cst_57 = arith.constant 1.000000e+00 : f32
    %214 = vector.broadcast %cst_57 : f32 to vector<1x32xf32>
    %215 = arith.addf %214, %213 : vector<1x32xf32>
    %216 = arith.divf %214, %215 : vector<1x32xf32>
    %217 = vector.extract_strided_slice %206 {offsets = [0, 32], sizes = [1, 32], strides = [1, 1]} : vector<1x96xf32> to vector<1x32xf32>
    %218 = vector.extract_strided_slice %208 {offsets = [0, 32], sizes = [1, 32], strides = [1, 1]} : vector<1x96xf32> to vector<1x32xf32>
    %219 = arith.addf %217, %218 : vector<1x32xf32>
    %220 = arith.negf %219 : vector<1x32xf32>
    %221 = math.exp %220 : vector<1x32xf32>
    %cst_58 = arith.constant 1.000000e+00 : f32
    %222 = vector.broadcast %cst_58 : f32 to vector<1x32xf32>
    %223 = arith.addf %222, %221 : vector<1x32xf32>
    %224 = arith.divf %222, %223 : vector<1x32xf32>
    %225 = vector.extract_strided_slice %206 {offsets = [0, 64], sizes = [1, 32], strides = [1, 1]} : vector<1x96xf32> to vector<1x32xf32>
    %226 = vector.extract_strided_slice %208 {offsets = [0, 64], sizes = [1, 32], strides = [1, 1]} : vector<1x96xf32> to vector<1x32xf32>
    %227 = arith.mulf %216, %226 : vector<1x32xf32>
    %228 = arith.addf %225, %227 : vector<1x32xf32>
    %229 = math.tanh %228 : vector<1x32xf32>
    %cst_59 = arith.constant 1.000000e+00 : f32
    %230 = vector.broadcast %cst_59 : f32 to vector<1x32xf32>
    %231 = arith.subf %230, %224 : vector<1x32xf32>
    %232 = arith.mulf %231, %229 : vector<1x32xf32>
    %233 = arith.mulf %224, %205 : vector<1x32xf32>
    %234 = arith.addf %232, %233 : vector<1x32xf32>
    %235 = vector.extract_strided_slice %59 {offsets = [6, 0], sizes = [1, 96], strides = [1, 1]} : vector<8x96xf32> to vector<1x96xf32>
    %cst_60 = arith.constant dense<0.000000e+00> : vector<1x96xf32>
    %236 = tpu.matmul %234, %54, %cst_60 {dimension_numbers = #tpu.dot_dimension_numbers<[1], [0], [0], [1], [0, 0, 1, 1], [], []>} : vector<1x32xf32>, vector<32x96xf32>, vector<1x96xf32> -> vector<1x96xf32>
    %237 = arith.addf %236, %56 : vector<1x96xf32>
    %238 = vector.extract_strided_slice %235 {offsets = [0, 0], sizes = [1, 32], strides = [1, 1]} : vector<1x96xf32> to vector<1x32xf32>
    %239 = vector.extract_strided_slice %237 {offsets = [0, 0], sizes = [1, 32], strides = [1, 1]} : vector<1x96xf32> to vector<1x32xf32>
    %240 = arith.addf %238, %239 : vector<1x32xf32>
    %241 = arith.negf %240 : vector<1x32xf32>
    %242 = math.exp %241 : vector<1x32xf32>
    %cst_61 = arith.constant 1.000000e+00 : f32
    %243 = vector.broadcast %cst_61 : f32 to vector<1x32xf32>
    %244 = arith.addf %243, %242 : vector<1x32xf32>
    %245 = arith.divf %243, %244 : vector<1x32xf32>
    %246 = vector.extract_strided_slice %235 {offsets = [0, 32], sizes = [1, 32], strides = [1, 1]} : vector<1x96xf32> to vector<1x32xf32>
    %247 = vector.extract_strided_slice %237 {offsets = [0, 32], sizes = [1, 32], strides = [1, 1]} : vector<1x96xf32> to vector<1x32xf32>
    %248 = arith.addf %246, %247 : vector<1x32xf32>
    %249 = arith.negf %248 : vector<1x32xf32>
    %250 = math.exp %249 : vector<1x32xf32>
    %cst_62 = arith.constant 1.000000e+00 : f32
    %251 = vector.broadcast %cst_62 : f32 to vector<1x32xf32>
    %252 = arith.addf %251, %250 : vector<1x32xf32>
    %253 = arith.divf %251, %252 : vector<1x32xf32>
    %254 = vector.extract_strided_slice %235 {offsets = [0, 64], sizes = [1, 32], strides = [1, 1]} : vector<1x96xf32> to vector<1x32xf32>
    %255 = vector.extract_strided_slice %237 {offsets = [0, 64], sizes = [1, 32], strides = [1, 1]} : vector<1x96xf32> to vector<1x32xf32>
    %256 = arith.mulf %245, %255 : vector<1x32xf32>
    %257 = arith.addf %254, %256 : vector<1x32xf32>
    %258 = math.tanh %257 : vector<1x32xf32>
    %cst_63 = arith.constant 1.000000e+00 : f32
    %259 = vector.broadcast %cst_63 : f32 to vector<1x32xf32>
    %260 = arith.subf %259, %253 : vector<1x32xf32>
    %261 = arith.mulf %260, %258 : vector<1x32xf32>
    %262 = arith.mulf %253, %234 : vector<1x32xf32>
    %263 = arith.addf %261, %262 : vector<1x32xf32>
    %264 = vector.extract_strided_slice %59 {offsets = [7, 0], sizes = [1, 96], strides = [1, 1]} : vector<8x96xf32> to vector<1x96xf32>
    %cst_64 = arith.constant dense<0.000000e+00> : vector<1x96xf32>
    %265 = tpu.matmul %263, %54, %cst_64 {dimension_numbers = #tpu.dot_dimension_numbers<[1], [0], [0], [1], [0, 0, 1, 1], [], []>} : vector<1x32xf32>, vector<32x96xf32>, vector<1x96xf32> -> vector<1x96xf32>
    %266 = arith.addf %265, %56 : vector<1x96xf32>
    %267 = vector.extract_strided_slice %264 {offsets = [0, 0], sizes = [1, 32], strides = [1, 1]} : vector<1x96xf32> to vector<1x32xf32>
    %268 = vector.extract_strided_slice %266 {offsets = [0, 0], sizes = [1, 32], strides = [1, 1]} : vector<1x96xf32> to vector<1x32xf32>
    %269 = arith.addf %267, %268 : vector<1x32xf32>
    %270 = arith.negf %269 : vector<1x32xf32>
    %271 = math.exp %270 : vector<1x32xf32>
    %cst_65 = arith.constant 1.000000e+00 : f32
    %272 = vector.broadcast %cst_65 : f32 to vector<1x32xf32>
    %273 = arith.addf %272, %271 : vector<1x32xf32>
    %274 = arith.divf %272, %273 : vector<1x32xf32>
    %275 = vector.extract_strided_slice %264 {offsets = [0, 32], sizes = [1, 32], strides = [1, 1]} : vector<1x96xf32> to vector<1x32xf32>
    %276 = vector.extract_strided_slice %266 {offsets = [0, 32], sizes = [1, 32], strides = [1, 1]} : vector<1x96xf32> to vector<1x32xf32>
    %277 = arith.addf %275, %276 : vector<1x32xf32>
    %278 = arith.negf %277 : vector<1x32xf32>
    %279 = math.exp %278 : vector<1x32xf32>
    %cst_66 = arith.constant 1.000000e+00 : f32
    %280 = vector.broadcast %cst_66 : f32 to vector<1x32xf32>
    %281 = arith.addf %280, %279 : vector<1x32xf32>
    %282 = arith.divf %280, %281 : vector<1x32xf32>
    %283 = vector.extract_strided_slice %264 {offsets = [0, 64], sizes = [1, 32], strides = [1, 1]} : vector<1x96xf32> to vector<1x32xf32>
    %284 = vector.extract_strided_slice %266 {offsets = [0, 64], sizes = [1, 32], strides = [1, 1]} : vector<1x96xf32> to vector<1x32xf32>
    %285 = arith.mulf %274, %284 : vector<1x32xf32>
    %286 = arith.addf %283, %285 : vector<1x32xf32>
    %287 = math.tanh %286 : vector<1x32xf32>
    %cst_67 = arith.constant 1.000000e+00 : f32
    %288 = vector.broadcast %cst_67 : f32 to vector<1x32xf32>
    %289 = arith.subf %288, %282 : vector<1x32xf32>
    %290 = arith.mulf %289, %287 : vector<1x32xf32>
    %291 = arith.mulf %282, %263 : vector<1x32xf32>
    %292 = arith.addf %290, %291 : vector<1x32xf32>
    %293 = tpu.concatenate %89, %118, %147, %176, %205, %234, %263, %292 in 0 : vector<1x32xf32>, vector<1x32xf32>, vector<1x32xf32>, vector<1x32xf32>, vector<1x32xf32>, vector<1x32xf32>, vector<1x32xf32>, vector<1x32xf32> -> vector<8x32xf32>
    %c0_68 = arith.constant 0 : index
    %c0_69 = arith.constant 0 : index
    %294 = vector.load %arg13[%c0_68, %c0_69] : memref<32x96xf32, #tpu.memory_space<vmem>>, vector<32x96xf32>
    %c0_70 = arith.constant 0 : index
    %c0_71 = arith.constant 0 : index
    %295 = vector.load %arg14[%c0_70, %c0_71] : memref<32x96xf32, #tpu.memory_space<vmem>>, vector<32x96xf32>
    %c0_72 = arith.constant 0 : index
    %c0_73 = arith.constant 0 : index
    %296 = vector.load %arg15[%c0_72, %c0_73] : memref<1x96xf32, #tpu.memory_space<vmem>>, vector<1x96xf32>
    %c0_74 = arith.constant 0 : index
    %c0_75 = arith.constant 0 : index
    %297 = vector.load %arg16[%c0_74, %c0_75] : memref<1x96xf32, #tpu.memory_space<vmem>>, vector<1x96xf32>
    %cst_76 = arith.constant dense<0.000000e+00> : vector<8x96xf32>
    %298 = tpu.matmul %293, %294, %cst_76 {dimension_numbers = #tpu.dot_dimension_numbers<[1], [0], [0], [1], [0, 0, 1, 1], [], []>} : vector<8x32xf32>, vector<32x96xf32>, vector<8x96xf32> -> vector<8x96xf32>
    %299 = vector.broadcast %296 : vector<1x96xf32> to vector<8x96xf32>
    %300 = arith.addf %298, %299 : vector<8x96xf32>
    %301 = vector.extract_strided_slice %52 {offsets = [1, 0], sizes = [1, 32], strides = [1, 1]} : vector<2x32xf32> to vector<1x32xf32>
    %302 = vector.extract_strided_slice %300 {offsets = [0, 0], sizes = [1, 96], strides = [1, 1]} : vector<8x96xf32> to vector<1x96xf32>
    %cst_77 = arith.constant dense<0.000000e+00> : vector<1x96xf32>
    %303 = tpu.matmul %301, %295, %cst_77 {dimension_numbers = #tpu.dot_dimension_numbers<[1], [0], [0], [1], [0, 0, 1, 1], [], []>} : vector<1x32xf32>, vector<32x96xf32>, vector<1x96xf32> -> vector<1x96xf32>
    %304 = arith.addf %303, %297 : vector<1x96xf32>
    %305 = vector.extract_strided_slice %302 {offsets = [0, 0], sizes = [1, 32], strides = [1, 1]} : vector<1x96xf32> to vector<1x32xf32>
    %306 = vector.extract_strided_slice %304 {offsets = [0, 0], sizes = [1, 32], strides = [1, 1]} : vector<1x96xf32> to vector<1x32xf32>
    %307 = arith.addf %305, %306 : vector<1x32xf32>
    %308 = arith.negf %307 : vector<1x32xf32>
    %309 = math.exp %308 : vector<1x32xf32>
    %cst_78 = arith.constant 1.000000e+00 : f32
    %310 = vector.broadcast %cst_78 : f32 to vector<1x32xf32>
    %311 = arith.addf %310, %309 : vector<1x32xf32>
    %312 = arith.divf %310, %311 : vector<1x32xf32>
    %313 = vector.extract_strided_slice %302 {offsets = [0, 32], sizes = [1, 32], strides = [1, 1]} : vector<1x96xf32> to vector<1x32xf32>
    %314 = vector.extract_strided_slice %304 {offsets = [0, 32], sizes = [1, 32], strides = [1, 1]} : vector<1x96xf32> to vector<1x32xf32>
    %315 = arith.addf %313, %314 : vector<1x32xf32>
    %316 = arith.negf %315 : vector<1x32xf32>
    %317 = math.exp %316 : vector<1x32xf32>
    %cst_79 = arith.constant 1.000000e+00 : f32
    %318 = vector.broadcast %cst_79 : f32 to vector<1x32xf32>
    %319 = arith.addf %318, %317 : vector<1x32xf32>
    %320 = arith.divf %318, %319 : vector<1x32xf32>
    %321 = vector.extract_strided_slice %302 {offsets = [0, 64], sizes = [1, 32], strides = [1, 1]} : vector<1x96xf32> to vector<1x32xf32>
    %322 = vector.extract_strided_slice %304 {offsets = [0, 64], sizes = [1, 32], strides = [1, 1]} : vector<1x96xf32> to vector<1x32xf32>
    %323 = arith.mulf %312, %322 : vector<1x32xf32>
    %324 = arith.addf %321, %323 : vector<1x32xf32>
    %325 = math.tanh %324 : vector<1x32xf32>
    %cst_80 = arith.constant 1.000000e+00 : f32
    %326 = vector.broadcast %cst_80 : f32 to vector<1x32xf32>
    %327 = arith.subf %326, %320 : vector<1x32xf32>
    %328 = arith.mulf %327, %325 : vector<1x32xf32>
    %329 = arith.mulf %320, %301 : vector<1x32xf32>
    %330 = arith.addf %328, %329 : vector<1x32xf32>
    %331 = vector.extract_strided_slice %300 {offsets = [1, 0], sizes = [1, 96], strides = [1, 1]} : vector<8x96xf32> to vector<1x96xf32>
    %cst_81 = arith.constant dense<0.000000e+00> : vector<1x96xf32>
    %332 = tpu.matmul %330, %295, %cst_81 {dimension_numbers = #tpu.dot_dimension_numbers<[1], [0], [0], [1], [0, 0, 1, 1], [], []>} : vector<1x32xf32>, vector<32x96xf32>, vector<1x96xf32> -> vector<1x96xf32>
    %333 = arith.addf %332, %297 : vector<1x96xf32>
    %334 = vector.extract_strided_slice %331 {offsets = [0, 0], sizes = [1, 32], strides = [1, 1]} : vector<1x96xf32> to vector<1x32xf32>
    %335 = vector.extract_strided_slice %333 {offsets = [0, 0], sizes = [1, 32], strides = [1, 1]} : vector<1x96xf32> to vector<1x32xf32>
    %336 = arith.addf %334, %335 : vector<1x32xf32>
    %337 = arith.negf %336 : vector<1x32xf32>
    %338 = math.exp %337 : vector<1x32xf32>
    %cst_82 = arith.constant 1.000000e+00 : f32
    %339 = vector.broadcast %cst_82 : f32 to vector<1x32xf32>
    %340 = arith.addf %339, %338 : vector<1x32xf32>
    %341 = arith.divf %339, %340 : vector<1x32xf32>
    %342 = vector.extract_strided_slice %331 {offsets = [0, 32], sizes = [1, 32], strides = [1, 1]} : vector<1x96xf32> to vector<1x32xf32>
    %343 = vector.extract_strided_slice %333 {offsets = [0, 32], sizes = [1, 32], strides = [1, 1]} : vector<1x96xf32> to vector<1x32xf32>
    %344 = arith.addf %342, %343 : vector<1x32xf32>
    %345 = arith.negf %344 : vector<1x32xf32>
    %346 = math.exp %345 : vector<1x32xf32>
    %cst_83 = arith.constant 1.000000e+00 : f32
    %347 = vector.broadcast %cst_83 : f32 to vector<1x32xf32>
    %348 = arith.addf %347, %346 : vector<1x32xf32>
    %349 = arith.divf %347, %348 : vector<1x32xf32>
    %350 = vector.extract_strided_slice %331 {offsets = [0, 64], sizes = [1, 32], strides = [1, 1]} : vector<1x96xf32> to vector<1x32xf32>
    %351 = vector.extract_strided_slice %333 {offsets = [0, 64], sizes = [1, 32], strides = [1, 1]} : vector<1x96xf32> to vector<1x32xf32>
    %352 = arith.mulf %341, %351 : vector<1x32xf32>
    %353 = arith.addf %350, %352 : vector<1x32xf32>
    %354 = math.tanh %353 : vector<1x32xf32>
    %cst_84 = arith.constant 1.000000e+00 : f32
    %355 = vector.broadcast %cst_84 : f32 to vector<1x32xf32>
    %356 = arith.subf %355, %349 : vector<1x32xf32>
    %357 = arith.mulf %356, %354 : vector<1x32xf32>
    %358 = arith.mulf %349, %330 : vector<1x32xf32>
    %359 = arith.addf %357, %358 : vector<1x32xf32>
    %360 = vector.extract_strided_slice %300 {offsets = [2, 0], sizes = [1, 96], strides = [1, 1]} : vector<8x96xf32> to vector<1x96xf32>
    %cst_85 = arith.constant dense<0.000000e+00> : vector<1x96xf32>
    %361 = tpu.matmul %359, %295, %cst_85 {dimension_numbers = #tpu.dot_dimension_numbers<[1], [0], [0], [1], [0, 0, 1, 1], [], []>} : vector<1x32xf32>, vector<32x96xf32>, vector<1x96xf32> -> vector<1x96xf32>
    %362 = arith.addf %361, %297 : vector<1x96xf32>
    %363 = vector.extract_strided_slice %360 {offsets = [0, 0], sizes = [1, 32], strides = [1, 1]} : vector<1x96xf32> to vector<1x32xf32>
    %364 = vector.extract_strided_slice %362 {offsets = [0, 0], sizes = [1, 32], strides = [1, 1]} : vector<1x96xf32> to vector<1x32xf32>
    %365 = arith.addf %363, %364 : vector<1x32xf32>
    %366 = arith.negf %365 : vector<1x32xf32>
    %367 = math.exp %366 : vector<1x32xf32>
    %cst_86 = arith.constant 1.000000e+00 : f32
    %368 = vector.broadcast %cst_86 : f32 to vector<1x32xf32>
    %369 = arith.addf %368, %367 : vector<1x32xf32>
    %370 = arith.divf %368, %369 : vector<1x32xf32>
    %371 = vector.extract_strided_slice %360 {offsets = [0, 32], sizes = [1, 32], strides = [1, 1]} : vector<1x96xf32> to vector<1x32xf32>
    %372 = vector.extract_strided_slice %362 {offsets = [0, 32], sizes = [1, 32], strides = [1, 1]} : vector<1x96xf32> to vector<1x32xf32>
    %373 = arith.addf %371, %372 : vector<1x32xf32>
    %374 = arith.negf %373 : vector<1x32xf32>
    %375 = math.exp %374 : vector<1x32xf32>
    %cst_87 = arith.constant 1.000000e+00 : f32
    %376 = vector.broadcast %cst_87 : f32 to vector<1x32xf32>
    %377 = arith.addf %376, %375 : vector<1x32xf32>
    %378 = arith.divf %376, %377 : vector<1x32xf32>
    %379 = vector.extract_strided_slice %360 {offsets = [0, 64], sizes = [1, 32], strides = [1, 1]} : vector<1x96xf32> to vector<1x32xf32>
    %380 = vector.extract_strided_slice %362 {offsets = [0, 64], sizes = [1, 32], strides = [1, 1]} : vector<1x96xf32> to vector<1x32xf32>
    %381 = arith.mulf %370, %380 : vector<1x32xf32>
    %382 = arith.addf %379, %381 : vector<1x32xf32>
    %383 = math.tanh %382 : vector<1x32xf32>
    %cst_88 = arith.constant 1.000000e+00 : f32
    %384 = vector.broadcast %cst_88 : f32 to vector<1x32xf32>
    %385 = arith.subf %384, %378 : vector<1x32xf32>
    %386 = arith.mulf %385, %383 : vector<1x32xf32>
    %387 = arith.mulf %378, %359 : vector<1x32xf32>
    %388 = arith.addf %386, %387 : vector<1x32xf32>
    %389 = vector.extract_strided_slice %300 {offsets = [3, 0], sizes = [1, 96], strides = [1, 1]} : vector<8x96xf32> to vector<1x96xf32>
    %cst_89 = arith.constant dense<0.000000e+00> : vector<1x96xf32>
    %390 = tpu.matmul %388, %295, %cst_89 {dimension_numbers = #tpu.dot_dimension_numbers<[1], [0], [0], [1], [0, 0, 1, 1], [], []>} : vector<1x32xf32>, vector<32x96xf32>, vector<1x96xf32> -> vector<1x96xf32>
    %391 = arith.addf %390, %297 : vector<1x96xf32>
    %392 = vector.extract_strided_slice %389 {offsets = [0, 0], sizes = [1, 32], strides = [1, 1]} : vector<1x96xf32> to vector<1x32xf32>
    %393 = vector.extract_strided_slice %391 {offsets = [0, 0], sizes = [1, 32], strides = [1, 1]} : vector<1x96xf32> to vector<1x32xf32>
    %394 = arith.addf %392, %393 : vector<1x32xf32>
    %395 = arith.negf %394 : vector<1x32xf32>
    %396 = math.exp %395 : vector<1x32xf32>
    %cst_90 = arith.constant 1.000000e+00 : f32
    %397 = vector.broadcast %cst_90 : f32 to vector<1x32xf32>
    %398 = arith.addf %397, %396 : vector<1x32xf32>
    %399 = arith.divf %397, %398 : vector<1x32xf32>
    %400 = vector.extract_strided_slice %389 {offsets = [0, 32], sizes = [1, 32], strides = [1, 1]} : vector<1x96xf32> to vector<1x32xf32>
    %401 = vector.extract_strided_slice %391 {offsets = [0, 32], sizes = [1, 32], strides = [1, 1]} : vector<1x96xf32> to vector<1x32xf32>
    %402 = arith.addf %400, %401 : vector<1x32xf32>
    %403 = arith.negf %402 : vector<1x32xf32>
    %404 = math.exp %403 : vector<1x32xf32>
    %cst_91 = arith.constant 1.000000e+00 : f32
    %405 = vector.broadcast %cst_91 : f32 to vector<1x32xf32>
    %406 = arith.addf %405, %404 : vector<1x32xf32>
    %407 = arith.divf %405, %406 : vector<1x32xf32>
    %408 = vector.extract_strided_slice %389 {offsets = [0, 64], sizes = [1, 32], strides = [1, 1]} : vector<1x96xf32> to vector<1x32xf32>
    %409 = vector.extract_strided_slice %391 {offsets = [0, 64], sizes = [1, 32], strides = [1, 1]} : vector<1x96xf32> to vector<1x32xf32>
    %410 = arith.mulf %399, %409 : vector<1x32xf32>
    %411 = arith.addf %408, %410 : vector<1x32xf32>
    %412 = math.tanh %411 : vector<1x32xf32>
    %cst_92 = arith.constant 1.000000e+00 : f32
    %413 = vector.broadcast %cst_92 : f32 to vector<1x32xf32>
    %414 = arith.subf %413, %407 : vector<1x32xf32>
    %415 = arith.mulf %414, %412 : vector<1x32xf32>
    %416 = arith.mulf %407, %388 : vector<1x32xf32>
    %417 = arith.addf %415, %416 : vector<1x32xf32>
    %418 = vector.extract_strided_slice %300 {offsets = [4, 0], sizes = [1, 96], strides = [1, 1]} : vector<8x96xf32> to vector<1x96xf32>
    %cst_93 = arith.constant dense<0.000000e+00> : vector<1x96xf32>
    %419 = tpu.matmul %417, %295, %cst_93 {dimension_numbers = #tpu.dot_dimension_numbers<[1], [0], [0], [1], [0, 0, 1, 1], [], []>} : vector<1x32xf32>, vector<32x96xf32>, vector<1x96xf32> -> vector<1x96xf32>
    %420 = arith.addf %419, %297 : vector<1x96xf32>
    %421 = vector.extract_strided_slice %418 {offsets = [0, 0], sizes = [1, 32], strides = [1, 1]} : vector<1x96xf32> to vector<1x32xf32>
    %422 = vector.extract_strided_slice %420 {offsets = [0, 0], sizes = [1, 32], strides = [1, 1]} : vector<1x96xf32> to vector<1x32xf32>
    %423 = arith.addf %421, %422 : vector<1x32xf32>
    %424 = arith.negf %423 : vector<1x32xf32>
    %425 = math.exp %424 : vector<1x32xf32>
    %cst_94 = arith.constant 1.000000e+00 : f32
    %426 = vector.broadcast %cst_94 : f32 to vector<1x32xf32>
    %427 = arith.addf %426, %425 : vector<1x32xf32>
    %428 = arith.divf %426, %427 : vector<1x32xf32>
    %429 = vector.extract_strided_slice %418 {offsets = [0, 32], sizes = [1, 32], strides = [1, 1]} : vector<1x96xf32> to vector<1x32xf32>
    %430 = vector.extract_strided_slice %420 {offsets = [0, 32], sizes = [1, 32], strides = [1, 1]} : vector<1x96xf32> to vector<1x32xf32>
    %431 = arith.addf %429, %430 : vector<1x32xf32>
    %432 = arith.negf %431 : vector<1x32xf32>
    %433 = math.exp %432 : vector<1x32xf32>
    %cst_95 = arith.constant 1.000000e+00 : f32
    %434 = vector.broadcast %cst_95 : f32 to vector<1x32xf32>
    %435 = arith.addf %434, %433 : vector<1x32xf32>
    %436 = arith.divf %434, %435 : vector<1x32xf32>
    %437 = vector.extract_strided_slice %418 {offsets = [0, 64], sizes = [1, 32], strides = [1, 1]} : vector<1x96xf32> to vector<1x32xf32>
    %438 = vector.extract_strided_slice %420 {offsets = [0, 64], sizes = [1, 32], strides = [1, 1]} : vector<1x96xf32> to vector<1x32xf32>
    %439 = arith.mulf %428, %438 : vector<1x32xf32>
    %440 = arith.addf %437, %439 : vector<1x32xf32>
    %441 = math.tanh %440 : vector<1x32xf32>
    %cst_96 = arith.constant 1.000000e+00 : f32
    %442 = vector.broadcast %cst_96 : f32 to vector<1x32xf32>
    %443 = arith.subf %442, %436 : vector<1x32xf32>
    %444 = arith.mulf %443, %441 : vector<1x32xf32>
    %445 = arith.mulf %436, %417 : vector<1x32xf32>
    %446 = arith.addf %444, %445 : vector<1x32xf32>
    %447 = vector.extract_strided_slice %300 {offsets = [5, 0], sizes = [1, 96], strides = [1, 1]} : vector<8x96xf32> to vector<1x96xf32>
    %cst_97 = arith.constant dense<0.000000e+00> : vector<1x96xf32>
    %448 = tpu.matmul %446, %295, %cst_97 {dimension_numbers = #tpu.dot_dimension_numbers<[1], [0], [0], [1], [0, 0, 1, 1], [], []>} : vector<1x32xf32>, vector<32x96xf32>, vector<1x96xf32> -> vector<1x96xf32>
    %449 = arith.addf %448, %297 : vector<1x96xf32>
    %450 = vector.extract_strided_slice %447 {offsets = [0, 0], sizes = [1, 32], strides = [1, 1]} : vector<1x96xf32> to vector<1x32xf32>
    %451 = vector.extract_strided_slice %449 {offsets = [0, 0], sizes = [1, 32], strides = [1, 1]} : vector<1x96xf32> to vector<1x32xf32>
    %452 = arith.addf %450, %451 : vector<1x32xf32>
    %453 = arith.negf %452 : vector<1x32xf32>
    %454 = math.exp %453 : vector<1x32xf32>
    %cst_98 = arith.constant 1.000000e+00 : f32
    %455 = vector.broadcast %cst_98 : f32 to vector<1x32xf32>
    %456 = arith.addf %455, %454 : vector<1x32xf32>
    %457 = arith.divf %455, %456 : vector<1x32xf32>
    %458 = vector.extract_strided_slice %447 {offsets = [0, 32], sizes = [1, 32], strides = [1, 1]} : vector<1x96xf32> to vector<1x32xf32>
    %459 = vector.extract_strided_slice %449 {offsets = [0, 32], sizes = [1, 32], strides = [1, 1]} : vector<1x96xf32> to vector<1x32xf32>
    %460 = arith.addf %458, %459 : vector<1x32xf32>
    %461 = arith.negf %460 : vector<1x32xf32>
    %462 = math.exp %461 : vector<1x32xf32>
    %cst_99 = arith.constant 1.000000e+00 : f32
    %463 = vector.broadcast %cst_99 : f32 to vector<1x32xf32>
    %464 = arith.addf %463, %462 : vector<1x32xf32>
    %465 = arith.divf %463, %464 : vector<1x32xf32>
    %466 = vector.extract_strided_slice %447 {offsets = [0, 64], sizes = [1, 32], strides = [1, 1]} : vector<1x96xf32> to vector<1x32xf32>
    %467 = vector.extract_strided_slice %449 {offsets = [0, 64], sizes = [1, 32], strides = [1, 1]} : vector<1x96xf32> to vector<1x32xf32>
    %468 = arith.mulf %457, %467 : vector<1x32xf32>
    %469 = arith.addf %466, %468 : vector<1x32xf32>
    %470 = math.tanh %469 : vector<1x32xf32>
    %cst_100 = arith.constant 1.000000e+00 : f32
    %471 = vector.broadcast %cst_100 : f32 to vector<1x32xf32>
    %472 = arith.subf %471, %465 : vector<1x32xf32>
    %473 = arith.mulf %472, %470 : vector<1x32xf32>
    %474 = arith.mulf %465, %446 : vector<1x32xf32>
    %475 = arith.addf %473, %474 : vector<1x32xf32>
    %476 = vector.extract_strided_slice %300 {offsets = [6, 0], sizes = [1, 96], strides = [1, 1]} : vector<8x96xf32> to vector<1x96xf32>
    %cst_101 = arith.constant dense<0.000000e+00> : vector<1x96xf32>
    %477 = tpu.matmul %475, %295, %cst_101 {dimension_numbers = #tpu.dot_dimension_numbers<[1], [0], [0], [1], [0, 0, 1, 1], [], []>} : vector<1x32xf32>, vector<32x96xf32>, vector<1x96xf32> -> vector<1x96xf32>
    %478 = arith.addf %477, %297 : vector<1x96xf32>
    %479 = vector.extract_strided_slice %476 {offsets = [0, 0], sizes = [1, 32], strides = [1, 1]} : vector<1x96xf32> to vector<1x32xf32>
    %480 = vector.extract_strided_slice %478 {offsets = [0, 0], sizes = [1, 32], strides = [1, 1]} : vector<1x96xf32> to vector<1x32xf32>
    %481 = arith.addf %479, %480 : vector<1x32xf32>
    %482 = arith.negf %481 : vector<1x32xf32>
    %483 = math.exp %482 : vector<1x32xf32>
    %cst_102 = arith.constant 1.000000e+00 : f32
    %484 = vector.broadcast %cst_102 : f32 to vector<1x32xf32>
    %485 = arith.addf %484, %483 : vector<1x32xf32>
    %486 = arith.divf %484, %485 : vector<1x32xf32>
    %487 = vector.extract_strided_slice %476 {offsets = [0, 32], sizes = [1, 32], strides = [1, 1]} : vector<1x96xf32> to vector<1x32xf32>
    %488 = vector.extract_strided_slice %478 {offsets = [0, 32], sizes = [1, 32], strides = [1, 1]} : vector<1x96xf32> to vector<1x32xf32>
    %489 = arith.addf %487, %488 : vector<1x32xf32>
    %490 = arith.negf %489 : vector<1x32xf32>
    %491 = math.exp %490 : vector<1x32xf32>
    %cst_103 = arith.constant 1.000000e+00 : f32
    %492 = vector.broadcast %cst_103 : f32 to vector<1x32xf32>
    %493 = arith.addf %492, %491 : vector<1x32xf32>
    %494 = arith.divf %492, %493 : vector<1x32xf32>
    %495 = vector.extract_strided_slice %476 {offsets = [0, 64], sizes = [1, 32], strides = [1, 1]} : vector<1x96xf32> to vector<1x32xf32>
    %496 = vector.extract_strided_slice %478 {offsets = [0, 64], sizes = [1, 32], strides = [1, 1]} : vector<1x96xf32> to vector<1x32xf32>
    %497 = arith.mulf %486, %496 : vector<1x32xf32>
    %498 = arith.addf %495, %497 : vector<1x32xf32>
    %499 = math.tanh %498 : vector<1x32xf32>
    %cst_104 = arith.constant 1.000000e+00 : f32
    %500 = vector.broadcast %cst_104 : f32 to vector<1x32xf32>
    %501 = arith.subf %500, %494 : vector<1x32xf32>
    %502 = arith.mulf %501, %499 : vector<1x32xf32>
    %503 = arith.mulf %494, %475 : vector<1x32xf32>
    %504 = arith.addf %502, %503 : vector<1x32xf32>
    %505 = vector.extract_strided_slice %300 {offsets = [7, 0], sizes = [1, 96], strides = [1, 1]} : vector<8x96xf32> to vector<1x96xf32>
    %cst_105 = arith.constant dense<0.000000e+00> : vector<1x96xf32>
    %506 = tpu.matmul %504, %295, %cst_105 {dimension_numbers = #tpu.dot_dimension_numbers<[1], [0], [0], [1], [0, 0, 1, 1], [], []>} : vector<1x32xf32>, vector<32x96xf32>, vector<1x96xf32> -> vector<1x96xf32>
    %507 = arith.addf %506, %297 : vector<1x96xf32>
    %508 = vector.extract_strided_slice %505 {offsets = [0, 0], sizes = [1, 32], strides = [1, 1]} : vector<1x96xf32> to vector<1x32xf32>
    %509 = vector.extract_strided_slice %507 {offsets = [0, 0], sizes = [1, 32], strides = [1, 1]} : vector<1x96xf32> to vector<1x32xf32>
    %510 = arith.addf %508, %509 : vector<1x32xf32>
    %511 = arith.negf %510 : vector<1x32xf32>
    %512 = math.exp %511 : vector<1x32xf32>
    %cst_106 = arith.constant 1.000000e+00 : f32
    %513 = vector.broadcast %cst_106 : f32 to vector<1x32xf32>
    %514 = arith.addf %513, %512 : vector<1x32xf32>
    %515 = arith.divf %513, %514 : vector<1x32xf32>
    %516 = vector.extract_strided_slice %505 {offsets = [0, 32], sizes = [1, 32], strides = [1, 1]} : vector<1x96xf32> to vector<1x32xf32>
    %517 = vector.extract_strided_slice %507 {offsets = [0, 32], sizes = [1, 32], strides = [1, 1]} : vector<1x96xf32> to vector<1x32xf32>
    %518 = arith.addf %516, %517 : vector<1x32xf32>
    %519 = arith.negf %518 : vector<1x32xf32>
    %520 = math.exp %519 : vector<1x32xf32>
    %cst_107 = arith.constant 1.000000e+00 : f32
    %521 = vector.broadcast %cst_107 : f32 to vector<1x32xf32>
    %522 = arith.addf %521, %520 : vector<1x32xf32>
    %523 = arith.divf %521, %522 : vector<1x32xf32>
    %524 = vector.extract_strided_slice %505 {offsets = [0, 64], sizes = [1, 32], strides = [1, 1]} : vector<1x96xf32> to vector<1x32xf32>
    %525 = vector.extract_strided_slice %507 {offsets = [0, 64], sizes = [1, 32], strides = [1, 1]} : vector<1x96xf32> to vector<1x32xf32>
    %526 = arith.mulf %515, %525 : vector<1x32xf32>
    %527 = arith.addf %524, %526 : vector<1x32xf32>
    %528 = math.tanh %527 : vector<1x32xf32>
    %cst_108 = arith.constant 1.000000e+00 : f32
    %529 = vector.broadcast %cst_108 : f32 to vector<1x32xf32>
    %530 = arith.subf %529, %523 : vector<1x32xf32>
    %531 = arith.mulf %530, %528 : vector<1x32xf32>
    %532 = arith.mulf %523, %504 : vector<1x32xf32>
    %533 = arith.addf %531, %532 : vector<1x32xf32>
    %534 = tpu.concatenate %330, %359, %388, %417, %446, %475, %504, %533 in 0 : vector<1x32xf32>, vector<1x32xf32>, vector<1x32xf32>, vector<1x32xf32>, vector<1x32xf32>, vector<1x32xf32>, vector<1x32xf32>, vector<1x32xf32> -> vector<8x32xf32>
    %535 = tpu.concatenate %292, %533 in 0 : vector<1x32xf32>, vector<1x32xf32> -> vector<2x32xf32>
    %c0_109 = arith.constant 0 : index
    %c0_110 = arith.constant 0 : index
    %c0_111 = arith.constant 0 : index
    %536 = vector.load %arg20[%c0_109, %c0_110, %c0_111] : memref<1x2x32xf32, #tpu.memory_space<vmem>>, vector<1x2x32xf32>
    %537 = vector.shape_cast %536 : vector<1x2x32xf32> to vector<2x32xf32>
    %538 = vector.shape_cast %535 : vector<2x32xf32> to vector<1x2x32xf32>
    tpu.vector_store %arg20[%c0_109, %c0_110, %c0_111], %538 {strides = array<i32>} : memref<1x2x32xf32, #tpu.memory_space<vmem>>, vector<1x2x32xf32>,
    %c0_112 = arith.constant 0 : index
    %c0_113 = arith.constant 0 : index
    %539 = vector.load %arg17[%c0_112, %c0_113] : memref<32x5xf32, #tpu.memory_space<vmem>>, vector<32x5xf32>
    %c0_114 = arith.constant 0 : index
    %c0_115 = arith.constant 0 : index
    %540 = vector.load %arg18[%c0_114, %c0_115] : memref<1x5xf32, #tpu.memory_space<vmem>>, vector<1x5xf32>
    %cst_116 = arith.constant dense<0.000000e+00> : vector<8x5xf32>
    %541 = tpu.matmul %534, %539, %cst_116 {dimension_numbers = #tpu.dot_dimension_numbers<[1], [0], [0], [1], [0, 0, 1, 1], [], []>} : vector<8x32xf32>, vector<32x5xf32>, vector<8x5xf32> -> vector<8x5xf32>
    %542 = vector.broadcast %540 : vector<1x5xf32> to vector<8x5xf32>
    %543 = arith.addf %541, %542 : vector<8x5xf32>
    %544 = vector.extract_strided_slice %543 {offsets = [0, 0], sizes = [8, 4], strides = [1, 1]} : vector<8x5xf32> to vector<8x4xf32>
    %cst_117 = arith.constant 8.800000e+01 : f32
    %545 = vector.broadcast %cst_117 : f32 to vector<8x4xf32>
    %546 = arith.cmpf ogt, %544, %545 : vector<8x4xf32>
    %cst_118 = arith.constant 8.800000e+01 : f32
    %547 = vector.broadcast %cst_118 : f32 to vector<8x4xf32>
    %548 = arith.select %546, %547, %544 : vector<8x4xi1>, vector<8x4xf32>
    %549 = vector.extract_strided_slice %543 {offsets = [0, 4], sizes = [8, 1], strides = [1, 1]} : vector<8x5xf32> to vector<8x1xf32>
    %550 = arith.negf %549 : vector<8x1xf32>
    %551 = math.exp %550 : vector<8x1xf32>
    %cst_119 = arith.constant 1.000000e+00 : f32
    %552 = vector.broadcast %cst_119 : f32 to vector<8x1xf32>
    %553 = arith.addf %552, %551 : vector<8x1xf32>
    %554 = arith.divf %552, %553 : vector<8x1xf32>
    %cst_120 = arith.constant dense<0xFF800000> : vector<8xf32>
    %555 = vector.multi_reduction <maximumf>, %548, %cst_120 [1] : vector<8x4xf32> to vector<8xf32>
    %556 = vector.shape_cast %555 : vector<8xf32> to vector<8x1xf32>
    %557 = vector.broadcast %556 : vector<8x1xf32> to vector<8x4xf32>
    %558 = arith.subf %548, %557 : vector<8x4xf32>
    %559 = math.exp %558 : vector<8x4xf32>
    %cst_121 = arith.constant dense<0.000000e+00> : vector<8xf32>
    %560 = vector.multi_reduction <add>, %559, %cst_121 [1] : vector<8x4xf32> to vector<8xf32>
    %561 = vector.shape_cast %560 : vector<8xf32> to vector<8x1xf32>
    %562 = tpu.reciprocal %561 {approx = true} : vector<8x1xf32> -> vector<8x1xf32>
    %563 = vector.broadcast %562 : vector<8x1xf32> to vector<8x4xf32>
    %564 = arith.mulf %559, %563 : vector<8x4xf32>
    %565 = tpu.transpose %554, [1, 0] : vector<8x1xf32> -> vector<1x8xf32>
    %566 = tpu.transpose %564, [1, 0] : vector<8x4xf32> -> vector<4x8xf32>
    %cst_122 = arith.constant 1.000000e+00 : f32
    %567 = vector.broadcast %cst_122 : f32 to vector<1x8xf32>
    %568 = arith.subf %567, %565 : vector<1x8xf32>
    %569 = vector.broadcast %568 : vector<1x8xf32> to vector<4x8xf32>
    %570 = arith.mulf %566, %569 : vector<4x8xf32>
    %571 = vector.broadcast %565 : vector<1x8xf32> to vector<4x8xf32>
    %572 = arith.mulf %1, %571 : vector<4x8xf32>
    %573 = arith.addf %570, %572 : vector<4x8xf32>
    %c0_123 = arith.constant 0 : index
    %c0_124 = arith.constant 0 : index
    %c0_125 = arith.constant 0 : index
    %574 = vector.load %arg19[%c0_123, %c0_124, %c0_125] : memref<1x4x8xf32, #tpu.memory_space<vmem>>, vector<1x4x8xf32>
    %575 = vector.shape_cast %574 : vector<1x4x8xf32> to vector<4x8xf32>
    %576 = vector.shape_cast %573 : vector<4x8xf32> to vector<1x4x8xf32>
    tpu.vector_store %arg19[%c0_123, %c0_124, %c0_125], %576 {strides = array<i32>} : memref<1x4x8xf32, #tpu.memory_space<vmem>>, vector<1x4x8xf32>,
    return
  }
  func.func @transform_0(%arg0: i32) -> (i32, i32, i32) {
    %c0_i32 = arith.constant 0 : i32
    %c0_i32_0 = arith.constant 0 : i32
    %c0_i32_1 = arith.constant 0 : i32
    return %arg0, %c0_i32, %c0_i32_0 : i32, i32, i32
  }
  func.func @transform_1(%arg0: i32) -> (i32, i32, i32) {
    %c0_i32 = arith.constant 0 : i32
    %c0_i32_0 = arith.constant 0 : i32
    %c0_i32_1 = arith.constant 0 : i32
    return %arg0, %c0_i32, %c0_i32_0 : i32, i32, i32
  }
  func.func @transform_2(%arg0: i32) -> (i32, i32, i32) {
    %c0_i32 = arith.constant 0 : i32
    %c0_i32_0 = arith.constant 0 : i32
    %c0_i32_1 = arith.constant 0 : i32
    return %arg0, %c0_i32, %c0_i32_0 : i32, i32, i32
  }
  func.func @transform_3(%arg0: i32) -> (i32, i32, i32) {
    %c0_i32 = arith.constant 0 : i32
    %c0_i32_0 = arith.constant 0 : i32
    %c0_i32_1 = arith.constant 0 : i32
    return %arg0, %c0_i32, %c0_i32_0 : i32, i32, i32
  }
  func.func @transform_4(%arg0: i32) -> (i32, i32) {
    %c0_i32 = arith.constant 0 : i32
    %c0_i32_0 = arith.constant 0 : i32
    %c0_i32_1 = arith.constant 0 : i32
    return %c0_i32, %c0_i32_0 : i32, i32
  }
  func.func @transform_5(%arg0: i32) -> (i32, i32) {
    %c0_i32 = arith.constant 0 : i32
    %c0_i32_0 = arith.constant 0 : i32
    %c0_i32_1 = arith.constant 0 : i32
    return %c0_i32, %c0_i32_0 : i32, i32
  }
  func.func @transform_6(%arg0: i32) -> (i32, i32) {
    %c0_i32 = arith.constant 0 : i32
    %c0_i32_0 = arith.constant 0 : i32
    %c0_i32_1 = arith.constant 0 : i32
    return %c0_i32, %c0_i32_0 : i32, i32
  }
  func.func @transform_7(%arg0: i32) -> (i32, i32, i32) {
    %c0_i32 = arith.constant 0 : i32
    %c0_i32_0 = arith.constant 0 : i32
    %c0_i32_1 = arith.constant 0 : i32
    return %arg0, %c0_i32, %c0_i32_0 : i32, i32, i32
  }
  func.func @transform_8(%arg0: i32) -> (i32, i32) {
    %c0_i32 = arith.constant 0 : i32
    %c0_i32_0 = arith.constant 0 : i32
    %c0_i32_1 = arith.constant 0 : i32
    return %c0_i32, %c0_i32_0 : i32, i32
  }
  func.func @transform_9(%arg0: i32) -> (i32, i32) {
    %c0_i32 = arith.constant 0 : i32
    %c0_i32_0 = arith.constant 0 : i32
    %c0_i32_1 = arith.constant 0 : i32
    return %c0_i32, %c0_i32_0 : i32, i32
  }
  func.func @transform_10(%arg0: i32) -> (i32, i32) {
    %c0_i32 = arith.constant 0 : i32
    %c0_i32_0 = arith.constant 0 : i32
    %c0_i32_1 = arith.constant 0 : i32
    return %c0_i32, %c0_i32_0 : i32, i32
  }
  func.func @transform_11(%arg0: i32) -> (i32, i32) {
    %c0_i32 = arith.constant 0 : i32
    %c0_i32_0 = arith.constant 0 : i32
    %c0_i32_1 = arith.constant 0 : i32
    return %c0_i32, %c0_i32_0 : i32, i32
  }
  func.func @transform_12(%arg0: i32) -> (i32, i32) {
    %c0_i32 = arith.constant 0 : i32
    %c0_i32_0 = arith.constant 0 : i32
    %c0_i32_1 = arith.constant 0 : i32
    return %c0_i32, %c0_i32_0 : i32, i32
  }
  func.func @transform_13(%arg0: i32) -> (i32, i32) {
    %c0_i32 = arith.constant 0 : i32
    %c0_i32_0 = arith.constant 0 : i32
    %c0_i32_1 = arith.constant 0 : i32
    return %c0_i32, %c0_i32_0 : i32, i32
  }
  func.func @transform_14(%arg0: i32) -> (i32, i32) {
    %c0_i32 = arith.constant 0 : i32
    %c0_i32_0 = arith.constant 0 : i32
    %c0_i32_1 = arith.constant 0 : i32
    return %c0_i32, %c0_i32_0 : i32, i32
  }
  func.func @transform_15(%arg0: i32) -> (i32, i32) {
    %c0_i32 = arith.constant 0 : i32
    %c0_i32_0 = arith.constant 0 : i32
    %c0_i32_1 = arith.constant 0 : i32
    return %c0_i32, %c0_i32_0 : i32, i32
  }
  func.func @transform_16(%arg0: i32) -> (i32, i32) {
    %c0_i32 = arith.constant 0 : i32
    %c0_i32_0 = arith.constant 0 : i32
    %c0_i32_1 = arith.constant 0 : i32
    return %c0_i32, %c0_i32_0 : i32, i32
  }
  func.func @transform_17(%arg0: i32) -> (i32, i32) {
    %c0_i32 = arith.constant 0 : i32
    %c0_i32_0 = arith.constant 0 : i32
    %c0_i32_1 = arith.constant 0 : i32
    return %c0_i32, %c0_i32_0 : i32, i32
  }
  func.func @transform_18(%arg0: i32) -> (i32, i32, i32) {
    %c0_i32 = arith.constant 0 : i32
    %c0_i32_0 = arith.constant 0 : i32
    %c0_i32_1 = arith.constant 0 : i32
    return %arg0, %c0_i32, %c0_i32_0 : i32, i32, i32
  }
  func.func @transform_19(%arg0: i32) -> (i32, i32, i32) {
    %c0_i32 = arith.constant 0 : i32
    %c0_i32_0 = arith.constant 0 : i32
    %c0_i32_1 = arith.constant 0 : i32
    return %arg0, %c0_i32, %c0_i32_0 : i32, i32, i32
  }
}

</mosaic_0001>

<llo_original>
// kernel: chemp_forward.1
$region0: #{chemp_forward.1}
  #allocation0 [shape = 'u32[]', space=smem, size = 0x4, offset = 0x4, fixed_abs, tag = 'smem constant byte address 0x4 - core index']
  #allocation1 [shape = 'u32[144,128]{1,0:T(1,128)}', space=vmem, size = 0x12000, scoped, tag = 'internal scratch']
  #allocation2 [shape = 'f32[1,1]{1,0:T(1,128)S(1)}', space=vmem, size = 0x200, scoped, tag = 'scoped memory for chemp_forward.1']
  %s0 = inlined_call_operand.hbm [shape: f32[2,4,8], index: 0, kind: input, shape index: {}]
  %s1 = inlined_call_operand.vmem [shape: f32[2,8,8], index: 1, kind: input, shape index: {}]
  %s2 = inlined_call_operand.vmem [shape: f32[2,1,8], index: 2, kind: input, shape index: {}]
  %s3 = inlined_call_operand.vmem [shape: f32[2,1,8], index: 3, kind: input, shape index: {}]
  %s4 = inlined_call_operand.vmem [shape: f32[2,4], index: 4, kind: input, shape index: {}]
  %s5 = inlined_call_operand.vmem [shape: f32[4,2], index: 5, kind: input, shape index: {}]
  %s6 = inlined_call_operand.<no memory space> [shape: f32[1,1], index: 6, kind: input, shape index: {}]
  %s7 = inlined_call_operand.vmem [shape: f32[2,2,32], index: 7, kind: input, shape index: {}]
  %s8 = inlined_call_operand.vmem [shape: f32[4,96], index: 8, kind: input, shape index: {}]
  %s9 = inlined_call_operand.vmem [shape: f32[32,96], index: 9, kind: input, shape index: {}]
  %s10 = inlined_call_operand.vmem [shape: f32[1,96], index: 10, kind: input, shape index: {}]
  %s11 = inlined_call_operand.vmem [shape: f32[1,96], index: 11, kind: input, shape index: {}]
  %s12 = inlined_call_operand.vmem [shape: f32[32,96], index: 12, kind: input, shape index: {}]
  %s13 = inlined_call_operand.vmem [shape: f32[32,96], index: 13, kind: input, shape index: {}]
  %s14 = inlined_call_operand.vmem [shape: f32[1,96], index: 14, kind: input, shape index: {}]
  %s15 = inlined_call_operand.vmem [shape: f32[1,96], index: 15, kind: input, shape index: {}]
  %s16 = inlined_call_operand.vmem [shape: f32[32,5], index: 16, kind: input, shape index: {}]
  %s17 = inlined_call_operand.vmem [shape: f32[1,5], index: 17, kind: input, shape index: {}]
  %s18 = inlined_call_operand.hbm [shape: f32[2,4,8], index: 18, kind: output, shape index: {0}]
  %s19 = inlined_call_operand.vmem [shape: f32[2,2,32], index: 19, kind: output, shape index: {1}]
  %20 = xla_tuple %s18, %s19
  %s21 = sld [smem:[#allocation0]]
  $region117: #{chemp_forward.1} parent=0
    _
  %s23 = ssub.s32 1, %s21
  %s24 = scalar_select 0, %s23, %s21
  %v25 = vstv %s6
  %26 = vst [vmem:[#allocation2] sm:$0x1] %v25
  $region1: #{chemp_forward.1} parent=0
    #allocation3 [shape = 'u8[4096]{0}', space=vmem, size = 0x1000, scoped, tag = 'input window, operand 0']
    #allocation4 [shape = 's32[2]{0}', space=sflag, size = 0x8, scoped, tag = 'scoped memory for chemp_forward.1']
    #allocation5 [shape = 's32[2]{0}', space=sflag, size = 0x8, scoped, tag = 'scoped memory for chemp_forward.1']
    #allocation6 [shape = 'u8[4096]{0}', space=vmem, size = 0x1000, scoped, tag = 'output window, operand 0']
    %27 = vsyncpa [#allocation4], 0
    %s28 = scalar_lea.sflag [#allocation4], 1
    %29 = vsyncpa %s28, 0
    %30 = vsyncpa [#allocation5], 0
    %s31 = scalar_lea.sflag [#allocation5], 1
    %32 = vsyncpa %s31, 0
    loop: start=0, step=1, limit=4
    $region2: #{chemp_forward.1} parent=1 // loop_pre_header
      _
    $region3: #{chemp_forward.1} parent=1 // loop_header
      %s34 = sphi 0, %s38
      %p35 = scmp.ge.s32.totalorder %s34, 4
      %s44 = sphi 0, %s46
      %s47 = sphi 0, %s44
      %s48 = sphi 0, %s47
      %s64 = sphi 0, %s48
      %s70 = sphi 0, %s72
      %s73 = sphi 0, %s70
      %s74 = sphi 0, %s73
      %s90 = sphi 0, %s74
      %s96 = sphi 0, %s98
      %s99 = sphi 0, %s96
      %s100 = sphi 0, %s99
      %s116 = sphi 0, %s100
      %s122 = sphi 0, %s124
      %s125 = sphi 0, %s122
      %s126 = sphi 0, %s125
      %s142 = sphi 0, %s126
      %s146 = sphi 0, %s146
      %s148 = sphi 0, %s146
      %s149 = sphi 0, %s148
      %s163 = sphi 0, %s149
      %s167 = sphi 0, %s167
      %s169 = sphi 0, %s167
      %s170 = sphi 0, %s169
      %s184 = sphi 0, %s170
      %s188 = sphi 0, %s188
      %s190 = sphi 0, %s188
      %s191 = sphi 0, %s190
      %s205 = sphi 0, %s191
      %s211 = sphi 0, %s213
      %s214 = sphi 0, %s211
      %s215 = sphi 0, %s214
      %s231 = sphi 0, %s215
      %s235 = sphi 0, %s235
      %s237 = sphi 0, %s235
      %s238 = sphi 0, %s237
      %s252 = sphi 0, %s238
      %s256 = sphi 0, %s256
      %s258 = sphi 0, %s256
      %s259 = sphi 0, %s258
      %s273 = sphi 0, %s259
      %s277 = sphi 0, %s277
      %s279 = sphi 0, %s277
      %s280 = sphi 0, %s279
      %s294 = sphi 0, %s280
      %s298 = sphi 0, %s298
      %s300 = sphi 0, %s298
      %s301 = sphi 0, %s300
      %s315 = sphi 0, %s301
      %s319 = sphi 0, %s319
      %s321 = sphi 0, %s319
      %s322 = sphi 0, %s321
      %s336 = sphi 0, %s322
      %s340 = sphi 0, %s340
      %s342 = sphi 0, %s340
      %s343 = sphi 0, %s342
      %s357 = sphi 0, %s343
      %s361 = sphi 0, %s361
      %s363 = sphi 0, %s361
      %s364 = sphi 0, %s363
      %s378 = sphi 0, %s364
      %s382 = sphi 0, %s382
      %s384 = sphi 0, %s382
      %s385 = sphi 0, %s384
      %s399 = sphi 0, %s385
      %s403 = sphi 0, %s403
      %s405 = sphi 0, %s403
      %s406 = sphi 0, %s405
      %s420 = sphi 0, %s406
      %s424 = sphi 0, %s424
      %s426 = sphi 0, %s424
      %s427 = sphi 0, %s426
      %s441 = sphi 0, %s427
      %s447 = sphi 0, %s449
      %s450 = sphi 0, %s447
      %s451 = sphi 0, %s450
      %s467 = sphi 0, %s451
      %s473 = sphi 0, %s475
      %s476 = sphi 0, %s473
      %s477 = sphi 0, %s476
      %s493 = sphi 0, %s477
    $region4: #{chemp_forward.1} parent=1 // loop_header_branch
      %37 = sbr.rel (%p35) target = $region8
    $region5: #{chemp_forward.1} parent=1 // loop_body
      %s39 = ssub.s32 %s34, 1
      %s40 = ssub.s32 %s34, 2
      %s41 = sadd.s32 %s34, 1
      %s42 = ssub.s32 %s34, %s41
      %p43 = scmp.eq.s32.totalorder %s42, 0
      %s45 = sadd.s32 %s44, 1
      %s46 = scalar_select %p43, %s44, %s45
      %p49 = pneg %p43
      %p50 = scmp.eq.s32.totalorder %s34, 1
      %p51 = por %p49, %p50
      %p52 = scmp.ne.s32.totalorder %s44, %s47
      %p53 = scmp.eq.s32.totalorder %s34, 0
      %p54 = por %p52, %p53
      %p55 = scmp.ne.s32.totalorder %s44, %s47
      %p56 = scmp.eq.s32.totalorder %s39, 1
      %p57 = por %p55, %p56
      %p58 = scmp.ne.s32.totalorder %s47, %s48
      %p59 = scmp.eq.s32.totalorder %s39, 0
      %p60 = por %p58, %p59
      %p61 = scmp.ne.s32.totalorder %s47, %s48
      %p62 = scmp.eq.s32.totalorder %s40, 1
      %p63 = por %p61, %p62
      %p65 = scmp.ne.s32.totalorder %s48, %s64
      %p66 = scmp.eq.s32.totalorder %s40, 0
      %p67 = por %p65, %p66
      %s68 = ssub.s32 %s34, %s41
      %p69 = scmp.eq.s32.totalorder %s68, 0
      %s71 = sadd.s32 %s70, 1
      %s72 = scalar_select %p69, %s70, %s71
      %p75 = pneg %p69
      %p76 = scmp.eq.s32.totalorder %s34, 1
      %p77 = por %p75, %p76
      %p78 = scmp.ne.s32.totalorder %s70, %s73
      %p79 = scmp.eq.s32.totalorder %s34, 0
      %p80 = por %p78, %p79
      %p81 = scmp.ne.s32.totalorder %s70, %s73
      %p82 = scmp.eq.s32.totalorder %s39, 1
      %p83 = por %p81, %p82
      %p84 = scmp.ne.s32.totalorder %s73, %s74
      %p85 = scmp.eq.s32.totalorder %s39, 0
      %p86 = por %p84, %p85
      %p87 = scmp.ne.s32.totalorder %s73, %s74
      %p88 = scmp.eq.s32.totalorder %s40, 1
      %p89 = por %p87, %p88
      %p91 = scmp.ne.s32.totalorder %s74, %s90
      %p92 = scmp.eq.s32.totalorder %s40, 0
      %p93 = por %p91, %p92
      %s94 = ssub.s32 %s34, %s41
      %p95 = scmp.eq.s32.totalorder %s94, 0
      %s97 = sadd.s32 %s96, 1
      %s98 = scalar_select %p95, %s96, %s97
      %p101 = pneg %p95
      %p102 = scmp.eq.s32.totalorder %s34, 1
      %p103 = por %p101, %p102
      %p104 = scmp.ne.s32.totalorder %s96, %s99
      %p105 = scmp.eq.s32.totalorder %s34, 0
      %p106 = por %p104, %p105
      %p107 = scmp.ne.s32.totalorder %s96, %s99
      %p108 = scmp.eq.s32.totalorder %s39, 1
      %p109 = por %p107, %p108
      %p110 = scmp.ne.s32.totalorder %s99, %s100
      %p111 = scmp.eq.s32.totalorder %s39, 0
      %p112 = por %p110, %p111
      %p113 = scmp.ne.s32.totalorder %s99, %s100
      %p114 = scmp.eq.s32.totalorder %s40, 1
      %p115 = por %p113, %p114
      %p117 = scmp.ne.s32.totalorder %s100, %s116
      %p118 = scmp.eq.s32.totalorder %s40, 0
      %p119 = por %p117, %p118
      %s120 = ssub.s32 %s34, %s41
      %p121 = scmp.eq.s32.totalorder %s120, 0
      %s123 = sadd.s32 %s122, 1
      %s124 = scalar_select %p121, %s122, %s123
      %p127 = pneg %p121
      %p128 = scmp.eq.s32.totalorder %s34, 1
      %p129 = por %p127, %p128
      %p130 = scmp.ne.s32.totalorder %s122, %s125
      %p131 = scmp.eq.s32.totalorder %s34, 0
      %p132 = por %p130, %p131
      %p133 = scmp.ne.s32.totalorder %s122, %s125
      %p134 = scmp.eq.s32.totalorder %s39, 1
      %p135 = por %p133, %p134
      %p136 = scmp.ne.s32.totalorder %s125, %s126
      %p137 = scmp.eq.s32.totalorder %s39, 0
      %p138 = por %p136, %p137
      %p139 = scmp.ne.s32.totalorder %s125, %s126
      %p140 = scmp.eq.s32.totalorder %s40, 1
      %p141 = por %p139, %p140
      %p143 = scmp.ne.s32.totalorder %s126, %s142
      %p144 = scmp.eq.s32.totalorder %s40, 0
      %p145 = por %p143, %p144
      %s147 = sadd.s32 %s146, 1
      %p150 = scmp.eq.s32.totalorder %s34, 1
      %p151 = scmp.ne.s32.totalorder %s146, %s148
      %p152 = scmp.eq.s32.totalorder %s34, 0
      %p153 = por %p151, %p152
      %p154 = scmp.ne.s32.totalorder %s146, %s148
      %p155 = scmp.eq.s32.totalorder %s39, 1
      %p156 = por %p154, %p155
      %p157 = scmp.ne.s32.totalorder %s148, %s149
      %p158 = scmp.eq.s32.totalorder %s39, 0
      %p159 = por %p157, %p158
      %p160 = scmp.ne.s32.totalorder %s148, %s149
      %p161 = scmp.eq.s32.totalorder %s40, 1
      %p162 = por %p160, %p161
      %p164 = scmp.ne.s32.totalorder %s149, %s163
      %p165 = scmp.eq.s32.totalorder %s40, 0
      %p166 = por %p164, %p165
      %s168 = sadd.s32 %s167, 1
      %p171 = scmp.eq.s32.totalorder %s34, 1
      %p172 = scmp.ne.s32.totalorder %s167, %s169
      %p173 = scmp.eq.s32.totalorder %s34, 0
      %p174 = por %p172, %p173
      %p175 = scmp.ne.s32.totalorder %s167, %s169
      %p176 = scmp.eq.s32.totalorder %s39, 1
      %p177 = por %p175, %p176
      %p178 = scmp.ne.s32.totalorder %s169, %s170
      %p179 = scmp.eq.s32.totalorder %s39, 0
      %p180 = por %p178, %p179
      %p181 = scmp.ne.s32.totalorder %s169, %s170
      %p182 = scmp.eq.s32.totalorder %s40, 1
      %p183 = por %p181, %p182
      %p185 = scmp.ne.s32.totalorder %s170, %s184
      %p186 = scmp.eq.s32.totalorder %s40, 0
      %p187 = por %p185, %p186
      %s189 = sadd.s32 %s188, 1
      %p192 = scmp.eq.s32.totalorder %s34, 1
      %p193 = scmp.ne.s32.totalorder %s188, %s190
      %p194 = scmp.eq.s32.totalorder %s34, 0
      %p195 = por %p193, %p194
      %p196 = scmp.ne.s32.totalorder %s188, %s190
      %p197 = scmp.eq.s32.totalorder %s39, 1
      %p198 = por %p196, %p197
      %p199 = scmp.ne.s32.totalorder %s190, %s191
      %p200 = scmp.eq.s32.totalorder %s39, 0
      %p201 = por %p199, %p200
      %p202 = scmp.ne.s32.totalorder %s190, %s191
      %p203 = scmp.eq.s32.totalorder %s40, 1
      %p204 = por %p202, %p203
      %p206 = scmp.ne.s32.totalorder %s191, %s205
      %p207 = scmp.eq.s32.totalorder %s40, 0
      %p208 = por %p206, %p207
      %s209 = ssub.s32 %s34, %s41
      %p210 = scmp.eq.s32.totalorder %s209, 0
      %s212 = sadd.s32 %s211, 1
      %s213 = scalar_select %p210, %s211, %s212
      %p216 = pneg %p210
      %p217 = scmp.eq.s32.totalorder %s34, 1
      %p218 = por %p216, %p217
      %p219 = scmp.ne.s32.totalorder %s211, %s214
      %p220 = scmp.eq.s32.totalorder %s34, 0
      %p221 = por %p219, %p220
      %p222 = scmp.ne.s32.totalorder %s211, %s214
      %p223 = scmp.eq.s32.totalorder %s39, 1
      %p224 = por %p222, %p223
      %p225 = scmp.ne.s32.totalorder %s214, %s215
      %p226 = scmp.eq.s32.totalorder %s39, 0
      %p227 = por %p225, %p226
      %p228 = scmp.ne.s32.totalorder %s214, %s215
      %p229 = scmp.eq.s32.totalorder %s40, 1
      %p230 = por %p228, %p229
      %p232 = scmp.ne.s32.totalorder %s215, %s231
      %p233 = scmp.eq.s32.totalorder %s40, 0
      %p234 = por %p232, %p233
      %s236 = sadd.s32 %s235, 1
      %p239 = scmp.eq.s32.totalorder %s34, 1
      %p240 = scmp.ne.s32.totalorder %s235, %s237
      %p241 = scmp.eq.s32.totalorder %s34, 0
      %p242 = por %p240, %p241
      %p243 = scmp.ne.s32.totalorder %s235, %s237
      %p244 = scmp.eq.s32.totalorder %s39, 1
      %p245 = por %p243, %p244
      %p246 = scmp.ne.s32.totalorder %s237, %s238
      %p247 = scmp.eq.s32.totalorder %s39, 0
      %p248 = por %p246, %p247
      %p249 = scmp.ne.s32.totalorder %s237, %s238
      %p250 = scmp.eq.s32.totalorder %s40, 1
      %p251 = por %p249, %p250
      %p253 = scmp.ne.s32.totalorder %s238, %s252
      %p254 = scmp.eq.s32.totalorder %s40, 0
      %p255 = por %p253, %p254
      %s257 = sadd.s32 %s256, 1
      %p260 = scmp.eq.s32.totalorder %s34, 1
      %p261 = scmp.ne.s32.totalorder %s256, %s258
      %p262 = scmp.eq.s32.totalorder %s34, 0
      %p263 = por %p261, %p262
      %p264 = scmp.ne.s32.totalorder %s256, %s258
      %p265 = scmp.eq.s32.totalorder %s39, 1
      %p266 = por %p264, %p265
      %p267 = scmp.ne.s32.totalorder %s258, %s259
      %p268 = scmp.eq.s32.totalorder %s39, 0
      %p269 = por %p267, %p268
      %p270 = scmp.ne.s32.totalorder %s258, %s259
      %p271 = scmp.eq.s32.totalorder %s40, 1
      %p272 = por %p270, %p271
      %p274 = scmp.ne.s32.totalorder %s259, %s273
      %p275 = scmp.eq.s32.totalorder %s40, 0
      %p276 = por %p274, %p275
      %s278 = sadd.s32 %s277, 1
      %p281 = scmp.eq.s32.totalorder %s34, 1
      %p282 = scmp.ne.s32.totalorder %s277, %s279
      %p283 = scmp.eq.s32.totalorder %s34, 0
      %p284 = por %p282, %p283
      %p285 = scmp.ne.s32.totalorder %s277, %s279
      %p286 = scmp.eq.s32.totalorder %s39, 1
      %p287 = por %p285, %p286
      %p288 = scmp.ne.s32.totalorder %s279, %s280
      %p289 = scmp.eq.s32.totalorder %s39, 0
      %p290 = por %p288, %p289
      %p291 = scmp.ne.s32.totalorder %s279, %s280
      %p292 = scmp.eq.s32.totalorder %s40, 1
      %p293 = por %p291, %p292
      %p295 = scmp.ne.s32.totalorder %s280, %s294
      %p296 = scmp.eq.s32.totalorder %s40, 0
      %p297 = por %p295, %p296
      %s299 = sadd.s32 %s298, 1
      %p302 = scmp.eq.s32.totalorder %s34, 1
      %p303 = scmp.ne.s32.totalorder %s298, %s300
      %p304 = scmp.eq.s32.totalorder %s34, 0
      %p305 = por %p303, %p304
      %p306 = scmp.ne.s32.totalorder %s298, %s300
      %p307 = scmp.eq.s32.totalorder %s39, 1
      %p308 = por %p306, %p307
      %p309 = scmp.ne.s32.totalorder %s300, %s301
      %p310 = scmp.eq.s32.totalorder %s39, 0
      %p311 = por %p309, %p310
      %p312 = scmp.ne.s32.totalorder %s300, %s301
      %p313 = scmp.eq.s32.totalorder %s40, 1
      %p314 = por %p312, %p313
      %p316 = scmp.ne.s32.totalorder %s301, %s315
      %p317 = scmp.eq.s32.totalorder %s40, 0
      %p318 = por %p316, %p317
      %s320 = sadd.s32 %s319, 1
      %p323 = scmp.eq.s32.totalorder %s34, 1
      %p324 = scmp.ne.s32.totalorder %s319, %s321
      %p325 = scmp.eq.s32.totalorder %s34, 0
      %p326 = por %p324, %p325
      %p327 = scmp.ne.s32.totalorder %s319, %s321
      %p328 = scmp.eq.s32.totalorder %s39, 1
      %p329 = por %p327, %p328
      %p330 = scmp.ne.s32.totalorder %s321, %s322
      %p331 = scmp.eq.s32.totalorder %s39, 0
      %p332 = por %p330, %p331
      %p333 = scmp.ne.s32.totalorder %s321, %s322
      %p334 = scmp.eq.s32.totalorder %s40, 1
      %p335 = por %p333, %p334
      %p337 = scmp.ne.s32.totalorder %s322, %s336
      %p338 = scmp.eq.s32.totalorder %s40, 0
      %p339 = por %p337, %p338
      %s341 = sadd.s32 %s340, 1
      %p344 = scmp.eq.s32.totalorder %s34, 1
      %p345 = scmp.ne.s32.totalorder %s340, %s342
      %p346 = scmp.eq.s32.totalorder %s34, 0
      %p347 = por %p345, %p346
      %p348 = scmp.ne.s32.totalorder %s340, %s342
      %p349 = scmp.eq.s32.totalorder %s39, 1
      %p350 = por %p348, %p349
      %p351 = scmp.ne.s32.totalorder %s342, %s343
      %p352 = scmp.eq.s32.totalorder %s39, 0
      %p353 = por %p351, %p352
      %p354 = scmp.ne.s32.totalorder %s342, %s343
      %p355 = scmp.eq.s32.totalorder %s40, 1
      %p356 = por %p354, %p355
      %p358 = scmp.ne.s32.totalorder %s343, %s357
      %p359 = scmp.eq.s32.totalorder %s40, 0
      %p360 = por %p358, %p359
      %s362 = sadd.s32 %s361, 1
      %p365 = scmp.eq.s32.totalorder %s34, 1
      %p366 = scmp.ne.s32.totalorder %s361, %s363
      %p367 = scmp.eq.s32.totalorder %s34, 0
      %p368 = por %p366, %p367
      %p369 = scmp.ne.s32.totalorder %s361, %s363
      %p370 = scmp.eq.s32.totalorder %s39, 1
      %p371 = por %p369, %p370
      %p372 = scmp.ne.s32.totalorder %s363, %s364
      %p373 = scmp.eq.s32.totalorder %s39, 0
      %p374 = por %p372, %p373
      %p375 = scmp.ne.s32.totalorder %s363, %s364
      %p376 = scmp.eq.s32.totalorder %s40, 1
      %p377 = por %p375, %p376
      %p379 = scmp.ne.s32.totalorder %s364, %s378
      %p380 = scmp.eq.s32.totalorder %s40, 0
      %p381 = por %p379, %p380
      %s383 = sadd.s32 %s382, 1
      %p386 = scmp.eq.s32.totalorder %s34, 1
      %p387 = scmp.ne.s32.totalorder %s382, %s384
      %p388 = scmp.eq.s32.totalorder %s34, 0
      %p389 = por %p387, %p388
      %p390 = scmp.ne.s32.totalorder %s382, %s384
      %p391 = scmp.eq.s32.totalorder %s39, 1
      %p392 = por %p390, %p391
      %p393 = scmp.ne.s32.totalorder %s384, %s385
      %p394 = scmp.eq.s32.totalorder %s39, 0
      %p395 = por %p393, %p394
      %p396 = scmp.ne.s32.totalorder %s384, %s385
      %p397 = scmp.eq.s32.totalorder %s40, 1
      %p398 = por %p396, %p397
      %p400 = scmp.ne.s32.totalorder %s385, %s399
      %p401 = scmp.eq.s32.totalorder %s40, 0
      %p402 = por %p400, %p401
      %s404 = sadd.s32 %s403, 1
      %p407 = scmp.eq.s32.totalorder %s34, 1
      %p408 = scmp.ne.s32.totalorder %s403, %s405
      %p409 = scmp.eq.s32.totalorder %s34, 0
      %p410 = por %p408, %p409
      %p411 = scmp.ne.s32.totalorder %s403, %s405
      %p412 = scmp.eq.s32.totalorder %s39, 1
      %p413 = por %p411, %p412
      %p414 = scmp.ne.s32.totalorder %s405, %s406
      %p415 = scmp.eq.s32.totalorder %s39, 0
      %p416 = por %p414, %p415
      %p417 = scmp.ne.s32.totalorder %s405, %s406
      %p418 = scmp.eq.s32.totalorder %s40, 1
      %p419 = por %p417, %p418
      %p421 = scmp.ne.s32.totalorder %s406, %s420
      %p422 = scmp.eq.s32.totalorder %s40, 0
      %p423 = por %p421, %p422
      %s425 = sadd.s32 %s424, 1
      %p428 = scmp.eq.s32.totalorder %s34, 1
      %p429 = scmp.ne.s32.totalorder %s424, %s426
      %p430 = scmp.eq.s32.totalorder %s34, 0
      %p431 = por %p429, %p430
      %p432 = scmp.ne.s32.totalorder %s424, %s426
      %p433 = scmp.eq.s32.totalorder %s39, 1
      %p434 = por %p432, %p433
      %p435 = scmp.ne.s32.totalorder %s426, %s427
      %p436 = scmp.eq.s32.totalorder %s39, 0
      %p437 = por %p435, %p436
      %p438 = scmp.ne.s32.totalorder %s426, %s427
      %p439 = scmp.eq.s32.totalorder %s40, 1
      %p440 = por %p438, %p439
      %p442 = scmp.ne.s32.totalorder %s427, %s441
      %p443 = scmp.eq.s32.totalorder %s40, 0
      %p444 = por %p442, %p443
      %s445 = ssub.s32 %s34, %s41
      %p446 = scmp.eq.s32.totalorder %s445, 0
      %s448 = sadd.s32 %s447, 1
      %s449 = scalar_select %p446, %s447, %s448
      %p452 = pneg %p446
      %p453 = scmp.eq.s32.totalorder %s34, 1
      %p454 = por %p452, %p453
      %p455 = scmp.ne.s32.totalorder %s447, %s450
      %p456 = scmp.eq.s32.totalorder %s34, 0
      %p457 = por %p455, %p456
      %p458 = scmp.ne.s32.totalorder %s447, %s450
      %p459 = scmp.eq.s32.totalorder %s39, 1
      %p460 = por %p458, %p459
      %p461 = scmp.ne.s32.totalorder %s450, %s451
      %p462 = scmp.eq.s32.totalorder %s39, 0
      %p463 = por %p461, %p462
      %p464 = scmp.ne.s32.totalorder %s450, %s451
      %p465 = scmp.eq.s32.totalorder %s40, 1
      %p466 = por %p464, %p465
      %p468 = scmp.ne.s32.totalorder %s451, %s467
      %p469 = scmp.eq.s32.totalorder %s40, 0
      %p470 = por %p468, %p469
      %s471 = ssub.s32 %s34, %s41
      %p472 = scmp.eq.s32.totalorder %s471, 0
      %s474 = sadd.s32 %s473, 1
      %s475 = scalar_select %p472, %s473, %s474
      %p478 = pneg %p472
      %p479 = scmp.eq.s32.totalorder %s34, 1
      %p480 = por %p478, %p479
      %p481 = scmp.ne.s32.totalorder %s473, %s476
      %p482 = scmp.eq.s32.totalorder %s34, 0
      %p483 = por %p481, %p482
      %p484 = scmp.ne.s32.totalorder %s473, %s476
      %p485 = scmp.eq.s32.totalorder %s39, 1
      %p486 = por %p484, %p485
      %p487 = scmp.ne.s32.totalorder %s476, %s477
      %p488 = scmp.eq.s32.totalorder %s39, 0
      %p489 = por %p487, %p488
      %p490 = scmp.ne.s32.totalorder %s476, %s477
      %p491 = scmp.eq.s32.totalorder %s40, 1
      %p492 = por %p490, %p491
      %p494 = scmp.ne.s32.totalorder %s477, %s493
      %p495 = scmp.eq.s32.totalorder %s40, 0
      %p496 = por %p494, %p495
      %p497 = scmp.le.s32.totalorder 1, %s34
      %p498 = scmp.lt.s32.totalorder %s34, 3
      %p499 = pnand %p497, %p498
      %p500 = pneg %p499
      // Predicated region
      $region9: #{chemp_forward.1} parent=5 // pred_check
        _
      $region10: #{chemp_forward.1} parent=5 // pred_check_branch
        %502 = sbr.rel (%p499) target = $region12
      $region11: #{chemp_forward.1} parent=5 // pred_region
        %s503 = ssub.s32 %s34, 1
        // Predicated region
        $region13: #{chemp_forward.1} parent=11 // pred_check
          %p504 = pneg %p159
        $region14: #{chemp_forward.1} parent=11 // pred_check_branch
          %506 = sbr.rel (%p504) target = $region16
        $region15: #{chemp_forward.1} parent=11 // pred_region
          _
        $region16: #{chemp_forward.1} parent=11 // pred_fallthru
          _
        // Predicated region
        $region17: #{chemp_forward.1} parent=11 // pred_check
          %p507 = pneg %p180
        $region18: #{chemp_forward.1} parent=11 // pred_check_branch
          %509 = sbr.rel (%p507) target = $region20
        $region19: #{chemp_forward.1} parent=11 // pred_region
          _
        $region20: #{chemp_forward.1} parent=11 // pred_fallthru
          _
        // Predicated region
        $region21: #{chemp_forward.1} parent=11 // pred_check
          %p510 = pneg %p201
        $region22: #{chemp_forward.1} parent=11 // pred_check_branch
          %512 = sbr.rel (%p510) target = $region24
        $region23: #{chemp_forward.1} parent=11 // pred_region
          _
        $region24: #{chemp_forward.1} parent=11 // pred_fallthru
          _
        // Predicated region
        $region25: #{chemp_forward.1} parent=11 // pred_check
          %p513 = pneg %p248
        $region26: #{chemp_forward.1} parent=11 // pred_check_branch
          %515 = sbr.rel (%p513) target = $region28
        $region27: #{chemp_forward.1} parent=11 // pred_region
          _
        $region28: #{chemp_forward.1} parent=11 // pred_fallthru
          _
        // Predicated region
        $region29: #{chemp_forward.1} parent=11 // pred_check
          %p516 = pneg %p269
        $region30: #{chemp_forward.1} parent=11 // pred_check_branch
          %518 = sbr.rel (%p516) target = $region32
        $region31: #{chemp_forward.1} parent=11 // pred_region
          _
        $region32: #{chemp_forward.1} parent=11 // pred_fallthru
          _
        // Predicated region
        $region33: #{chemp_forward.1} parent=11 // pred_check
          %p519 = pneg %p290
        $region34: #{chemp_forward.1} parent=11 // pred_check_branch
          %521 = sbr.rel (%p519) target = $region36
        $region35: #{chemp_forward.1} parent=11 // pred_region
          _
        $region36: #{chemp_forward.1} parent=11 // pred_fallthru
          _
        // Predicated region
        $region37: #{chemp_forward.1} parent=11 // pred_check
          %p522 = pneg %p311
        $region38: #{chemp_forward.1} parent=11 // pred_check_branch
          %524 = sbr.rel (%p522) target = $region40
        $region39: #{chemp_forward.1} parent=11 // pred_region
          _
        $region40: #{chemp_forward.1} parent=11 // pred_fallthru
          _
        // Predicated region
        $region41: #{chemp_forward.1} parent=11 // pred_check
          %p525 = pneg %p332
        $region42: #{chemp_forward.1} parent=11 // pred_check_branch
          %527 = sbr.rel (%p525) target = $region44
        $region43: #{chemp_forward.1} parent=11 // pred_region
          _
        $region44: #{chemp_forward.1} parent=11 // pred_fallthru
          _
        // Predicated region
        $region45: #{chemp_forward.1} parent=11 // pred_check
          %p528 = pneg %p353
        $region46: #{chemp_forward.1} parent=11 // pred_check_branch
          %530 = sbr.rel (%p528) target = $region48
        $region47: #{chemp_forward.1} parent=11 // pred_region
          _
        $region48: #{chemp_forward.1} parent=11 // pred_fallthru
          _
        // Predicated region
        $region49: #{chemp_forward.1} parent=11 // pred_check
          %p531 = pneg %p374
        $region50: #{chemp_forward.1} parent=11 // pred_check_branch
          %533 = sbr.rel (%p531) target = $region52
        $region51: #{chemp_forward.1} parent=11 // pred_region
          _
        $region52: #{chemp_forward.1} parent=11 // pred_fallthru
          _
        // Predicated region
        $region53: #{chemp_forward.1} parent=11 // pred_check
          %p534 = pneg %p395
        $region54: #{chemp_forward.1} parent=11 // pred_check_branch
          %536 = sbr.rel (%p534) target = $region56
        $region55: #{chemp_forward.1} parent=11 // pred_region
          _
        $region56: #{chemp_forward.1} parent=11 // pred_fallthru
          _
        // Predicated region
        $region57: #{chemp_forward.1} parent=11 // pred_check
          %p537 = pneg %p416
        $region58: #{chemp_forward.1} parent=11 // pred_check_branch
          %539 = sbr.rel (%p537) target = $region60
        $region59: #{chemp_forward.1} parent=11 // pred_region
          _
        $region60: #{chemp_forward.1} parent=11 // pred_fallthru
          _
        // Predicated region
        $region61: #{chemp_forward.1} parent=11 // pred_check
          %p540 = pneg %p437
        $region62: #{chemp_forward.1} parent=11 // pred_check_branch
          %542 = sbr.rel (%p540) target = $region64
        $region63: #{chemp_forward.1} parent=11 // pred_region
          _
        $region64: #{chemp_forward.1} parent=11 // pred_fallthru
          _
      $region12: #{chemp_forward.1} parent=5 // pred_fallthru
        _
      %p543 = scmp.lt.s32.totalorder %s34, 2
      // Predicated region
      $region65: #{chemp_forward.1} parent=5 // pred_check
        %p544 = pneg %p543
      $region66: #{chemp_forward.1} parent=5 // pred_check_branch
        %546 = sbr.rel (%p544) target = $region68
      $region67: #{chemp_forward.1} parent=5 // pred_region
        // Predicated region
        $region69: #{chemp_forward.1} parent=67 // pred_check
          %p547 = pneg %p54
        $region70: #{chemp_forward.1} parent=67 // pred_check_branch
          %549 = sbr.rel (%p547) target = $region72
        $region71: #{chemp_forward.1} parent=67 // pred_region
          %s550 = sand.u32 %s44, 1
          %s551 = scalar_lea.sflag [#allocation4], %s550
          %s552 = sand.u32 %s44, 1
          %s553 = smul.addr %s552, 4
          %s554 = scalar_lea.vmem [#allocation3], %s553
          %s556 = ssub.s32 64, 64
          %557 = vsyncadd %s551, %s556
          %s558 = smul.addr %s34, 64
          %s559 = scalar_lea.hbm %s0, %s558
          %s561 = sshll.u32 %s554, 4
          %s562 = int_to_ptr.vmem [resolvable:$true] %s561
          %564 = dma.hbm_to_vmem [thread:$0]  %s559, 64, %s562, %s551
        $region72: #{chemp_forward.1} parent=67 // pred_fallthru
          _
        // Predicated region
        $region73: #{chemp_forward.1} parent=67 // pred_check
          %p565 = pneg %p80
        $region74: #{chemp_forward.1} parent=67 // pred_check_branch
          %567 = sbr.rel (%p565) target = $region76
        $region75: #{chemp_forward.1} parent=67 // pred_region
          %p568 = scmp.lt.s32.totalorder %s34, 1
          %s569 = scalar_select %p568, %s34, 1
          %s570 = smul.addr %s569, 8
          %s571 = scalar_lea.vmem %s1, %s570
        $region76: #{chemp_forward.1} parent=67 // pred_fallthru
          _
        // Predicated region
        $region77: #{chemp_forward.1} parent=67 // pred_check
          %p572 = pneg %p106
        $region78: #{chemp_forward.1} parent=67 // pred_check_branch
          %574 = sbr.rel (%p572) target = $region80
        $region79: #{chemp_forward.1} parent=67 // pred_region
          %p575 = scmp.lt.s32.totalorder %s34, 1
          %s576 = scalar_select %p575, %s34, 1
          %s577 = scalar_lea.vmem %s2, %s576
        $region80: #{chemp_forward.1} parent=67 // pred_fallthru
          _
        // Predicated region
        $region81: #{chemp_forward.1} parent=67 // pred_check
          %p578 = pneg %p132
        $region82: #{chemp_forward.1} parent=67 // pred_check_branch
          %580 = sbr.rel (%p578) target = $region84
        $region83: #{chemp_forward.1} parent=67 // pred_region
          %p581 = scmp.lt.s32.totalorder %s34, 1
          %s582 = scalar_select %p581, %s34, 1
          %s583 = scalar_lea.vmem %s3, %s582
        $region84: #{chemp_forward.1} parent=67 // pred_fallthru
          _
        // Predicated region
        $region85: #{chemp_forward.1} parent=67 // pred_check
          %p584 = pneg %p221
        $region86: #{chemp_forward.1} parent=67 // pred_check_branch
          %586 = sbr.rel (%p584) target = $region88
        $region87: #{chemp_forward.1} parent=67 // pred_region
          %p587 = scmp.lt.s32.totalorder %s34, 1
          %s588 = scalar_select %p587, %s34, 1
          %s589 = smul.addr %s588, 2
          %s590 = scalar_lea.vmem %s7, %s589
        $region88: #{chemp_forward.1} parent=67 // pred_fallthru
          _
      $region68: #{chemp_forward.1} parent=5 // pred_fallthru
        _
      %p591 = scmp.le.s32.totalorder 1, %s34
      %p592 = scmp.lt.s32.totalorder %s34, 3
      %p593 = pnand %p591, %p592
      %p594 = pneg %p593
      // Predicated region
      $region89: #{chemp_forward.1} parent=5 // pred_check
        _
      $region90: #{chemp_forward.1} parent=5 // pred_check_branch
        %596 = sbr.rel (%p593) target = $region92
      $region91: #{chemp_forward.1} parent=5 // pred_region
        %s597 = ssub.s32 %s34, 1
        %s598 = sand.u32 %s47, 1
        %s599 = scalar_lea.sflag [#allocation4], %s598
        %s600 = sand.u32 %s47, 1
        %s601 = smul.addr %s600, 4
        %s602 = scalar_lea.vmem [#allocation3], %s601
        // Predicated region
        $region93: #{chemp_forward.1} parent=91 // pred_check
          %p603 = pneg %p60
        $region94: #{chemp_forward.1} parent=91 // pred_check_branch
          %605 = sbr.rel (%p603) target = $region96
        $region95: #{chemp_forward.1} parent=91 // pred_region
          %606 = dma.done %s599, 64
        $region96: #{chemp_forward.1} parent=91 // pred_fallthru
          _
        %s607 = sand.u32 %s47, 1
        %s608 = scalar_lea.sflag [#allocation4], %s607
        %s609 = sand.u32 %s47, 1
        %s610 = smul.addr %s609, 4
        %s611 = scalar_lea.vmem [#allocation3], %s610
        %p612 = pneg %p60
        %p613 = pneg %p57
        %p614 = scmp.lt.s32.totalorder %s39, 1
        %s615 = scalar_select %p614, %s39, 1
        %s616 = smul.addr %s615, 8
        %s617 = scalar_lea.vmem %s1, %s616
        %p618 = pneg %p86
        %p619 = pneg %p83
        %p620 = scmp.lt.s32.totalorder %s39, 1
        %s621 = scalar_select %p620, %s39, 1
        %s622 = scalar_lea.vmem %s2, %s621
        %p623 = pneg %p112
        %p624 = pneg %p109
        %p625 = scmp.lt.s32.totalorder %s39, 1
        %s626 = scalar_select %p625, %s39, 1
        %s627 = scalar_lea.vmem %s3, %s626
        %p628 = pneg %p138
        %p629 = pneg %p135
        %p630 = pneg %p159
        %p631 = pneg %p156
        %p632 = pneg %p180
        %p633 = pneg %p177
        %p634 = pneg %p201
        %p635 = pneg %p198
        %p636 = scmp.lt.s32.totalorder %s39, 1
        %s637 = scalar_select %p636, %s39, 1
        %s638 = smul.addr %s637, 2
        %s639 = scalar_lea.vmem %s7, %s638
        %p640 = pneg %p227
        %p641 = pneg %p224
        %p642 = pneg %p248
        %p643 = pneg %p245
        %p644 = pneg %p269
        %p645 = pneg %p266
        %p646 = pneg %p290
        %p647 = pneg %p287
        %p648 = pneg %p311
        %p649 = pneg %p308
        %p650 = pneg %p332
        %p651 = pneg %p329
        %p652 = pneg %p353
        %p653 = pneg %p350
        %p654 = pneg %p374
        %p655 = pneg %p371
        %p656 = pneg %p395
        %p657 = pneg %p392
        %p658 = pneg %p416
        %p659 = pneg %p413
        %p660 = pneg %p437
        %p661 = pneg %p434
        %p662 = pneg %p463
        %p663 = pneg %p460
        %s664 = sand.u32 %s450, 1
        %s665 = scalar_lea.sflag [#allocation5], %s664
        %s666 = sand.u32 %s450, 1
        %s667 = smul.addr %s666, 4
        %s668 = scalar_lea.vmem [#allocation6], %s667
        %p669 = pneg %p489
        %p670 = pneg %p486
        %p671 = scmp.lt.s32.totalorder %s39, 1
        %s672 = scalar_select %p671, %s39, 1
        %s673 = smul.addr %s672, 2
        %s674 = scalar_lea.vmem %s19, %s673
        %p675 = scmp.lt.s32.totalorder %s39, 1
        %s676 = scalar_select %p675, %s39, 1
        %s677 = smul.addr %s676, 8
        %s678 = scalar_lea.vmem %s1, %s677
        %p679 = scmp.lt.s32.totalorder %s39, 1
        %s680 = scalar_select %p679, %s39, 1
        %s681 = scalar_lea.vmem %s2, %s680
        %p682 = scmp.lt.s32.totalorder %s39, 1
        %s683 = scalar_select %p682, %s39, 1
        %s684 = scalar_lea.vmem %s3, %s683
        %p685 = scmp.lt.s32.totalorder %s39, 1
        %s686 = scalar_select %p685, %s39, 1
        %s687 = smul.addr %s686, 2
        %s688 = scalar_lea.vmem %s7, %s687
        %p689 = scmp.lt.s32.totalorder %s39, 1
        %s690 = scalar_select %p689, %s39, 1
        %s691 = smul.addr %s690, 2
        %s692 = scalar_lea.vmem %s19, %s691
        %v693 = vld [vmem:[%s602] sm:$0xf]
        %v694 = vld [vmem:[%s678] sm:$0xff]
        %v695 = vld [vmem:[%s681] sm:$0x1]
        %v696 = vld [vmem:[%s684] sm:$0x1]
        %v697 = vld [vmem:[%s4] sm:$0x3]
        %v698 = vld [vmem:[%s5] sm:$0xf]
        %v699 = vld [vmem:[#allocation2] sm:$0x1]
        %vm700 = vcmask 31744
        %v702 = vsel %vm700, %v697, 0
        %vm704 = vcmask 1043456
        %v706 = vsel %vm704, %v693, 0
        %708 = vmatprep.subr.mxu0 0.0
        %709 = vmatpush1.msra.mxu0 %v706
        %710 = vmatprep.subr.mxu0 0.0
        %711 = vmatpush1.msra.mxu0 0.0
        %712 = vmatprep.subr.mxu0 0.0
        %713 = vmatpush1.msra.mxu0 0.0
        %714 = vmatprep.subr.mxu0 0.0
        %715 = vmatpush1.msra.mxu0 0.0
        %716 = vmatprep.subr.mxu0 0.0
        %717 = vmatpush1.msra.mxu0 0.0
        %718 = vmatprep.subr.mxu0 0.0
        %719 = vmatpush1.msra.mxu0 0.0
        %720 = vmatprep.subr.mxu0 0.0
        %721 = vmatpush1.msra.mxu0 0.0
        %722 = vmatprep.subr.mxu0 0.0
        %723 = vmatpush1.msra.mxu0 0.0
        %724 = vmatprep.subr.mxu0 0.0
        %725 = vmatpush1.msra.mxu0 0.0
        %726 = vmatprep.subr.mxu0 0.0
        %727 = vmatpush1.msra.mxu0 0.0
        %728 = vmatprep.subr.mxu0 0.0
        %729 = vmatpush1.msra.mxu0 0.0
        %730 = vmatprep.subr.mxu0 0.0
        %731 = vmatpush1.msra.mxu0 0.0
        %732 = vmatprep.subr.mxu0 0.0
        %733 = vmatpush1.msra.mxu0 0.0
        %734 = vmatprep.subr.mxu0 0.0
        %735 = vmatpush1.msra.mxu0 0.0
        %736 = vmatprep.subr.mxu0 0.0
        %737 = vmatpush1.msra.mxu0 0.0
        %738 = vmatprep.subr.mxu0 0.0
        %739 = vmatpush1.msra.mxu0 0.0
        %740 = vmatprep.subr.mxu0 0.0
        %741 = vmatpush1.msra.mxu0 0.0
        %742 = vmatprep.subr.mxu0 0.0
        %743 = vmatpush1.msra.mxu0 0.0
        %744 = vmatprep.subr.mxu0 0.0
        %745 = vmatpush1.msra.mxu0 0.0
        %746 = vmatprep.subr.mxu0 0.0
        %747 = vmatpush1.msra.mxu0 0.0
        %748 = vmatprep.subr.mxu0 0.0
        %749 = vmatpush1.msra.mxu0 0.0
        %750 = vmatprep.subr.mxu0 0.0
        %751 = vmatpush1.msra.mxu0 0.0
        %752 = vmatprep.subr.mxu0 0.0
        %753 = vmatpush1.msra.mxu0 0.0
        %754 = vmatprep.subr.mxu0 0.0
        %755 = vmatpush1.msra.mxu0 0.0
        %756 = vmatprep.subr.mxu0 0.0
        %757 = vmatpush1.msra.mxu0 0.0
        %758 = vmatprep.subr.mxu0 0.0
        %759 = vmatpush1.msra.mxu0 0.0
        %760 = vmatprep.subr.mxu0 0.0
        %761 = vmatpush1.msra.mxu0 0.0
        %762 = vmatprep.subr.mxu0 0.0
        %763 = vmatpush1.msra.mxu0 0.0
        %764 = vmatprep.subr.mxu0 0.0
        %765 = vmatpush1.msra.mxu0 0.0
        %766 = vmatprep.subr.mxu0 0.0
        %767 = vmatpush1.msra.mxu0 0.0
        %768 = vmatprep.subr.mxu0 0.0
        %769 = vmatpush1.msra.mxu0 0.0
        %770 = vmatprep.subr.mxu0 0.0
        %771 = vmatpush1.msra.mxu0 0.0
        %772 = vmatprep.mubr.f32.mxu0 0.0
        %773 = vmatmul.mubr.f32.gmra.mrb[0].mxu0 %v702
        %v774 = vpop.f32.mrb[0].mxu0
        %v775 = vadd.f32 0.0, %v774
        %v776 = vpop.f32.mrb[0].mxu0
        %777 = vdwg.mxu0
        %v778 = vrot.slane %v697, 1
        %v779 = vsel %vm700, %v778, 0
        %781 = vmatprep.subr.mxu0 0.0
        %782 = vmatpush1.msra.mxu0 %v706
        %783 = vmatprep.subr.mxu0 0.0
        %784 = vmatpush1.msra.mxu0 0.0
        %785 = vmatprep.subr.mxu0 0.0
        %786 = vmatpush1.msra.mxu0 0.0
        %787 = vmatprep.subr.mxu0 0.0
        %788 = vmatpush1.msra.mxu0 0.0
        %789 = vmatprep.subr.mxu0 0.0
        %790 = vmatpush1.msra.mxu0 0.0
        %791 = vmatprep.subr.mxu0 0.0
        %792 = vmatpush1.msra.mxu0 0.0
        %793 = vmatprep.subr.mxu0 0.0
        %794 = vmatpush1.msra.mxu0 0.0
        %795 = vmatprep.subr.mxu0 0.0
        %796 = vmatpush1.msra.mxu0 0.0
        %797 = vmatprep.subr.mxu0 0.0
        %798 = vmatpush1.msra.mxu0 0.0
        %799 = vmatprep.subr.mxu0 0.0
        %800 = vmatpush1.msra.mxu0 0.0
        %801 = vmatprep.subr.mxu0 0.0
        %802 = vmatpush1.msra.mxu0 0.0
        %803 = vmatprep.subr.mxu0 0.0
        %804 = vmatpush1.msra.mxu0 0.0
        %805 = vmatprep.subr.mxu0 0.0
        %806 = vmatpush1.msra.mxu0 0.0
        %807 = vmatprep.subr.mxu0 0.0
        %808 = vmatpush1.msra.mxu0 0.0
        %809 = vmatprep.subr.mxu0 0.0
        %810 = vmatpush1.msra.mxu0 0.0
        %811 = vmatprep.subr.mxu0 0.0
        %812 = vmatpush1.msra.mxu0 0.0
        %813 = vmatprep.subr.mxu0 0.0
        %814 = vmatpush1.msra.mxu0 0.0
        %815 = vmatprep.subr.mxu0 0.0
        %816 = vmatpush1.msra.mxu0 0.0
        %817 = vmatprep.subr.mxu0 0.0
        %818 = vmatpush1.msra.mxu0 0.0
        %819 = vmatprep.subr.mxu0 0.0
        %820 = vmatpush1.msra.mxu0 0.0
        %821 = vmatprep.subr.mxu0 0.0
        %822 = vmatpush1.msra.mxu0 0.0
        %823 = vmatprep.subr.mxu0 0.0
        %824 = vmatpush1.msra.mxu0 0.0
        %825 = vmatprep.subr.mxu0 0.0
        %826 = vmatpush1.msra.mxu0 0.0
        %827 = vmatprep.subr.mxu0 0.0
        %828 = vmatpush1.msra.mxu0 0.0
        %829 = vmatprep.subr.mxu0 0.0
        %830 = vmatpush1.msra.mxu0 0.0
        %831 = vmatprep.subr.mxu0 0.0
        %832 = vmatpush1.msra.mxu0 0.0
        %833 = vmatprep.subr.mxu0 0.0
        %834 = vmatpush1.msra.mxu0 0.0
        %835 = vmatprep.subr.mxu0 0.0
        %836 = vmatpush1.msra.mxu0 0.0
        %837 = vmatprep.subr.mxu0 0.0
        %838 = vmatpush1.msra.mxu0 0.0
        %839 = vmatprep.subr.mxu0 0.0
        %840 = vmatpush1.msra.mxu0 0.0
        %841 = vmatprep.subr.mxu0 0.0
        %842 = vmatpush1.msra.mxu0 0.0
        %843 = vmatprep.subr.mxu0 0.0
        %844 = vmatpush1.msra.mxu0 0.0
        %845 = vmatprep.mubr.f32.mxu0 0.0
        %846 = vmatmul.mubr.f32.gmra.mrb[0].mxu0 %v779
        %v847 = vpop.f32.mrb[0].mxu0
        %v848 = vadd.f32 0.0, %v847
        %v849 = vpop.f32.mrb[0].mxu0
        %850 = vdwg.mxu0
        %v851 = vmul.f32 %v775, %v775
        %v852 = vsub.f32 %v848, %v851
        %vm853 = vcmask 64512
        %v855 = vsel %vm853, %v775, 0
        %v858 = vsel %vm853, %v694, 0
        %860 = vmatprep.subr.mxu0 0.0
        %861 = vmatpush1.xpose.msra.mxu0 %v858
        %862 = vmatprep.subr.mxu0 0.0
        %863 = vmatpush1.xpose.msra.mxu0 0.0
        %864 = vmatprep.subr.mxu0 0.0
        %865 = vmatpush1.xpose.msra.mxu0 0.0
        %866 = vmatprep.subr.mxu0 0.0
        %867 = vmatpush1.xpose.msra.mxu0 0.0
        %868 = vmatprep.subr.mxu0 0.0
        %869 = vmatpush1.xpose.msra.mxu0 0.0
        %870 = vmatprep.subr.mxu0 0.0
        %871 = vmatpush1.xpose.msra.mxu0 0.0
        %872 = vmatprep.subr.mxu0 0.0
        %873 = vmatpush1.xpose.msra.mxu0 0.0
        %874 = vmatprep.subr.mxu0 0.0
        %875 = vmatpush1.xpose.msra.mxu0 0.0
        %876 = vmatprep.subr.mxu0 0.0
        %877 = vmatpush1.xpose.msra.mxu0 0.0
        %878 = vmatprep.subr.mxu0 0.0
        %879 = vmatpush1.xpose.msra.mxu0 0.0
        %880 = vmatprep.subr.mxu0 0.0
        %881 = vmatpush1.xpose.msra.mxu0 0.0
        %882 = vmatprep.subr.mxu0 0.0
        %883 = vmatpush1.xpose.msra.mxu0 0.0
        %884 = vmatprep.subr.mxu0 0.0
        %885 = vmatpush1.xpose.msra.mxu0 0.0
        %886 = vmatprep.subr.mxu0 0.0
        %887 = vmatpush1.xpose.msra.mxu0 0.0
        %888 = vmatprep.subr.mxu0 0.0
        %889 = vmatpush1.xpose.msra.mxu0 0.0
        %890 = vmatprep.subr.mxu0 0.0
        %891 = vmatpush1.xpose.msra.mxu0 0.0
        %892 = vmatprep.subr.mxu0 0.0
        %893 = vmatpush1.xpose.msra.mxu0 0.0
        %894 = vmatprep.subr.mxu0 0.0
        %895 = vmatpush1.xpose.msra.mxu0 0.0
        %896 = vmatprep.subr.mxu0 0.0
        %897 = vmatpush1.xpose.msra.mxu0 0.0
        %898 = vmatprep.subr.mxu0 0.0
        %899 = vmatpush1.xpose.msra.mxu0 0.0
        %900 = vmatprep.subr.mxu0 0.0
        %901 = vmatpush1.xpose.msra.mxu0 0.0
        %902 = vmatprep.subr.mxu0 0.0
        %903 = vmatpush1.xpose.msra.mxu0 0.0
        %904 = vmatprep.subr.mxu0 0.0
        %905 = vmatpush1.xpose.msra.mxu0 0.0
        %906 = vmatprep.subr.mxu0 0.0
        %907 = vmatpush1.xpose.msra.mxu0 0.0
        %908 = vmatprep.subr.mxu0 0.0
        %909 = vmatpush1.xpose.msra.mxu0 0.0
        %910 = vmatprep.subr.mxu0 0.0
        %911 = vmatpush1.xpose.msra.mxu0 0.0
        %912 = vmatprep.subr.mxu0 0.0
        %913 = vmatpush1.xpose.msra.mxu0 0.0
        %914 = vmatprep.subr.mxu0 0.0
        %915 = vmatpush1.xpose.msra.mxu0 0.0
        %916 = vmatprep.subr.mxu0 0.0
        %917 = vmatpush1.xpose.msra.mxu0 0.0
        %918 = vmatprep.subr.mxu0 0.0
        %919 = vmatpush1.xpose.msra.mxu0 0.0
        %920 = vmatprep.subr.mxu0 0.0
        %921 = vmatpush1.xpose.msra.mxu0 0.0
        %922 = vmatprep.subr.mxu0 0.0
        %923 = vmatpush1.xpose.msra.mxu0 0.0
        %924 = vmatprep.mubr.f32.mxu0 0.0
        %925 = vmatmul.mubr.f32.gmra.mrb[0].mxu0 %v855
        %v926 = vpop.f32.mrb[0].mxu0
        %v927 = vadd.f32 0.0, %v926
        %v928 = vpop.f32.mrb[0].mxu0
        %929 = vdwg.mxu0
        %v930 = vmul.f32 %v775, %v696
        %v931 = vsub.f32 %v927, %v930
        %v932 = vmul.f32 %v694, %v694
        %934 = vset.pattern.permute.xlu0 0
        %935 = vperm.xlu0 %934, %v699
        %v936 = vpop.permute.xlu0 %935
        %v938 = vlaneseq
        %v939 = vshrl.u32 %v938, 7
        %v940 = vsub.s32 0, %v939
        %v941 = vrot.slane %v936, %v940
        %v943 = vsel %vm853, %v852, 0
        %v946 = vsel %vm853, %v932, 0
        %948 = vmatprep.subr.mxu0 0.0
        %949 = vmatpush1.xpose.msra.mxu0 %v946
        %950 = vmatprep.subr.mxu0 0.0
        %951 = vmatpush1.xpose.msra.mxu0 0.0
        %952 = vmatprep.subr.mxu0 0.0
        %953 = vmatpush1.xpose.msra.mxu0 0.0
        %954 = vmatprep.subr.mxu0 0.0
        %955 = vmatpush1.xpose.msra.mxu0 0.0
        %956 = vmatprep.subr.mxu0 0.0
        %957 = vmatpush1.xpose.msra.mxu0 0.0
        %958 = vmatprep.subr.mxu0 0.0
        %959 = vmatpush1.xpose.msra.mxu0 0.0
        %960 = vmatprep.subr.mxu0 0.0
        %961 = vmatpush1.xpose.msra.mxu0 0.0
        %962 = vmatprep.subr.mxu0 0.0
        %963 = vmatpush1.xpose.msra.mxu0 0.0
        %964 = vmatprep.subr.mxu0 0.0
        %965 = vmatpush1.xpose.msra.mxu0 0.0
        %966 = vmatprep.subr.mxu0 0.0
        %967 = vmatpush1.xpose.msra.mxu0 0.0
        %968 = vmatprep.subr.mxu0 0.0
        %969 = vmatpush1.xpose.msra.mxu0 0.0
        %970 = vmatprep.subr.mxu0 0.0
        %971 = vmatpush1.xpose.msra.mxu0 0.0
        %972 = vmatprep.subr.mxu0 0.0
        %973 = vmatpush1.xpose.msra.mxu0 0.0
        %974 = vmatprep.subr.mxu0 0.0
        %975 = vmatpush1.xpose.msra.mxu0 0.0
        %976 = vmatprep.subr.mxu0 0.0
        %977 = vmatpush1.xpose.msra.mxu0 0.0
        %978 = vmatprep.subr.mxu0 0.0
        %979 = vmatpush1.xpose.msra.mxu0 0.0
        %980 = vmatprep.subr.mxu0 0.0
        %981 = vmatpush1.xpose.msra.mxu0 0.0
        %982 = vmatprep.subr.mxu0 0.0
        %983 = vmatpush1.xpose.msra.mxu0 0.0
        %984 = vmatprep.subr.mxu0 0.0
        %985 = vmatpush1.xpose.msra.mxu0 0.0
        %986 = vmatprep.subr.mxu0 0.0
        %987 = vmatpush1.xpose.msra.mxu0 0.0
        %988 = vmatprep.subr.mxu0 0.0
        %989 = vmatpush1.xpose.msra.mxu0 0.0
        %990 = vmatprep.subr.mxu0 0.0
        %991 = vmatpush1.xpose.msra.mxu0 0.0
        %992 = vmatprep.subr.mxu0 0.0
        %993 = vmatpush1.xpose.msra.mxu0 0.0
        %994 = vmatprep.subr.mxu0 0.0
        %995 = vmatpush1.xpose.msra.mxu0 0.0
        %996 = vmatprep.subr.mxu0 0.0
        %997 = vmatpush1.xpose.msra.mxu0 0.0
        %998 = vmatprep.subr.mxu0 0.0
        %999 = vmatpush1.xpose.msra.mxu0 0.0
        %1000 = vmatprep.subr.mxu0 0.0
        %1001 = vmatpush1.xpose.msra.mxu0 0.0
        %1002 = vmatprep.subr.mxu0 0.0
        %1003 = vmatpush1.xpose.msra.mxu0 0.0
        %1004 = vmatprep.subr.mxu0 0.0
        %1005 = vmatpush1.xpose.msra.mxu0 0.0
        %1006 = vmatprep.subr.mxu0 0.0
        %1007 = vmatpush1.xpose.msra.mxu0 0.0
        %1008 = vmatprep.subr.mxu0 0.0
        %1009 = vmatpush1.xpose.msra.mxu0 0.0
        %1010 = vmatprep.subr.mxu0 0.0
        %1011 = vmatpush1.xpose.msra.mxu0 0.0
        %1012 = vmatprep.mubr.f32.mxu0 0.0
        %1013 = vmatmul.mubr.f32.gmra.mrb[0].mxu0 %v943
        %v1014 = vpop.f32.mrb[0].mxu0
        %v1015 = vadd.f32 %v941, %v1014
        %v1016 = vpop.f32.mrb[0].mxu0
        %1017 = vdwg.mxu0
        %v1018 = vmul.f32 %v696, %v696
        %v1019 = vmul.f32 %v852, %v1018
        %v1020 = vsub.f32 %v1015, %v1019
        %v1021 = vsub.f32 %v695, %v931
        %v1022 = vmul.f32 %v1021, 2.0
        %v1023 = vrcp.pop %v1020
        %v1024 = vmul.f32 %v1023, 0.5
        %1026 = vset.pattern.permute.xlu0 0
        %1027 = vperm.xlu0 %1026, %v698
        %v1028 = vpop.permute.xlu0 %1027
        %v1031 = vlaneseq
        %v1032 = vshrl.u32 %v1031, 7
        %v1033 = vsub.s32 0, %v1032
        %v1034 = vrot.slane %v696, %v1033
        %v1036 = vmul.f32 %v1028, %v1034
        %v1038 = vlaneseq
        %v1039 = vshrl.u32 %v1038, 7
        %v1040 = vsub.s32 0, %v1039
        %v1041 = vrot.slane %v1022, %v1040
        %v1043 = vsub.f32 %v1041, %v1036
        %1044 = vset.pattern.permute.xlu0 1
        %1045 = vperm.xlu0 %1044, %v698
        %v1046 = vpop.permute.xlu0 %1045
        %v1048 = vmul.f32 %v1046, %v1034
        %v1049 = vmul.f32 %v1043, %v1048
        %v1050 = vlaneseq
        %v1051 = vshrl.u32 %v1050, 7
        %v1052 = vsub.s32 0, %v1051
        %v1053 = vrot.slane %v1024, %v1052
        %v1054 = vmul.f32 %v1049, %v1053
        %vm1055 = vcmp.gt.f32.partialorder %v1054, 88.0
        %v1056 = vsel %vm1055, 88.0, %v1054
        %1057 = vxpose.xlu0.b32.start [1/16] %v1056, 128
        %1058 = vxpose.xlu0.b32.cont [2/16] 0.0, 128
        %1059 = vxpose.xlu0.b32.cont [3/16] 0.0, 128
        %1060 = vxpose.xlu0.b32.cont [4/16] 0.0, 128
        %1061 = vxpose.xlu0.b32.cont [5/16] 0.0, 128
        %1062 = vxpose.xlu0.b32.cont [6/16] 0.0, 128
        %1063 = vxpose.xlu0.b32.cont [7/16] 0.0, 128
        %1064 = vxpose.xlu0.b32.cont [8/16] 0.0, 128
        %1065 = vxpose.xlu0.b32.cont [9/16] 0.0, 128
        %1066 = vxpose.xlu0.b32.cont [10/16] 0.0, 128
        %1067 = vxpose.xlu0.b32.cont [11/16] 0.0, 128
        %1068 = vxpose.xlu0.b32.cont [12/16] 0.0, 128
        %1069 = vxpose.xlu0.b32.cont [13/16] 0.0, 128
        %1070 = vxpose.xlu0.b32.cont [14/16] 0.0, 128
        %1071 = vxpose.xlu0.b32.cont [15/16] 0.0, 128
        %1072 = vxpose.xlu0.b32.end [16/16] 0.0, 128
        %v1073 = vpop.trf.xlu0
        %v1074 = vpop.trf.xlu0
        %v1075 = vpop.trf.xlu0
        %v1076 = vpop.trf.xlu0
        %v1077 = vpop.trf.xlu0
        %v1078 = vpop.trf.xlu0
        %v1079 = vpop.trf.xlu0
        %v1080 = vpop.trf.xlu0
        %v1081 = vpop.trf.xlu0
        %v1082 = vpop.trf.xlu0
        %v1083 = vpop.trf.xlu0
        %v1084 = vpop.trf.xlu0
        %v1085 = vpop.trf.xlu0
        %v1086 = vpop.trf.xlu0
        %v1087 = vpop.trf.xlu0
        %v1088 = vpop.trf.xlu0
        %v1089 = vld [vmem:[%s688] sm:$0x3]
        %v1090 = vld [vmem:[%s8] sm:$0xf]
        %v1091 = vld [vmem:[%s9] sm:$0xff]
        %v1092 = vld [vmem:[%s9 + $0x8] sm:$0xff]
        %v1093 = vld [vmem:[%s9 + $0x10] sm:$0xff]
        %v1094 = vld [vmem:[%s9 + $0x18] sm:$0xff]
        %v1095 = vld [vmem:[%s10] sm:$0x1]
        %v1096 = vld [vmem:[%s11] sm:$0x1]
        %v1098 = vlaneseq
        %v1099 = vshrl.u32 %v1098, 7
        %v1100 = vsub.s32 0, %v1099
        %v1101 = vrot.slane %v1095, %v1100
        %v1104 = vsel %vm700, %v1073, 0
        %v1107 = vsel %vm704, %v1090, 0
        %1109 = vmatprep.subr.mxu0 0.0
        %1110 = vmatpush1.msra.mxu0 %v1107
        %1111 = vmatprep.subr.mxu0 0.0
        %1112 = vmatpush1.msra.mxu0 0.0
        %1113 = vmatprep.subr.mxu0 0.0
        %1114 = vmatpush1.msra.mxu0 0.0
        %1115 = vmatprep.subr.mxu0 0.0
        %1116 = vmatpush1.msra.mxu0 0.0
        %1117 = vmatprep.subr.mxu0 0.0
        %1118 = vmatpush1.msra.mxu0 0.0
        %1119 = vmatprep.subr.mxu0 0.0
        %1120 = vmatpush1.msra.mxu0 0.0
        %1121 = vmatprep.subr.mxu0 0.0
        %1122 = vmatpush1.msra.mxu0 0.0
        %1123 = vmatprep.subr.mxu0 0.0
        %1124 = vmatpush1.msra.mxu0 0.0
        %1125 = vmatprep.subr.mxu0 0.0
        %1126 = vmatpush1.msra.mxu0 0.0
        %1127 = vmatprep.subr.mxu0 0.0
        %1128 = vmatpush1.msra.mxu0 0.0
        %1129 = vmatprep.subr.mxu0 0.0
        %1130 = vmatpush1.msra.mxu0 0.0
        %1131 = vmatprep.subr.mxu0 0.0
        %1132 = vmatpush1.msra.mxu0 0.0
        %1133 = vmatprep.subr.mxu0 0.0
        %1134 = vmatpush1.msra.mxu0 0.0
        %1135 = vmatprep.subr.mxu0 0.0
        %1136 = vmatpush1.msra.mxu0 0.0
        %1137 = vmatprep.subr.mxu0 0.0
        %1138 = vmatpush1.msra.mxu0 0.0
        %1139 = vmatprep.subr.mxu0 0.0
        %1140 = vmatpush1.msra.mxu0 0.0
        %1141 = vmatprep.subr.mxu0 0.0
        %1142 = vmatpush1.msra.mxu0 0.0
        %1143 = vmatprep.subr.mxu0 0.0
        %1144 = vmatpush1.msra.mxu0 0.0
        %1145 = vmatprep.subr.mxu0 0.0
        %1146 = vmatpush1.msra.mxu0 0.0
        %1147 = vmatprep.subr.mxu0 0.0
        %1148 = vmatpush1.msra.mxu0 0.0
        %1149 = vmatprep.subr.mxu0 0.0
        %1150 = vmatpush1.msra.mxu0 0.0
        %1151 = vmatprep.subr.mxu0 0.0
        %1152 = vmatpush1.msra.mxu0 0.0
        %1153 = vmatprep.subr.mxu0 0.0
        %1154 = vmatpush1.msra.mxu0 0.0
        %1155 = vmatprep.subr.mxu0 0.0
        %1156 = vmatpush1.msra.mxu0 0.0
        %1157 = vmatprep.subr.mxu0 0.0
        %1158 = vmatpush1.msra.mxu0 0.0
        %1159 = vmatprep.subr.mxu0 0.0
        %1160 = vmatpush1.msra.mxu0 0.0
        %1161 = vmatprep.subr.mxu0 0.0
        %1162 = vmatpush1.msra.mxu0 0.0
        %1163 = vmatprep.subr.mxu0 0.0
        %1164 = vmatpush1.msra.mxu0 0.0
        %1165 = vmatprep.subr.mxu0 0.0
        %1166 = vmatpush1.msra.mxu0 0.0
        %1167 = vmatprep.subr.mxu0 0.0
        %1168 = vmatpush1.msra.mxu0 0.0
        %1169 = vmatprep.subr.mxu0 0.0
        %1170 = vmatpush1.msra.mxu0 0.0
        %1171 = vmatprep.subr.mxu0 0.0
        %1172 = vmatpush1.msra.mxu0 0.0
        %1173 = vmatprep.mubr.f32.mxu0 0.0
        %1174 = vmatmul.mubr.f32.gmra.mrb[0].mxu0 %v1104
        %v1175 = vpop.f32.mrb[0].mxu0
        %v1176 = vadd.f32 %v1101, %v1175
        %v1177 = vpop.f32.mrb[0].mxu0
        %1178 = vdwg.mxu0
        %vm1179 = vcmask 261120
        %v1181 = vsel %vm1179, %v1089, 0
        %1183 = vmatprep.subr.mxu0 0.0
        %1184 = vmatpush1.msra.mxu0 %v1091
        %1185 = vmatprep.subr.mxu0 0.0
        %1186 = vmatpush1.msra.mxu0 %v1092
        %1187 = vmatprep.subr.mxu0 0.0
        %1188 = vmatpush1.msra.mxu0 %v1093
        %1189 = vmatprep.subr.mxu0 0.0
        %1190 = vmatpush1.msra.mxu0 %v1094
        %1191 = vmatprep.subr.mxu0 0.0
        %1192 = vmatpush1.msra.mxu0 0.0
        %1193 = vmatprep.subr.mxu0 0.0
        %1194 = vmatpush1.msra.mxu0 0.0
        %1195 = vmatprep.subr.mxu0 0.0
        %1196 = vmatpush1.msra.mxu0 0.0
        %1197 = vmatprep.subr.mxu0 0.0
        %1198 = vmatpush1.msra.mxu0 0.0
        %1199 = vmatprep.subr.mxu0 0.0
        %1200 = vmatpush1.msra.mxu0 0.0
        %1201 = vmatprep.subr.mxu0 0.0
        %1202 = vmatpush1.msra.mxu0 0.0
        %1203 = vmatprep.subr.mxu0 0.0
        %1204 = vmatpush1.msra.mxu0 0.0
        %1205 = vmatprep.subr.mxu0 0.0
        %1206 = vmatpush1.msra.mxu0 0.0
        %1207 = vmatprep.subr.mxu0 0.0
        %1208 = vmatpush1.msra.mxu0 0.0
        %1209 = vmatprep.subr.mxu0 0.0
        %1210 = vmatpush1.msra.mxu0 0.0
        %1211 = vmatprep.subr.mxu0 0.0
        %1212 = vmatpush1.msra.mxu0 0.0
        %1213 = vmatprep.subr.mxu0 0.0
        %1214 = vmatpush1.msra.mxu0 0.0
        %1215 = vmatprep.subr.mxu0 0.0
        %1216 = vmatpush1.msra.mxu0 0.0
        %1217 = vmatprep.subr.mxu0 0.0
        %1218 = vmatpush1.msra.mxu0 0.0
        %1219 = vmatprep.subr.mxu0 0.0
        %1220 = vmatpush1.msra.mxu0 0.0
        %1221 = vmatprep.subr.mxu0 0.0
        %1222 = vmatpush1.msra.mxu0 0.0
        %1223 = vmatprep.subr.mxu0 0.0
        %1224 = vmatpush1.msra.mxu0 0.0
        %1225 = vmatprep.subr.mxu0 0.0
        %1226 = vmatpush1.msra.mxu0 0.0
        %1227 = vmatprep.subr.mxu0 0.0
        %1228 = vmatpush1.msra.mxu0 0.0
        %1229 = vmatprep.subr.mxu0 0.0
        %1230 = vmatpush1.msra.mxu0 0.0
        %1231 = vmatprep.subr.mxu0 0.0
        %1232 = vmatpush1.msra.mxu0 0.0
        %1233 = vmatprep.subr.mxu0 0.0
        %1234 = vmatpush1.msra.mxu0 0.0
        %1235 = vmatprep.subr.mxu0 0.0
        %1236 = vmatpush1.msra.mxu0 0.0
        %1237 = vmatprep.subr.mxu0 0.0
        %1238 = vmatpush1.msra.mxu0 0.0
        %1239 = vmatprep.subr.mxu0 0.0
        %1240 = vmatpush1.msra.mxu0 0.0
        %1241 = vmatprep.subr.mxu0 0.0
        %1242 = vmatpush1.msra.mxu0 0.0
        %1243 = vmatprep.subr.mxu0 0.0
        %1244 = vmatpush1.msra.mxu0 0.0
        %1245 = vmatprep.subr.mxu0 0.0
        %1246 = vmatpush1.msra.mxu0 0.0
        %1247 = vmatprep.mubr.f32.mxu0 0.0
        %1248 = vmatmul.mubr.f32.gmra.mrb[0].mxu0 %v1181
        %v1249 = vpop.f32.mrb[0].mxu0
        %v1250 = vadd.f32 %v1096, %v1249
        %v1251 = vpop.f32.mrb[0].mxu0
        %1252 = vdwg.mxu0
        %v1253 = vadd.f32 %v1176, %v1250
        %v1254 = vxor.u32 %v1253, 2147483648
        %v1255 = vmul.f32 %v1254, 1.442695
        %v1256 = vpow.pop %v1255
        %v1257 = vadd.f32 %v1256, 1.0
        %v1258 = vrcp.pop %v1257
        %v1259 = vmul.f32 1.0, %v1258
        %1261 = vrot.lane.b32.xlu0 %v1250, 64
        %v1262 = vpop.permute.xlu0 %1261
        %v1264 = vmul.f32 %v1259, %v1262
        %1266 = vrot.lane.b32.xlu0 %v1264, 64
        %v1267 = vpop.permute.xlu0 %1266
        %v1269 = vadd.f32 %v1176, %v1267
        %v1270 = vtanh.pop %v1269
        %v1271 = vsub.f32 1.0, %v1259
        %1273 = vrot.lane.b32.xlu0 %v1270, 96
        %v1274 = vpop.permute.xlu0 %1273
        %v1276 = vmul.f32 %v1271, %v1274
        %1277 = vrot.lane.b32.xlu0 %v1089, 32
        %v1278 = vpop.permute.xlu0 %1277
        %v1280 = vmul.f32 %v1259, %v1278
        %v1281 = vadd.f32 %v1276, %v1280
        %1283 = vrot.lane.b32.xlu0 %v1281, 96
        %v1284 = vpop.permute.xlu0 %1283
        %v1285 = vsel %vm1179, %v1284, 0
        %1287 = vmatprep.subr.mxu0 0.0
        %1288 = vmatpush1.msra.mxu0 %v1091
        %1289 = vmatprep.subr.mxu0 0.0
        %1290 = vmatpush1.msra.mxu0 %v1092
        %1291 = vmatprep.subr.mxu0 0.0
        %1292 = vmatpush1.msra.mxu0 %v1093
        %1293 = vmatprep.subr.mxu0 0.0
        %1294 = vmatpush1.msra.mxu0 %v1094
        %1295 = vmatprep.subr.mxu0 0.0
        %1296 = vmatpush1.msra.mxu0 0.0
        %1297 = vmatprep.subr.mxu0 0.0
        %1298 = vmatpush1.msra.mxu0 0.0
        %1299 = vmatprep.subr.mxu0 0.0
        %1300 = vmatpush1.msra.mxu0 0.0
        %1301 = vmatprep.subr.mxu0 0.0
        %1302 = vmatpush1.msra.mxu0 0.0
        %1303 = vmatprep.subr.mxu0 0.0
        %1304 = vmatpush1.msra.mxu0 0.0
        %1305 = vmatprep.subr.mxu0 0.0
        %1306 = vmatpush1.msra.mxu0 0.0
        %1307 = vmatprep.subr.mxu0 0.0
        %1308 = vmatpush1.msra.mxu0 0.0
        %1309 = vmatprep.subr.mxu0 0.0
        %1310 = vmatpush1.msra.mxu0 0.0
        %1311 = vmatprep.subr.mxu0 0.0
        %1312 = vmatpush1.msra.mxu0 0.0
        %1313 = vmatprep.subr.mxu0 0.0
        %1314 = vmatpush1.msra.mxu0 0.0
        %1315 = vmatprep.subr.mxu0 0.0
        %1316 = vmatpush1.msra.mxu0 0.0
        %1317 = vmatprep.subr.mxu0 0.0
        %1318 = vmatpush1.msra.mxu0 0.0
        %1319 = vmatprep.subr.mxu0 0.0
        %1320 = vmatpush1.msra.mxu0 0.0
        %1321 = vmatprep.subr.mxu0 0.0
        %1322 = vmatpush1.msra.mxu0 0.0
        %1323 = vmatprep.subr.mxu0 0.0
        %1324 = vmatpush1.msra.mxu0 0.0
        %1325 = vmatprep.subr.mxu0 0.0
        %1326 = vmatpush1.msra.mxu0 0.0
        %1327 = vmatprep.subr.mxu0 0.0
        %1328 = vmatpush1.msra.mxu0 0.0
        %1329 = vmatprep.subr.mxu0 0.0
        %1330 = vmatpush1.msra.mxu0 0.0
        %1331 = vmatprep.subr.mxu0 0.0
        %1332 = vmatpush1.msra.mxu0 0.0
        %1333 = vmatprep.subr.mxu0 0.0
        %1334 = vmatpush1.msra.mxu0 0.0
        %1335 = vmatprep.subr.mxu0 0.0
        %1336 = vmatpush1.msra.mxu0 0.0
        %1337 = vmatprep.subr.mxu0 0.0
        %1338 = vmatpush1.msra.mxu0 0.0
        %1339 = vmatprep.subr.mxu0 0.0
        %1340 = vmatpush1.msra.mxu0 0.0
        %1341 = vmatprep.subr.mxu0 0.0
        %1342 = vmatpush1.msra.mxu0 0.0
        %1343 = vmatprep.subr.mxu0 0.0
        %1344 = vmatpush1.msra.mxu0 0.0
        %1345 = vmatprep.subr.mxu0 0.0
        %1346 = vmatpush1.msra.mxu0 0.0
        %1347 = vmatprep.subr.mxu0 0.0
        %1348 = vmatpush1.msra.mxu0 0.0
        %1349 = vmatprep.subr.mxu0 0.0
        %1350 = vmatpush1.msra.mxu0 0.0
        %1351 = vmatprep.mubr.f32.mxu0 0.0
        %1352 = vmatmul.mubr.f32.gmra.mrb[0].mxu0 %v1285
        %v1353 = vpop.f32.mrb[0].mxu0
        %v1354 = vadd.f32 %v1096, %v1353
        %v1355 = vpop.f32.mrb[0].mxu0
        %1356 = vdwg.mxu0
        %v1358 = vrot.slane %v1354, 7
        %v1360 = vadd.f32 %v1176, %v1358
        %v1361 = vxor.u32 %v1360, 2147483648
        %v1362 = vmul.f32 %v1361, 1.442695
        %v1363 = vpow.pop %v1362
        %v1364 = vadd.f32 %v1363, 1.0
        %v1365 = vrcp.pop %v1364
        %v1366 = vmul.f32 1.0, %v1365
        %1367 = vrot.lane.b32.xlu0 %v1358, 64
        %v1368 = vpop.permute.xlu0 %1367
        %v1370 = vmul.f32 %v1366, %v1368
        %1372 = vrot.lane.b32.xlu0 %v1370, 64
        %v1373 = vpop.permute.xlu0 %1372
        %v1375 = vadd.f32 %v1176, %v1373
        %v1376 = vtanh.pop %v1375
        %v1377 = vsub.f32 1.0, %v1366
        %1379 = vrot.lane.b32.xlu0 %v1376, 96
        %v1380 = vpop.permute.xlu0 %1379
        %v1382 = vmul.f32 %v1377, %v1380
        %v1383 = vrot.slane %v1281, 7
        %v1385 = vmul.f32 %v1366, %v1383
        %v1386 = vadd.f32 %v1382, %v1385
        %v1388 = vrot.slane %v1386, 1
        %1389 = vrot.lane.b32.xlu0 %v1388, 96
        %v1390 = vpop.permute.xlu0 %1389
        %v1391 = vsel %vm1179, %v1390, 0
        %1393 = vmatprep.subr.mxu0 0.0
        %1394 = vmatpush1.msra.mxu0 %v1091
        %1395 = vmatprep.subr.mxu0 0.0
        %1396 = vmatpush1.msra.mxu0 %v1092
        %1397 = vmatprep.subr.mxu0 0.0
        %1398 = vmatpush1.msra.mxu0 %v1093
        %1399 = vmatprep.subr.mxu0 0.0
        %1400 = vmatpush1.msra.mxu0 %v1094
        %1401 = vmatprep.subr.mxu0 0.0
        %1402 = vmatpush1.msra.mxu0 0.0
        %1403 = vmatprep.subr.mxu0 0.0
        %1404 = vmatpush1.msra.mxu0 0.0
        %1405 = vmatprep.subr.mxu0 0.0
        %1406 = vmatpush1.msra.mxu0 0.0
        %1407 = vmatprep.subr.mxu0 0.0
        %1408 = vmatpush1.msra.mxu0 0.0
        %1409 = vmatprep.subr.mxu0 0.0
        %1410 = vmatpush1.msra.mxu0 0.0
        %1411 = vmatprep.subr.mxu0 0.0
        %1412 = vmatpush1.msra.mxu0 0.0
        %1413 = vmatprep.subr.mxu0 0.0
        %1414 = vmatpush1.msra.mxu0 0.0
        %1415 = vmatprep.subr.mxu0 0.0
        %1416 = vmatpush1.msra.mxu0 0.0
        %1417 = vmatprep.subr.mxu0 0.0
        %1418 = vmatpush1.msra.mxu0 0.0
        %1419 = vmatprep.subr.mxu0 0.0
        %1420 = vmatpush1.msra.mxu0 0.0
        %1421 = vmatprep.subr.mxu0 0.0
        %1422 = vmatpush1.msra.mxu0 0.0
        %1423 = vmatprep.subr.mxu0 0.0
        %1424 = vmatpush1.msra.mxu0 0.0
        %1425 = vmatprep.subr.mxu0 0.0
        %1426 = vmatpush1.msra.mxu0 0.0
        %1427 = vmatprep.subr.mxu0 0.0
        %1428 = vmatpush1.msra.mxu0 0.0
        %1429 = vmatprep.subr.mxu0 0.0
        %1430 = vmatpush1.msra.mxu0 0.0
        %1431 = vmatprep.subr.mxu0 0.0
        %1432 = vmatpush1.msra.mxu0 0.0
        %1433 = vmatprep.subr.mxu0 0.0
        %1434 = vmatpush1.msra.mxu0 0.0
        %1435 = vmatprep.subr.mxu0 0.0
        %1436 = vmatpush1.msra.mxu0 0.0
        %1437 = vmatprep.subr.mxu0 0.0
        %1438 = vmatpush1.msra.mxu0 0.0
        %1439 = vmatprep.subr.mxu0 0.0
        %1440 = vmatpush1.msra.mxu0 0.0
        %1441 = vmatprep.subr.mxu0 0.0
        %1442 = vmatpush1.msra.mxu0 0.0
        %1443 = vmatprep.subr.mxu0 0.0
        %1444 = vmatpush1.msra.mxu0 0.0
        %1445 = vmatprep.subr.mxu0 0.0
        %1446 = vmatpush1.msra.mxu0 0.0
        %1447 = vmatprep.subr.mxu0 0.0
        %1448 = vmatpush1.msra.mxu0 0.0
        %1449 = vmatprep.subr.mxu0 0.0
        %1450 = vmatpush1.msra.mxu0 0.0
        %1451 = vmatprep.subr.mxu0 0.0
        %1452 = vmatpush1.msra.mxu0 0.0
        %1453 = vmatprep.subr.mxu0 0.0
        %1454 = vmatpush1.msra.mxu0 0.0
        %1455 = vmatprep.subr.mxu0 0.0
        %1456 = vmatpush1.msra.mxu0 0.0
        %1457 = vmatprep.mubr.f32.mxu0 0.0
        %1458 = vmatmul.mubr.f32.gmra.mrb[0].mxu0 %v1391
        %v1459 = vpop.f32.mrb[0].mxu0
        %v1460 = vadd.f32 %v1096, %v1459
        %v1461 = vpop.f32.mrb[0].mxu0
        %1462 = vdwg.mxu0
        %v1464 = vrot.slane %v1460, 6
        %v1466 = vadd.f32 %v1176, %v1464
        %v1467 = vxor.u32 %v1466, 2147483648
        %v1468 = vmul.f32 %v1467, 1.442695
        %v1469 = vpow.pop %v1468
        %v1470 = vadd.f32 %v1469, 1.0
        %v1471 = vrcp.pop %v1470
        %v1472 = vmul.f32 1.0, %v1471
        %1473 = vrot.lane.b32.xlu0 %v1464, 64
        %v1474 = vpop.permute.xlu0 %1473
        %v1476 = vmul.f32 %v1472, %v1474
        %1478 = vrot.lane.b32.xlu0 %v1476, 64
        %v1479 = vpop.permute.xlu0 %1478
        %v1481 = vadd.f32 %v1176, %v1479
        %v1482 = vtanh.pop %v1481
        %v1483 = vsub.f32 1.0, %v1472
        %1485 = vrot.lane.b32.xlu0 %v1482, 96
        %v1486 = vpop.permute.xlu0 %1485
        %v1488 = vmul.f32 %v1483, %v1486
        %v1489 = vrot.slane %v1386, 7
        %v1491 = vmul.f32 %v1472, %v1489
        %v1492 = vadd.f32 %v1488, %v1491
        %v1494 = vrot.slane %v1492, 2
        %1495 = vrot.lane.b32.xlu0 %v1494, 96
        %v1496 = vpop.permute.xlu0 %1495
        %v1497 = vsel %vm1179, %v1496, 0
        %1499 = vmatprep.subr.mxu0 0.0
        %1500 = vmatpush1.msra.mxu0 %v1091
        %1501 = vmatprep.subr.mxu0 0.0
        %1502 = vmatpush1.msra.mxu0 %v1092
        %1503 = vmatprep.subr.mxu0 0.0
        %1504 = vmatpush1.msra.mxu0 %v1093
        %1505 = vmatprep.subr.mxu0 0.0
        %1506 = vmatpush1.msra.mxu0 %v1094
        %1507 = vmatprep.subr.mxu0 0.0
        %1508 = vmatpush1.msra.mxu0 0.0
        %1509 = vmatprep.subr.mxu0 0.0
        %1510 = vmatpush1.msra.mxu0 0.0
        %1511 = vmatprep.subr.mxu0 0.0
        %1512 = vmatpush1.msra.mxu0 0.0
        %1513 = vmatprep.subr.mxu0 0.0
        %1514 = vmatpush1.msra.mxu0 0.0
        %1515 = vmatprep.subr.mxu0 0.0
        %1516 = vmatpush1.msra.mxu0 0.0
        %1517 = vmatprep.subr.mxu0 0.0
        %1518 = vmatpush1.msra.mxu0 0.0
        %1519 = vmatprep.subr.mxu0 0.0
        %1520 = vmatpush1.msra.mxu0 0.0
        %1521 = vmatprep.subr.mxu0 0.0
        %1522 = vmatpush1.msra.mxu0 0.0
        %1523 = vmatprep.subr.mxu0 0.0
        %1524 = vmatpush1.msra.mxu0 0.0
        %1525 = vmatprep.subr.mxu0 0.0
        %1526 = vmatpush1.msra.mxu0 0.0
        %1527 = vmatprep.subr.mxu0 0.0
        %1528 = vmatpush1.msra.mxu0 0.0
        %1529 = vmatprep.subr.mxu0 0.0
        %1530 = vmatpush1.msra.mxu0 0.0
        %1531 = vmatprep.subr.mxu0 0.0
        %1532 = vmatpush1.msra.mxu0 0.0
        %1533 = vmatprep.subr.mxu0 0.0
        %1534 = vmatpush1.msra.mxu0 0.0
        %1535 = vmatprep.subr.mxu0 0.0
        %1536 = vmatpush1.msra.mxu0 0.0
        %1537 = vmatprep.subr.mxu0 0.0
        %1538 = vmatpush1.msra.mxu0 0.0
        %1539 = vmatprep.subr.mxu0 0.0
        %1540 = vmatpush1.msra.mxu0 0.0
        %1541 = vmatprep.subr.mxu0 0.0
        %1542 = vmatpush1.msra.mxu0 0.0
        %1543 = vmatprep.subr.mxu0 0.0
        %1544 = vmatpush1.msra.mxu0 0.0
        %1545 = vmatprep.subr.mxu0 0.0
        %1546 = vmatpush1.msra.mxu0 0.0
        %1547 = vmatprep.subr.mxu0 0.0
        %1548 = vmatpush1.msra.mxu0 0.0
        %1549 = vmatprep.subr.mxu0 0.0
        %1550 = vmatpush1.msra.mxu0 0.0
        %1551 = vmatprep.subr.mxu0 0.0
        %1552 = vmatpush1.msra.mxu0 0.0
        %1553 = vmatprep.subr.mxu0 0.0
        %1554 = vmatpush1.msra.mxu0 0.0
        %1555 = vmatprep.subr.mxu0 0.0
        %1556 = vmatpush1.msra.mxu0 0.0
        %1557 = vmatprep.subr.mxu0 0.0
        %1558 = vmatpush1.msra.mxu0 0.0
        %1559 = vmatprep.subr.mxu0 0.0
        %1560 = vmatpush1.msra.mxu0 0.0
        %1561 = vmatprep.subr.mxu0 0.0
        %1562 = vmatpush1.msra.mxu0 0.0
        %1563 = vmatprep.mubr.f32.mxu0 0.0
        %1564 = vmatmul.mubr.f32.gmra.mrb[0].mxu0 %v1497
        %v1565 = vpop.f32.mrb[0].mxu0
        %v1566 = vadd.f32 %v1096, %v1565
        %v1567 = vpop.f32.mrb[0].mxu0
        %1568 = vdwg.mxu0
        %v1570 = vrot.slane %v1566, 5
        %v1572 = vadd.f32 %v1176, %v1570
        %v1573 = vxor.u32 %v1572, 2147483648
        %v1574 = vmul.f32 %v1573, 1.442695
        %v1575 = vpow.pop %v1574
        %v1576 = vadd.f32 %v1575, 1.0
        %v1577 = vrcp.pop %v1576
        %v1578 = vmul.f32 1.0, %v1577
        %1579 = vrot.lane.b32.xlu0 %v1570, 64
        %v1580 = vpop.permute.xlu0 %1579
        %v1582 = vmul.f32 %v1578, %v1580
        %1584 = vrot.lane.b32.xlu0 %v1582, 64
        %v1585 = vpop.permute.xlu0 %1584
        %v1587 = vadd.f32 %v1176, %v1585
        %v1588 = vtanh.pop %v1587
        %v1589 = vsub.f32 1.0, %v1578
        %1591 = vrot.lane.b32.xlu0 %v1588, 96
        %v1592 = vpop.permute.xlu0 %1591
        %v1594 = vmul.f32 %v1589, %v1592
        %v1595 = vrot.slane %v1492, 7
        %v1597 = vmul.f32 %v1578, %v1595
        %v1598 = vadd.f32 %v1594, %v1597
        %v1600 = vrot.slane %v1598, 3
        %1601 = vrot.lane.b32.xlu0 %v1600, 96
        %v1602 = vpop.permute.xlu0 %1601
        %v1603 = vsel %vm1179, %v1602, 0
        %1605 = vmatprep.subr.mxu0 0.0
        %1606 = vmatpush1.msra.mxu0 %v1091
        %1607 = vmatprep.subr.mxu0 0.0
        %1608 = vmatpush1.msra.mxu0 %v1092
        %1609 = vmatprep.subr.mxu0 0.0
        %1610 = vmatpush1.msra.mxu0 %v1093
        %1611 = vmatprep.subr.mxu0 0.0
        %1612 = vmatpush1.msra.mxu0 %v1094
        %1613 = vmatprep.subr.mxu0 0.0
        %1614 = vmatpush1.msra.mxu0 0.0
        %1615 = vmatprep.subr.mxu0 0.0
        %1616 = vmatpush1.msra.mxu0 0.0
        %1617 = vmatprep.subr.mxu0 0.0
        %1618 = vmatpush1.msra.mxu0 0.0
        %1619 = vmatprep.subr.mxu0 0.0
        %1620 = vmatpush1.msra.mxu0 0.0
        %1621 = vmatprep.subr.mxu0 0.0
        %1622 = vmatpush1.msra.mxu0 0.0
        %1623 = vmatprep.subr.mxu0 0.0
        %1624 = vmatpush1.msra.mxu0 0.0
        %1625 = vmatprep.subr.mxu0 0.0
        %1626 = vmatpush1.msra.mxu0 0.0
        %1627 = vmatprep.subr.mxu0 0.0
        %1628 = vmatpush1.msra.mxu0 0.0
        %1629 = vmatprep.subr.mxu0 0.0
        %1630 = vmatpush1.msra.mxu0 0.0
        %1631 = vmatprep.subr.mxu0 0.0
        %1632 = vmatpush1.msra.mxu0 0.0
        %1633 = vmatprep.subr.mxu0 0.0
        %1634 = vmatpush1.msra.mxu0 0.0
        %1635 = vmatprep.subr.mxu0 0.0
        %1636 = vmatpush1.msra.mxu0 0.0
        %1637 = vmatprep.subr.mxu0 0.0
        %1638 = vmatpush1.msra.mxu0 0.0
        %1639 = vmatprep.subr.mxu0 0.0
        %1640 = vmatpush1.msra.mxu0 0.0
        %1641 = vmatprep.subr.mxu0 0.0
        %1642 = vmatpush1.msra.mxu0 0.0
        %1643 = vmatprep.subr.mxu0 0.0
        %1644 = vmatpush1.msra.mxu0 0.0
        %1645 = vmatprep.subr.mxu0 0.0
        %1646 = vmatpush1.msra.mxu0 0.0
        %1647 = vmatprep.subr.mxu0 0.0
        %1648 = vmatpush1.msra.mxu0 0.0
        %1649 = vmatprep.subr.mxu0 0.0
        %1650 = vmatpush1.msra.mxu0 0.0
        %1651 = vmatprep.subr.mxu0 0.0
        %1652 = vmatpush1.msra.mxu0 0.0
        %1653 = vmatprep.subr.mxu0 0.0
        %1654 = vmatpush1.msra.mxu0 0.0
        %1655 = vmatprep.subr.mxu0 0.0
        %1656 = vmatpush1.msra.mxu0 0.0
        %1657 = vmatprep.subr.mxu0 0.0
        %1658 = vmatpush1.msra.mxu0 0.0
        %1659 = vmatprep.subr.mxu0 0.0
        %1660 = vmatpush1.msra.mxu0 0.0
        %1661 = vmatprep.subr.mxu0 0.0
        %1662 = vmatpush1.msra.mxu0 0.0
        %1663 = vmatprep.subr.mxu0 0.0
        %1664 = vmatpush1.msra.mxu0 0.0
        %1665 = vmatprep.subr.mxu0 0.0
        %1666 = vmatpush1.msra.mxu0 0.0
        %1667 = vmatprep.subr.mxu0 0.0
        %1668 = vmatpush1.msra.mxu0 0.0
        %1669 = vmatprep.mubr.f32.mxu0 0.0
        %1670 = vmatmul.mubr.f32.gmra.mrb[0].mxu0 %v1603
        %v1671 = vpop.f32.mrb[0].mxu0
        %v1672 = vadd.f32 %v1096, %v1671
        %v1673 = vpop.f32.mrb[0].mxu0
        %1674 = vdwg.mxu0
        %v1676 = vrot.slane %v1672, 4
        %v1678 = vadd.f32 %v1176, %v1676
        %v1679 = vxor.u32 %v1678, 2147483648
        %v1680 = vmul.f32 %v1679, 1.442695
        %v1681 = vpow.pop %v1680
        %v1682 = vadd.f32 %v1681, 1.0
        %v1683 = vrcp.pop %v1682
        %v1684 = vmul.f32 1.0, %v1683
        %1685 = vrot.lane.b32.xlu0 %v1676, 64
        %v1686 = vpop.permute.xlu0 %1685
        %v1688 = vmul.f32 %v1684, %v1686
        %1690 = vrot.lane.b32.xlu0 %v1688, 64
        %v1691 = vpop.permute.xlu0 %1690
        %v1693 = vadd.f32 %v1176, %v1691
        %v1694 = vtanh.pop %v1693
        %v1695 = vsub.f32 1.0, %v1684
        %1697 = vrot.lane.b32.xlu0 %v1694, 96
        %v1698 = vpop.permute.xlu0 %1697
        %v1700 = vmul.f32 %v1695, %v1698
        %v1701 = vrot.slane %v1598, 7
        %v1703 = vmul.f32 %v1684, %v1701
        %v1704 = vadd.f32 %v1700, %v1703
        %v1706 = vrot.slane %v1704, 4
        %1707 = vrot.lane.b32.xlu0 %v1706, 96
        %v1708 = vpop.permute.xlu0 %1707
        %v1709 = vsel %vm1179, %v1708, 0
        %1711 = vmatprep.subr.mxu0 0.0
        %1712 = vmatpush1.msra.mxu0 %v1091
        %1713 = vmatprep.subr.mxu0 0.0
        %1714 = vmatpush1.msra.mxu0 %v1092
        %1715 = vmatprep.subr.mxu0 0.0
        %1716 = vmatpush1.msra.mxu0 %v1093
        %1717 = vmatprep.subr.mxu0 0.0
        %1718 = vmatpush1.msra.mxu0 %v1094
        %1719 = vmatprep.subr.mxu0 0.0
        %1720 = vmatpush1.msra.mxu0 0.0
        %1721 = vmatprep.subr.mxu0 0.0
        %1722 = vmatpush1.msra.mxu0 0.0
        %1723 = vmatprep.subr.mxu0 0.0
        %1724 = vmatpush1.msra.mxu0 0.0
        %1725 = vmatprep.subr.mxu0 0.0
        %1726 = vmatpush1.msra.mxu0 0.0
        %1727 = vmatprep.subr.mxu0 0.0
        %1728 = vmatpush1.msra.mxu0 0.0
        %1729 = vmatprep.subr.mxu0 0.0
        %1730 = vmatpush1.msra.mxu0 0.0
        %1731 = vmatprep.subr.mxu0 0.0
        %1732 = vmatpush1.msra.mxu0 0.0
        %1733 = vmatprep.subr.mxu0 0.0
        %1734 = vmatpush1.msra.mxu0 0.0
        %1735 = vmatprep.subr.mxu0 0.0
        %1736 = vmatpush1.msra.mxu0 0.0
        %1737 = vmatprep.subr.mxu0 0.0
        %1738 = vmatpush1.msra.mxu0 0.0
        %1739 = vmatprep.subr.mxu0 0.0
        %1740 = vmatpush1.msra.mxu0 0.0
        %1741 = vmatprep.subr.mxu0 0.0
        %1742 = vmatpush1.msra.mxu0 0.0
        %1743 = vmatprep.subr.mxu0 0.0
        %1744 = vmatpush1.msra.mxu0 0.0
        %1745 = vmatprep.subr.mxu0 0.0
        %1746 = vmatpush1.msra.mxu0 0.0
        %1747 = vmatprep.subr.mxu0 0.0
        %1748 = vmatpush1.msra.mxu0 0.0
        %1749 = vmatprep.subr.mxu0 0.0
        %1750 = vmatpush1.msra.mxu0 0.0
        %1751 = vmatprep.subr.mxu0 0.0
        %1752 = vmatpush1.msra.mxu0 0.0
        %1753 = vmatprep.subr.mxu0 0.0
        %1754 = vmatpush1.msra.mxu0 0.0
        %1755 = vmatprep.subr.mxu0 0.0
        %1756 = vmatpush1.msra.mxu0 0.0
        %1757 = vmatprep.subr.mxu0 0.0
        %1758 = vmatpush1.msra.mxu0 0.0
        %1759 = vmatprep.subr.mxu0 0.0
        %1760 = vmatpush1.msra.mxu0 0.0
        %1761 = vmatprep.subr.mxu0 0.0
        %1762 = vmatpush1.msra.mxu0 0.0
        %1763 = vmatprep.subr.mxu0 0.0
        %1764 = vmatpush1.msra.mxu0 0.0
        %1765 = vmatprep.subr.mxu0 0.0
        %1766 = vmatpush1.msra.mxu0 0.0
        %1767 = vmatprep.subr.mxu0 0.0
        %1768 = vmatpush1.msra.mxu0 0.0
        %1769 = vmatprep.subr.mxu0 0.0
        %1770 = vmatpush1.msra.mxu0 0.0
        %1771 = vmatprep.subr.mxu0 0.0
        %1772 = vmatpush1.msra.mxu0 0.0
        %1773 = vmatprep.subr.mxu0 0.0
        %1774 = vmatpush1.msra.mxu0 0.0
        %1775 = vmatprep.mubr.f32.mxu0 0.0
        %1776 = vmatmul.mubr.f32.gmra.mrb[0].mxu0 %v1709
        %v1777 = vpop.f32.mrb[0].mxu0
        %v1778 = vadd.f32 %v1096, %v1777
        %v1779 = vpop.f32.mrb[0].mxu0
        %1780 = vdwg.mxu0
        %v1782 = vrot.slane %v1778, 3
        %v1784 = vadd.f32 %v1176, %v1782
        %v1785 = vxor.u32 %v1784, 2147483648
        %v1786 = vmul.f32 %v1785, 1.442695
        %v1787 = vpow.pop %v1786
        %v1788 = vadd.f32 %v1787, 1.0
        %v1789 = vrcp.pop %v1788
        %v1790 = vmul.f32 1.0, %v1789
        %1791 = vrot.lane.b32.xlu0 %v1782, 64
        %v1792 = vpop.permute.xlu0 %1791
        %v1794 = vmul.f32 %v1790, %v1792
        %1796 = vrot.lane.b32.xlu0 %v1794, 64
        %v1797 = vpop.permute.xlu0 %1796
        %v1799 = vadd.f32 %v1176, %v1797
        %v1800 = vtanh.pop %v1799
        %v1801 = vsub.f32 1.0, %v1790
        %1803 = vrot.lane.b32.xlu0 %v1800, 96
        %v1804 = vpop.permute.xlu0 %1803
        %v1806 = vmul.f32 %v1801, %v1804
        %v1807 = vrot.slane %v1704, 7
        %v1809 = vmul.f32 %v1790, %v1807
        %v1810 = vadd.f32 %v1806, %v1809
        %v1812 = vrot.slane %v1810, 5
        %1813 = vrot.lane.b32.xlu0 %v1812, 96
        %v1814 = vpop.permute.xlu0 %1813
        %v1815 = vsel %vm1179, %v1814, 0
        %1817 = vmatprep.subr.mxu0 0.0
        %1818 = vmatpush1.msra.mxu0 %v1091
        %1819 = vmatprep.subr.mxu0 0.0
        %1820 = vmatpush1.msra.mxu0 %v1092
        %1821 = vmatprep.subr.mxu0 0.0
        %1822 = vmatpush1.msra.mxu0 %v1093
        %1823 = vmatprep.subr.mxu0 0.0
        %1824 = vmatpush1.msra.mxu0 %v1094
        %1825 = vmatprep.subr.mxu0 0.0
        %1826 = vmatpush1.msra.mxu0 0.0
        %1827 = vmatprep.subr.mxu0 0.0
        %1828 = vmatpush1.msra.mxu0 0.0
        %1829 = vmatprep.subr.mxu0 0.0
        %1830 = vmatpush1.msra.mxu0 0.0
        %1831 = vmatprep.subr.mxu0 0.0
        %1832 = vmatpush1.msra.mxu0 0.0
        %1833 = vmatprep.subr.mxu0 0.0
        %1834 = vmatpush1.msra.mxu0 0.0
        %1835 = vmatprep.subr.mxu0 0.0
        %1836 = vmatpush1.msra.mxu0 0.0
        %1837 = vmatprep.subr.mxu0 0.0
        %1838 = vmatpush1.msra.mxu0 0.0
        %1839 = vmatprep.subr.mxu0 0.0
        %1840 = vmatpush1.msra.mxu0 0.0
        %1841 = vmatprep.subr.mxu0 0.0
        %1842 = vmatpush1.msra.mxu0 0.0
        %1843 = vmatprep.subr.mxu0 0.0
        %1844 = vmatpush1.msra.mxu0 0.0
        %1845 = vmatprep.subr.mxu0 0.0
        %1846 = vmatpush1.msra.mxu0 0.0
        %1847 = vmatprep.subr.mxu0 0.0
        %1848 = vmatpush1.msra.mxu0 0.0
        %1849 = vmatprep.subr.mxu0 0.0
        %1850 = vmatpush1.msra.mxu0 0.0
        %1851 = vmatprep.subr.mxu0 0.0
        %1852 = vmatpush1.msra.mxu0 0.0
        %1853 = vmatprep.subr.mxu0 0.0
        %1854 = vmatpush1.msra.mxu0 0.0
        %1855 = vmatprep.subr.mxu0 0.0
        %1856 = vmatpush1.msra.mxu0 0.0
        %1857 = vmatprep.subr.mxu0 0.0
        %1858 = vmatpush1.msra.mxu0 0.0
        %1859 = vmatprep.subr.mxu0 0.0
        %1860 = vmatpush1.msra.mxu0 0.0
        %1861 = vmatprep.subr.mxu0 0.0
        %1862 = vmatpush1.msra.mxu0 0.0
        %1863 = vmatprep.subr.mxu0 0.0
        %1864 = vmatpush1.msra.mxu0 0.0
        %1865 = vmatprep.subr.mxu0 0.0
        %1866 = vmatpush1.msra.mxu0 0.0
        %1867 = vmatprep.subr.mxu0 0.0
        %1868 = vmatpush1.msra.mxu0 0.0
        %1869 = vmatprep.subr.mxu0 0.0
        %1870 = vmatpush1.msra.mxu0 0.0
        %1871 = vmatprep.subr.mxu0 0.0
        %1872 = vmatpush1.msra.mxu0 0.0
        %1873 = vmatprep.subr.mxu0 0.0
        %1874 = vmatpush1.msra.mxu0 0.0
        %1875 = vmatprep.subr.mxu0 0.0
        %1876 = vmatpush1.msra.mxu0 0.0
        %1877 = vmatprep.subr.mxu0 0.0
        %1878 = vmatpush1.msra.mxu0 0.0
        %1879 = vmatprep.subr.mxu0 0.0
        %1880 = vmatpush1.msra.mxu0 0.0
        %1881 = vmatprep.mubr.f32.mxu0 0.0
        %1882 = vmatmul.mubr.f32.gmra.mrb[0].mxu0 %v1815
        %v1883 = vpop.f32.mrb[0].mxu0
        %v1884 = vadd.f32 %v1096, %v1883
        %v1885 = vpop.f32.mrb[0].mxu0
        %1886 = vdwg.mxu0
        %v1888 = vrot.slane %v1884, 2
        %v1890 = vadd.f32 %v1176, %v1888
        %v1891 = vxor.u32 %v1890, 2147483648
        %v1892 = vmul.f32 %v1891, 1.442695
        %v1893 = vpow.pop %v1892
        %v1894 = vadd.f32 %v1893, 1.0
        %v1895 = vrcp.pop %v1894
        %v1896 = vmul.f32 1.0, %v1895
        %1897 = vrot.lane.b32.xlu0 %v1888, 64
        %v1898 = vpop.permute.xlu0 %1897
        %v1900 = vmul.f32 %v1896, %v1898
        %1902 = vrot.lane.b32.xlu0 %v1900, 64
        %v1903 = vpop.permute.xlu0 %1902
        %v1905 = vadd.f32 %v1176, %v1903
        %v1906 = vtanh.pop %v1905
        %v1907 = vsub.f32 1.0, %v1896
        %1909 = vrot.lane.b32.xlu0 %v1906, 96
        %v1910 = vpop.permute.xlu0 %1909
        %v1912 = vmul.f32 %v1907, %v1910
        %v1913 = vrot.slane %v1810, 7
        %v1915 = vmul.f32 %v1896, %v1913
        %v1916 = vadd.f32 %v1912, %v1915
        %v1918 = vrot.slane %v1916, 6
        %1919 = vrot.lane.b32.xlu0 %v1918, 96
        %v1920 = vpop.permute.xlu0 %1919
        %v1921 = vsel %vm1179, %v1920, 0
        %1923 = vmatprep.subr.mxu0 0.0
        %1924 = vmatpush1.msra.mxu0 %v1091
        %1925 = vmatprep.subr.mxu0 0.0
        %1926 = vmatpush1.msra.mxu0 %v1092
        %1927 = vmatprep.subr.mxu0 0.0
        %1928 = vmatpush1.msra.mxu0 %v1093
        %1929 = vmatprep.subr.mxu0 0.0
        %1930 = vmatpush1.msra.mxu0 %v1094
        %1931 = vmatprep.subr.mxu0 0.0
        %1932 = vmatpush1.msra.mxu0 0.0
        %1933 = vmatprep.subr.mxu0 0.0
        %1934 = vmatpush1.msra.mxu0 0.0
        %1935 = vmatprep.subr.mxu0 0.0
        %1936 = vmatpush1.msra.mxu0 0.0
        %1937 = vmatprep.subr.mxu0 0.0
        %1938 = vmatpush1.msra.mxu0 0.0
        %1939 = vmatprep.subr.mxu0 0.0
        %1940 = vmatpush1.msra.mxu0 0.0
        %1941 = vmatprep.subr.mxu0 0.0
        %1942 = vmatpush1.msra.mxu0 0.0
        %1943 = vmatprep.subr.mxu0 0.0
        %1944 = vmatpush1.msra.mxu0 0.0
        %1945 = vmatprep.subr.mxu0 0.0
        %1946 = vmatpush1.msra.mxu0 0.0
        %1947 = vmatprep.subr.mxu0 0.0
        %1948 = vmatpush1.msra.mxu0 0.0
        %1949 = vmatprep.subr.mxu0 0.0
        %1950 = vmatpush1.msra.mxu0 0.0
        %1951 = vmatprep.subr.mxu0 0.0
        %1952 = vmatpush1.msra.mxu0 0.0
        %1953 = vmatprep.subr.mxu0 0.0
        %1954 = vmatpush1.msra.mxu0 0.0
        %1955 = vmatprep.subr.mxu0 0.0
        %1956 = vmatpush1.msra.mxu0 0.0
        %1957 = vmatprep.subr.mxu0 0.0
        %1958 = vmatpush1.msra.mxu0 0.0
        %1959 = vmatprep.subr.mxu0 0.0
        %1960 = vmatpush1.msra.mxu0 0.0
        %1961 = vmatprep.subr.mxu0 0.0
        %1962 = vmatpush1.msra.mxu0 0.0
        %1963 = vmatprep.subr.mxu0 0.0
        %1964 = vmatpush1.msra.mxu0 0.0
        %1965 = vmatprep.subr.mxu0 0.0
        %1966 = vmatpush1.msra.mxu0 0.0
        %1967 = vmatprep.subr.mxu0 0.0
        %1968 = vmatpush1.msra.mxu0 0.0
        %1969 = vmatprep.subr.mxu0 0.0
        %1970 = vmatpush1.msra.mxu0 0.0
        %1971 = vmatprep.subr.mxu0 0.0
        %1972 = vmatpush1.msra.mxu0 0.0
        %1973 = vmatprep.subr.mxu0 0.0
        %1974 = vmatpush1.msra.mxu0 0.0
        %1975 = vmatprep.subr.mxu0 0.0
        %1976 = vmatpush1.msra.mxu0 0.0
        %1977 = vmatprep.subr.mxu0 0.0
        %1978 = vmatpush1.msra.mxu0 0.0
        %1979 = vmatprep.subr.mxu0 0.0
        %1980 = vmatpush1.msra.mxu0 0.0
        %1981 = vmatprep.subr.mxu0 0.0
        %1982 = vmatpush1.msra.mxu0 0.0
        %1983 = vmatprep.subr.mxu0 0.0
        %1984 = vmatpush1.msra.mxu0 0.0
        %1985 = vmatprep.subr.mxu0 0.0
        %1986 = vmatpush1.msra.mxu0 0.0
        %1987 = vmatprep.mubr.f32.mxu0 0.0
        %1988 = vmatmul.mubr.f32.gmra.mrb[0].mxu0 %v1921
        %v1989 = vpop.f32.mrb[0].mxu0
        %v1990 = vadd.f32 %v1096, %v1989
        %v1991 = vpop.f32.mrb[0].mxu0
        %1992 = vdwg.mxu0
        %v1994 = vrot.slane %v1990, 1
        %v1996 = vadd.f32 %v1176, %v1994
        %v1997 = vxor.u32 %v1996, 2147483648
        %v1998 = vmul.f32 %v1997, 1.442695
        %v1999 = vpow.pop %v1998
        %v2000 = vadd.f32 %v1999, 1.0
        %v2001 = vrcp.pop %v2000
        %v2002 = vmul.f32 1.0, %v2001
        %2003 = vrot.lane.b32.xlu0 %v1994, 64
        %v2004 = vpop.permute.xlu0 %2003
        %v2006 = vmul.f32 %v2002, %v2004
        %2008 = vrot.lane.b32.xlu0 %v2006, 64
        %v2009 = vpop.permute.xlu0 %2008
        %v2011 = vadd.f32 %v1176, %v2009
        %v2012 = vtanh.pop %v2011
        %v2013 = vsub.f32 1.0, %v2002
        %2015 = vrot.lane.b32.xlu0 %v2012, 96
        %v2016 = vpop.permute.xlu0 %2015
        %v2018 = vmul.f32 %v2013, %v2016
        %v2019 = vrot.slane %v1916, 7
        %v2021 = vmul.f32 %v2002, %v2019
        %v2022 = vadd.f32 %v2018, %v2021
        %vm2023 = vcmask 1040384
        %v2024 = vsel %vm2023, %v1281, %v1386
        %vm2025 = vcmask 1041408
        %v2026 = vsel %vm2025, %v2024, %v1492
        %vm2027 = vcmask 1042432
        %v2028 = vsel %vm2027, %v2026, %v1598
        %v2029 = vsel %vm704, %v2028, %v1704
        %vm2030 = vcmask 1044480
        %v2031 = vsel %vm2030, %v2029, %v1810
        %vm2032 = vcmask 1045504
        %v2033 = vsel %vm2032, %v2031, %v1916
        %vm2034 = vcmask 1046528
        %v2035 = vsel %vm2034, %v2033, %v2022
        %v2036 = vld [vmem:[%s12] sm:$0xff]
        %v2037 = vld [vmem:[%s12 + $0x8] sm:$0xff]
        %v2038 = vld [vmem:[%s12 + $0x10] sm:$0xff]
        %v2039 = vld [vmem:[%s12 + $0x18] sm:$0xff]
        %v2040 = vld [vmem:[%s13] sm:$0xff]
        %v2041 = vld [vmem:[%s13 + $0x8] sm:$0xff]
        %v2042 = vld [vmem:[%s13 + $0x10] sm:$0xff]
        %v2043 = vld [vmem:[%s13 + $0x18] sm:$0xff]
        %v2044 = vld [vmem:[%s14] sm:$0x1]
        %v2045 = vld [vmem:[%s15] sm:$0x1]
        %v2047 = vlaneseq
        %v2048 = vshrl.u32 %v2047, 7
        %v2049 = vsub.s32 0, %v2048
        %v2050 = vrot.slane %v2044, %v2049
        %2053 = vrot.lane.b32.xlu0 %v2035, 96
        %v2054 = vpop.permute.xlu0 %2053
        %v2055 = vsel %vm1179, %v2054, 0
        %2057 = vmatprep.subr.mxu0 0.0
        %2058 = vmatpush1.msra.mxu0 %v2036
        %2059 = vmatprep.subr.mxu0 0.0
        %2060 = vmatpush1.msra.mxu0 %v2037
        %2061 = vmatprep.subr.mxu0 0.0
        %2062 = vmatpush1.msra.mxu0 %v2038
        %2063 = vmatprep.subr.mxu0 0.0
        %2064 = vmatpush1.msra.mxu0 %v2039
        %2065 = vmatprep.subr.mxu0 0.0
        %2066 = vmatpush1.msra.mxu0 0.0
        %2067 = vmatprep.subr.mxu0 0.0
        %2068 = vmatpush1.msra.mxu0 0.0
        %2069 = vmatprep.subr.mxu0 0.0
        %2070 = vmatpush1.msra.mxu0 0.0
        %2071 = vmatprep.subr.mxu0 0.0
        %2072 = vmatpush1.msra.mxu0 0.0
        %2073 = vmatprep.subr.mxu0 0.0
        %2074 = vmatpush1.msra.mxu0 0.0
        %2075 = vmatprep.subr.mxu0 0.0
        %2076 = vmatpush1.msra.mxu0 0.0
        %2077 = vmatprep.subr.mxu0 0.0
        %2078 = vmatpush1.msra.mxu0 0.0
        %2079 = vmatprep.subr.mxu0 0.0
        %2080 = vmatpush1.msra.mxu0 0.0
        %2081 = vmatprep.subr.mxu0 0.0
        %2082 = vmatpush1.msra.mxu0 0.0
        %2083 = vmatprep.subr.mxu0 0.0
        %2084 = vmatpush1.msra.mxu0 0.0
        %2085 = vmatprep.subr.mxu0 0.0
        %2086 = vmatpush1.msra.mxu0 0.0
        %2087 = vmatprep.subr.mxu0 0.0
        %2088 = vmatpush1.msra.mxu0 0.0
        %2089 = vmatprep.subr.mxu0 0.0
        %2090 = vmatpush1.msra.mxu0 0.0
        %2091 = vmatprep.subr.mxu0 0.0
        %2092 = vmatpush1.msra.mxu0 0.0
        %2093 = vmatprep.subr.mxu0 0.0
        %2094 = vmatpush1.msra.mxu0 0.0
        %2095 = vmatprep.subr.mxu0 0.0
        %2096 = vmatpush1.msra.mxu0 0.0
        %2097 = vmatprep.subr.mxu0 0.0
        %2098 = vmatpush1.msra.mxu0 0.0
        %2099 = vmatprep.subr.mxu0 0.0
        %2100 = vmatpush1.msra.mxu0 0.0
        %2101 = vmatprep.subr.mxu0 0.0
        %2102 = vmatpush1.msra.mxu0 0.0
        %2103 = vmatprep.subr.mxu0 0.0
        %2104 = vmatpush1.msra.mxu0 0.0
        %2105 = vmatprep.subr.mxu0 0.0
        %2106 = vmatpush1.msra.mxu0 0.0
        %2107 = vmatprep.subr.mxu0 0.0
        %2108 = vmatpush1.msra.mxu0 0.0
        %2109 = vmatprep.subr.mxu0 0.0
        %2110 = vmatpush1.msra.mxu0 0.0
        %2111 = vmatprep.subr.mxu0 0.0
        %2112 = vmatpush1.msra.mxu0 0.0
        %2113 = vmatprep.subr.mxu0 0.0
        %2114 = vmatpush1.msra.mxu0 0.0
        %2115 = vmatprep.subr.mxu0 0.0
        %2116 = vmatpush1.msra.mxu0 0.0
        %2117 = vmatprep.subr.mxu0 0.0
        %2118 = vmatpush1.msra.mxu0 0.0
        %2119 = vmatprep.subr.mxu0 0.0
        %2120 = vmatpush1.msra.mxu0 0.0
        %2121 = vmatprep.mubr.f32.mxu0 0.0
        %2122 = vmatmul.mubr.f32.gmra.mrb[0].mxu0 %v2055
        %v2123 = vpop.f32.mrb[0].mxu0
        %v2124 = vadd.f32 %v2050, %v2123
        %v2125 = vpop.f32.mrb[0].mxu0
        %2126 = vdwg.mxu0
        %v2127 = vrot.slane %v1089, 1
        %v2128 = vsel %vm1179, %v2127, 0
        %2130 = vmatprep.subr.mxu0 0.0
        %2131 = vmatpush1.msra.mxu0 %v2040
        %2132 = vmatprep.subr.mxu0 0.0
        %2133 = vmatpush1.msra.mxu0 %v2041
        %2134 = vmatprep.subr.mxu0 0.0
        %2135 = vmatpush1.msra.mxu0 %v2042
        %2136 = vmatprep.subr.mxu0 0.0
        %2137 = vmatpush1.msra.mxu0 %v2043
        %2138 = vmatprep.subr.mxu0 0.0
        %2139 = vmatpush1.msra.mxu0 0.0
        %2140 = vmatprep.subr.mxu0 0.0
        %2141 = vmatpush1.msra.mxu0 0.0
        %2142 = vmatprep.subr.mxu0 0.0
        %2143 = vmatpush1.msra.mxu0 0.0
        %2144 = vmatprep.subr.mxu0 0.0
        %2145 = vmatpush1.msra.mxu0 0.0
        %2146 = vmatprep.subr.mxu0 0.0
        %2147 = vmatpush1.msra.mxu0 0.0
        %2148 = vmatprep.subr.mxu0 0.0
        %2149 = vmatpush1.msra.mxu0 0.0
        %2150 = vmatprep.subr.mxu0 0.0
        %2151 = vmatpush1.msra.mxu0 0.0
        %2152 = vmatprep.subr.mxu0 0.0
        %2153 = vmatpush1.msra.mxu0 0.0
        %2154 = vmatprep.subr.mxu0 0.0
        %2155 = vmatpush1.msra.mxu0 0.0
        %2156 = vmatprep.subr.mxu0 0.0
        %2157 = vmatpush1.msra.mxu0 0.0
        %2158 = vmatprep.subr.mxu0 0.0
        %2159 = vmatpush1.msra.mxu0 0.0
        %2160 = vmatprep.subr.mxu0 0.0
        %2161 = vmatpush1.msra.mxu0 0.0
        %2162 = vmatprep.subr.mxu0 0.0
        %2163 = vmatpush1.msra.mxu0 0.0
        %2164 = vmatprep.subr.mxu0 0.0
        %2165 = vmatpush1.msra.mxu0 0.0
        %2166 = vmatprep.subr.mxu0 0.0
        %2167 = vmatpush1.msra.mxu0 0.0
        %2168 = vmatprep.subr.mxu0 0.0
        %2169 = vmatpush1.msra.mxu0 0.0
        %2170 = vmatprep.subr.mxu0 0.0
        %2171 = vmatpush1.msra.mxu0 0.0
        %2172 = vmatprep.subr.mxu0 0.0
        %2173 = vmatpush1.msra.mxu0 0.0
        %2174 = vmatprep.subr.mxu0 0.0
        %2175 = vmatpush1.msra.mxu0 0.0
        %2176 = vmatprep.subr.mxu0 0.0
        %2177 = vmatpush1.msra.mxu0 0.0
        %2178 = vmatprep.subr.mxu0 0.0
        %2179 = vmatpush1.msra.mxu0 0.0
        %2180 = vmatprep.subr.mxu0 0.0
        %2181 = vmatpush1.msra.mxu0 0.0
        %2182 = vmatprep.subr.mxu0 0.0
        %2183 = vmatpush1.msra.mxu0 0.0
        %2184 = vmatprep.subr.mxu0 0.0
        %2185 = vmatpush1.msra.mxu0 0.0
        %2186 = vmatprep.subr.mxu0 0.0
        %2187 = vmatpush1.msra.mxu0 0.0
        %2188 = vmatprep.subr.mxu0 0.0
        %2189 = vmatpush1.msra.mxu0 0.0
        %2190 = vmatprep.subr.mxu0 0.0
        %2191 = vmatpush1.msra.mxu0 0.0
        %2192 = vmatprep.subr.mxu0 0.0
        %2193 = vmatpush1.msra.mxu0 0.0
        %2194 = vmatprep.mubr.f32.mxu0 0.0
        %2195 = vmatmul.mubr.f32.gmra.mrb[0].mxu0 %v2128
        %v2196 = vpop.f32.mrb[0].mxu0
        %v2197 = vadd.f32 %v2045, %v2196
        %v2198 = vpop.f32.mrb[0].mxu0
        %2199 = vdwg.mxu0
        %v2200 = vadd.f32 %v2124, %v2197
        %v2201 = vxor.u32 %v2200, 2147483648
        %v2202 = vmul.f32 %v2201, 1.442695
        %v2203 = vpow.pop %v2202
        %v2204 = vadd.f32 %v2203, 1.0
        %v2205 = vrcp.pop %v2204
        %v2206 = vmul.f32 1.0, %v2205
        %2208 = vrot.lane.b32.xlu0 %v2197, 64
        %v2209 = vpop.permute.xlu0 %2208
        %v2211 = vmul.f32 %v2206, %v2209
        %2213 = vrot.lane.b32.xlu0 %v2211, 64
        %v2214 = vpop.permute.xlu0 %2213
        %v2216 = vadd.f32 %v2124, %v2214
        %v2217 = vtanh.pop %v2216
        %v2218 = vsub.f32 1.0, %v2206
        %2220 = vrot.lane.b32.xlu0 %v2217, 96
        %v2221 = vpop.permute.xlu0 %2220
        %v2223 = vmul.f32 %v2218, %v2221
        %2224 = vrot.lane.b32.xlu0 %v2127, 32
        %v2225 = vpop.permute.xlu0 %2224
        %v2227 = vmul.f32 %v2206, %v2225
        %v2228 = vadd.f32 %v2223, %v2227
        %2230 = vrot.lane.b32.xlu0 %v2228, 96
        %v2231 = vpop.permute.xlu0 %2230
        %v2232 = vsel %vm1179, %v2231, 0
        %2234 = vmatprep.subr.mxu0 0.0
        %2235 = vmatpush1.msra.mxu0 %v2040
        %2236 = vmatprep.subr.mxu0 0.0
        %2237 = vmatpush1.msra.mxu0 %v2041
        %2238 = vmatprep.subr.mxu0 0.0
        %2239 = vmatpush1.msra.mxu0 %v2042
        %2240 = vmatprep.subr.mxu0 0.0
        %2241 = vmatpush1.msra.mxu0 %v2043
        %2242 = vmatprep.subr.mxu0 0.0
        %2243 = vmatpush1.msra.mxu0 0.0
        %2244 = vmatprep.subr.mxu0 0.0
        %2245 = vmatpush1.msra.mxu0 0.0
        %2246 = vmatprep.subr.mxu0 0.0
        %2247 = vmatpush1.msra.mxu0 0.0
        %2248 = vmatprep.subr.mxu0 0.0
        %2249 = vmatpush1.msra.mxu0 0.0
        %2250 = vmatprep.subr.mxu0 0.0
        %2251 = vmatpush1.msra.mxu0 0.0
        %2252 = vmatprep.subr.mxu0 0.0
        %2253 = vmatpush1.msra.mxu0 0.0
        %2254 = vmatprep.subr.mxu0 0.0
        %2255 = vmatpush1.msra.mxu0 0.0
        %2256 = vmatprep.subr.mxu0 0.0
        %2257 = vmatpush1.msra.mxu0 0.0
        %2258 = vmatprep.subr.mxu0 0.0
        %2259 = vmatpush1.msra.mxu0 0.0
        %2260 = vmatprep.subr.mxu0 0.0
        %2261 = vmatpush1.msra.mxu0 0.0
        %2262 = vmatprep.subr.mxu0 0.0
        %2263 = vmatpush1.msra.mxu0 0.0
        %2264 = vmatprep.subr.mxu0 0.0
        %2265 = vmatpush1.msra.mxu0 0.0
        %2266 = vmatprep.subr.mxu0 0.0
        %2267 = vmatpush1.msra.mxu0 0.0
        %2268 = vmatprep.subr.mxu0 0.0
        %2269 = vmatpush1.msra.mxu0 0.0
        %2270 = vmatprep.subr.mxu0 0.0
        %2271 = vmatpush1.msra.mxu0 0.0
        %2272 = vmatprep.subr.mxu0 0.0
        %2273 = vmatpush1.msra.mxu0 0.0
        %2274 = vmatprep.subr.mxu0 0.0
        %2275 = vmatpush1.msra.mxu0 0.0
        %2276 = vmatprep.subr.mxu0 0.0
        %2277 = vmatpush1.msra.mxu0 0.0
        %2278 = vmatprep.subr.mxu0 0.0
        %2279 = vmatpush1.msra.mxu0 0.0
        %2280 = vmatprep.subr.mxu0 0.0
        %2281 = vmatpush1.msra.mxu0 0.0
        %2282 = vmatprep.subr.mxu0 0.0
        %2283 = vmatpush1.msra.mxu0 0.0
        %2284 = vmatprep.subr.mxu0 0.0
        %2285 = vmatpush1.msra.mxu0 0.0
        %2286 = vmatprep.subr.mxu0 0.0
        %2287 = vmatpush1.msra.mxu0 0.0
        %2288 = vmatprep.subr.mxu0 0.0
        %2289 = vmatpush1.msra.mxu0 0.0
        %2290 = vmatprep.subr.mxu0 0.0
        %2291 = vmatpush1.msra.mxu0 0.0
        %2292 = vmatprep.subr.mxu0 0.0
        %2293 = vmatpush1.msra.mxu0 0.0
        %2294 = vmatprep.subr.mxu0 0.0
        %2295 = vmatpush1.msra.mxu0 0.0
        %2296 = vmatprep.subr.mxu0 0.0
        %2297 = vmatpush1.msra.mxu0 0.0
        %2298 = vmatprep.mubr.f32.mxu0 0.0
        %2299 = vmatmul.mubr.f32.gmra.mrb[0].mxu0 %v2232
        %v2300 = vpop.f32.mrb[0].mxu0
        %v2301 = vadd.f32 %v2045, %v2300
        %v2302 = vpop.f32.mrb[0].mxu0
        %2303 = vdwg.mxu0
        %v2305 = vrot.slane %v2301, 7
        %v2307 = vadd.f32 %v2124, %v2305
        %v2308 = vxor.u32 %v2307, 2147483648
        %v2309 = vmul.f32 %v2308, 1.442695
        %v2310 = vpow.pop %v2309
        %v2311 = vadd.f32 %v2310, 1.0
        %v2312 = vrcp.pop %v2311
        %v2313 = vmul.f32 1.0, %v2312
        %2314 = vrot.lane.b32.xlu0 %v2305, 64
        %v2315 = vpop.permute.xlu0 %2314
        %v2317 = vmul.f32 %v2313, %v2315
        %2319 = vrot.lane.b32.xlu0 %v2317, 64
        %v2320 = vpop.permute.xlu0 %2319
        %v2322 = vadd.f32 %v2124, %v2320
        %v2323 = vtanh.pop %v2322
        %v2324 = vsub.f32 1.0, %v2313
        %2326 = vrot.lane.b32.xlu0 %v2323, 96
        %v2327 = vpop.permute.xlu0 %2326
        %v2329 = vmul.f32 %v2324, %v2327
        %v2330 = vrot.slane %v2228, 7
        %v2332 = vmul.f32 %v2313, %v2330
        %v2333 = vadd.f32 %v2329, %v2332
        %v2335 = vrot.slane %v2333, 1
        %2336 = vrot.lane.b32.xlu0 %v2335, 96
        %v2337 = vpop.permute.xlu0 %2336
        %v2338 = vsel %vm1179, %v2337, 0
        %2340 = vmatprep.subr.mxu0 0.0
        %2341 = vmatpush1.msra.mxu0 %v2040
        %2342 = vmatprep.subr.mxu0 0.0
        %2343 = vmatpush1.msra.mxu0 %v2041
        %2344 = vmatprep.subr.mxu0 0.0
        %2345 = vmatpush1.msra.mxu0 %v2042
        %2346 = vmatprep.subr.mxu0 0.0
        %2347 = vmatpush1.msra.mxu0 %v2043
        %2348 = vmatprep.subr.mxu0 0.0
        %2349 = vmatpush1.msra.mxu0 0.0
        %2350 = vmatprep.subr.mxu0 0.0
        %2351 = vmatpush1.msra.mxu0 0.0
        %2352 = vmatprep.subr.mxu0 0.0
        %2353 = vmatpush1.msra.mxu0 0.0
        %2354 = vmatprep.subr.mxu0 0.0
        %2355 = vmatpush1.msra.mxu0 0.0
        %2356 = vmatprep.subr.mxu0 0.0
        %2357 = vmatpush1.msra.mxu0 0.0
        %2358 = vmatprep.subr.mxu0 0.0
        %2359 = vmatpush1.msra.mxu0 0.0
        %2360 = vmatprep.subr.mxu0 0.0
        %2361 = vmatpush1.msra.mxu0 0.0
        %2362 = vmatprep.subr.mxu0 0.0
        %2363 = vmatpush1.msra.mxu0 0.0
        %2364 = vmatprep.subr.mxu0 0.0
        %2365 = vmatpush1.msra.mxu0 0.0
        %2366 = vmatprep.subr.mxu0 0.0
        %2367 = vmatpush1.msra.mxu0 0.0
        %2368 = vmatprep.subr.mxu0 0.0
        %2369 = vmatpush1.msra.mxu0 0.0
        %2370 = vmatprep.subr.mxu0 0.0
        %2371 = vmatpush1.msra.mxu0 0.0
        %2372 = vmatprep.subr.mxu0 0.0
        %2373 = vmatpush1.msra.mxu0 0.0
        %2374 = vmatprep.subr.mxu0 0.0
        %2375 = vmatpush1.msra.mxu0 0.0
        %2376 = vmatprep.subr.mxu0 0.0
        %2377 = vmatpush1.msra.mxu0 0.0
        %2378 = vmatprep.subr.mxu0 0.0
        %2379 = vmatpush1.msra.mxu0 0.0
        %2380 = vmatprep.subr.mxu0 0.0
        %2381 = vmatpush1.msra.mxu0 0.0
        %2382 = vmatprep.subr.mxu0 0.0
        %2383 = vmatpush1.msra.mxu0 0.0
        %2384 = vmatprep.subr.mxu0 0.0
        %2385 = vmatpush1.msra.mxu0 0.0
        %2386 = vmatprep.subr.mxu0 0.0
        %2387 = vmatpush1.msra.mxu0 0.0
        %2388 = vmatprep.subr.mxu0 0.0
        %2389 = vmatpush1.msra.mxu0 0.0
        %2390 = vmatprep.subr.mxu0 0.0
        %2391 = vmatpush1.msra.mxu0 0.0
        %2392 = vmatprep.subr.mxu0 0.0
        %2393 = vmatpush1.msra.mxu0 0.0
        %2394 = vmatprep.subr.mxu0 0.0
        %2395 = vmatpush1.msra.mxu0 0.0
        %2396 = vmatprep.subr.mxu0 0.0
        %2397 = vmatpush1.msra.mxu0 0.0
        %2398 = vmatprep.subr.mxu0 0.0
        %2399 = vmatpush1.msra.mxu0 0.0
        %2400 = vmatprep.subr.mxu0 0.0
        %2401 = vmatpush1.msra.mxu0 0.0
        %2402 = vmatprep.subr.mxu0 0.0
        %2403 = vmatpush1.msra.mxu0 0.0
        %2404 = vmatprep.mubr.f32.mxu0 0.0
        %2405 = vmatmul.mubr.f32.gmra.mrb[0].mxu0 %v2338
        %v2406 = vpop.f32.mrb[0].mxu0
        %v2407 = vadd.f32 %v2045, %v2406
        %v2408 = vpop.f32.mrb[0].mxu0
        %2409 = vdwg.mxu0
        %v2411 = vrot.slane %v2407, 6
        %v2413 = vadd.f32 %v2124, %v2411
        %v2414 = vxor.u32 %v2413, 2147483648
        %v2415 = vmul.f32 %v2414, 1.442695
        %v2416 = vpow.pop %v2415
        %v2417 = vadd.f32 %v2416, 1.0
        %v2418 = vrcp.pop %v2417
        %v2419 = vmul.f32 1.0, %v2418
        %2420 = vrot.lane.b32.xlu0 %v2411, 64
        %v2421 = vpop.permute.xlu0 %2420
        %v2423 = vmul.f32 %v2419, %v2421
        %2425 = vrot.lane.b32.xlu0 %v2423, 64
        %v2426 = vpop.permute.xlu0 %2425
        %v2428 = vadd.f32 %v2124, %v2426
        %v2429 = vtanh.pop %v2428
        %v2430 = vsub.f32 1.0, %v2419
        %2432 = vrot.lane.b32.xlu0 %v2429, 96
        %v2433 = vpop.permute.xlu0 %2432
        %v2435 = vmul.f32 %v2430, %v2433
        %v2436 = vrot.slane %v2333, 7
        %v2438 = vmul.f32 %v2419, %v2436
        %v2439 = vadd.f32 %v2435, %v2438
        %v2441 = vrot.slane %v2439, 2
        %2442 = vrot.lane.b32.xlu0 %v2441, 96
        %v2443 = vpop.permute.xlu0 %2442
        %v2444 = vsel %vm1179, %v2443, 0
        %2446 = vmatprep.subr.mxu0 0.0
        %2447 = vmatpush1.msra.mxu0 %v2040
        %2448 = vmatprep.subr.mxu0 0.0
        %2449 = vmatpush1.msra.mxu0 %v2041
        %2450 = vmatprep.subr.mxu0 0.0
        %2451 = vmatpush1.msra.mxu0 %v2042
        %2452 = vmatprep.subr.mxu0 0.0
        %2453 = vmatpush1.msra.mxu0 %v2043
        %2454 = vmatprep.subr.mxu0 0.0
        %2455 = vmatpush1.msra.mxu0 0.0
        %2456 = vmatprep.subr.mxu0 0.0
        %2457 = vmatpush1.msra.mxu0 0.0
        %2458 = vmatprep.subr.mxu0 0.0
        %2459 = vmatpush1.msra.mxu0 0.0
        %2460 = vmatprep.subr.mxu0 0.0
        %2461 = vmatpush1.msra.mxu0 0.0
        %2462 = vmatprep.subr.mxu0 0.0
        %2463 = vmatpush1.msra.mxu0 0.0
        %2464 = vmatprep.subr.mxu0 0.0
        %2465 = vmatpush1.msra.mxu0 0.0
        %2466 = vmatprep.subr.mxu0 0.0
        %2467 = vmatpush1.msra.mxu0 0.0
        %2468 = vmatprep.subr.mxu0 0.0
        %2469 = vmatpush1.msra.mxu0 0.0
        %2470 = vmatprep.subr.mxu0 0.0
        %2471 = vmatpush1.msra.mxu0 0.0
        %2472 = vmatprep.subr.mxu0 0.0
        %2473 = vmatpush1.msra.mxu0 0.0
        %2474 = vmatprep.subr.mxu0 0.0
        %2475 = vmatpush1.msra.mxu0 0.0
        %2476 = vmatprep.subr.mxu0 0.0
        %2477 = vmatpush1.msra.mxu0 0.0
        %2478 = vmatprep.subr.mxu0 0.0
        %2479 = vmatpush1.msra.mxu0 0.0
        %2480 = vmatprep.subr.mxu0 0.0
        %2481 = vmatpush1.msra.mxu0 0.0
        %2482 = vmatprep.subr.mxu0 0.0
        %2483 = vmatpush1.msra.mxu0 0.0
        %2484 = vmatprep.subr.mxu0 0.0
        %2485 = vmatpush1.msra.mxu0 0.0
        %2486 = vmatprep.subr.mxu0 0.0
        %2487 = vmatpush1.msra.mxu0 0.0
        %2488 = vmatprep.subr.mxu0 0.0
        %2489 = vmatpush1.msra.mxu0 0.0
        %2490 = vmatprep.subr.mxu0 0.0
        %2491 = vmatpush1.msra.mxu0 0.0
        %2492 = vmatprep.subr.mxu0 0.0
        %2493 = vmatpush1.msra.mxu0 0.0
        %2494 = vmatprep.subr.mxu0 0.0
        %2495 = vmatpush1.msra.mxu0 0.0
        %2496 = vmatprep.subr.mxu0 0.0
        %2497 = vmatpush1.msra.mxu0 0.0
        %2498 = vmatprep.subr.mxu0 0.0
        %2499 = vmatpush1.msra.mxu0 0.0
        %2500 = vmatprep.subr.mxu0 0.0
        %2501 = vmatpush1.msra.mxu0 0.0
        %2502 = vmatprep.subr.mxu0 0.0
        %2503 = vmatpush1.msra.mxu0 0.0
        %2504 = vmatprep.subr.mxu0 0.0
        %2505 = vmatpush1.msra.mxu0 0.0
        %2506 = vmatprep.subr.mxu0 0.0
        %2507 = vmatpush1.msra.mxu0 0.0
        %2508 = vmatprep.subr.mxu0 0.0
        %2509 = vmatpush1.msra.mxu0 0.0
        %2510 = vmatprep.mubr.f32.mxu0 0.0
        %2511 = vmatmul.mubr.f32.gmra.mrb[0].mxu0 %v2444
        %v2512 = vpop.f32.mrb[0].mxu0
        %v2513 = vadd.f32 %v2045, %v2512
        %v2514 = vpop.f32.mrb[0].mxu0
        %2515 = vdwg.mxu0
        %v2517 = vrot.slane %v2513, 5
        %v2519 = vadd.f32 %v2124, %v2517
        %v2520 = vxor.u32 %v2519, 2147483648
        %v2521 = vmul.f32 %v2520, 1.442695
        %v2522 = vpow.pop %v2521
        %v2523 = vadd.f32 %v2522, 1.0
        %v2524 = vrcp.pop %v2523
        %v2525 = vmul.f32 1.0, %v2524
        %2526 = vrot.lane.b32.xlu0 %v2517, 64
        %v2527 = vpop.permute.xlu0 %2526
        %v2529 = vmul.f32 %v2525, %v2527
        %2531 = vrot.lane.b32.xlu0 %v2529, 64
        %v2532 = vpop.permute.xlu0 %2531
        %v2534 = vadd.f32 %v2124, %v2532
        %v2535 = vtanh.pop %v2534
        %v2536 = vsub.f32 1.0, %v2525
        %2538 = vrot.lane.b32.xlu0 %v2535, 96
        %v2539 = vpop.permute.xlu0 %2538
        %v2541 = vmul.f32 %v2536, %v2539
        %v2542 = vrot.slane %v2439, 7
        %v2544 = vmul.f32 %v2525, %v2542
        %v2545 = vadd.f32 %v2541, %v2544
        %v2547 = vrot.slane %v2545, 3
        %2548 = vrot.lane.b32.xlu0 %v2547, 96
        %v2549 = vpop.permute.xlu0 %2548
        %v2550 = vsel %vm1179, %v2549, 0
        %2552 = vmatprep.subr.mxu0 0.0
        %2553 = vmatpush1.msra.mxu0 %v2040
        %2554 = vmatprep.subr.mxu0 0.0
        %2555 = vmatpush1.msra.mxu0 %v2041
        %2556 = vmatprep.subr.mxu0 0.0
        %2557 = vmatpush1.msra.mxu0 %v2042
        %2558 = vmatprep.subr.mxu0 0.0
        %2559 = vmatpush1.msra.mxu0 %v2043
        %2560 = vmatprep.subr.mxu0 0.0
        %2561 = vmatpush1.msra.mxu0 0.0
        %2562 = vmatprep.subr.mxu0 0.0
        %2563 = vmatpush1.msra.mxu0 0.0
        %2564 = vmatprep.subr.mxu0 0.0
        %2565 = vmatpush1.msra.mxu0 0.0
        %2566 = vmatprep.subr.mxu0 0.0
        %2567 = vmatpush1.msra.mxu0 0.0
        %2568 = vmatprep.subr.mxu0 0.0
        %2569 = vmatpush1.msra.mxu0 0.0
        %2570 = vmatprep.subr.mxu0 0.0
        %2571 = vmatpush1.msra.mxu0 0.0
        %2572 = vmatprep.subr.mxu0 0.0
        %2573 = vmatpush1.msra.mxu0 0.0
        %2574 = vmatprep.subr.mxu0 0.0
        %2575 = vmatpush1.msra.mxu0 0.0
        %2576 = vmatprep.subr.mxu0 0.0
        %2577 = vmatpush1.msra.mxu0 0.0
        %2578 = vmatprep.subr.mxu0 0.0
        %2579 = vmatpush1.msra.mxu0 0.0
        %2580 = vmatprep.subr.mxu0 0.0
        %2581 = vmatpush1.msra.mxu0 0.0
        %2582 = vmatprep.subr.mxu0 0.0
        %2583 = vmatpush1.msra.mxu0 0.0
        %2584 = vmatprep.subr.mxu0 0.0
        %2585 = vmatpush1.msra.mxu0 0.0
        %2586 = vmatprep.subr.mxu0 0.0
        %2587 = vmatpush1.msra.mxu0 0.0
        %2588 = vmatprep.subr.mxu0 0.0
        %2589 = vmatpush1.msra.mxu0 0.0
        %2590 = vmatprep.subr.mxu0 0.0
        %2591 = vmatpush1.msra.mxu0 0.0
        %2592 = vmatprep.subr.mxu0 0.0
        %2593 = vmatpush1.msra.mxu0 0.0
        %2594 = vmatprep.subr.mxu0 0.0
        %2595 = vmatpush1.msra.mxu0 0.0
        %2596 = vmatprep.subr.mxu0 0.0
        %2597 = vmatpush1.msra.mxu0 0.0
        %2598 = vmatprep.subr.mxu0 0.0
        %2599 = vmatpush1.msra.mxu0 0.0
        %2600 = vmatprep.subr.mxu0 0.0
        %2601 = vmatpush1.msra.mxu0 0.0
        %2602 = vmatprep.subr.mxu0 0.0
        %2603 = vmatpush1.msra.mxu0 0.0
        %2604 = vmatprep.subr.mxu0 0.0
        %2605 = vmatpush1.msra.mxu0 0.0
        %2606 = vmatprep.subr.mxu0 0.0
        %2607 = vmatpush1.msra.mxu0 0.0
        %2608 = vmatprep.subr.mxu0 0.0
        %2609 = vmatpush1.msra.mxu0 0.0
        %2610 = vmatprep.subr.mxu0 0.0
        %2611 = vmatpush1.msra.mxu0 0.0
        %2612 = vmatprep.subr.mxu0 0.0
        %2613 = vmatpush1.msra.mxu0 0.0
        %2614 = vmatprep.subr.mxu0 0.0
        %2615 = vmatpush1.msra.mxu0 0.0
        %2616 = vmatprep.mubr.f32.mxu0 0.0
        %2617 = vmatmul.mubr.f32.gmra.mrb[0].mxu0 %v2550
        %v2618 = vpop.f32.mrb[0].mxu0
        %v2619 = vadd.f32 %v2045, %v2618
        %v2620 = vpop.f32.mrb[0].mxu0
        %2621 = vdwg.mxu0
        %v2623 = vrot.slane %v2619, 4
        %v2625 = vadd.f32 %v2124, %v2623
        %v2626 = vxor.u32 %v2625, 2147483648
        %v2627 = vmul.f32 %v2626, 1.442695
        %v2628 = vpow.pop %v2627
        %v2629 = vadd.f32 %v2628, 1.0
        %v2630 = vrcp.pop %v2629
        %v2631 = vmul.f32 1.0, %v2630
        %2632 = vrot.lane.b32.xlu0 %v2623, 64
        %v2633 = vpop.permute.xlu0 %2632
        %v2635 = vmul.f32 %v2631, %v2633
        %2637 = vrot.lane.b32.xlu0 %v2635, 64
        %v2638 = vpop.permute.xlu0 %2637
        %v2640 = vadd.f32 %v2124, %v2638
        %v2641 = vtanh.pop %v2640
        %v2642 = vsub.f32 1.0, %v2631
        %2644 = vrot.lane.b32.xlu0 %v2641, 96
        %v2645 = vpop.permute.xlu0 %2644
        %v2647 = vmul.f32 %v2642, %v2645
        %v2648 = vrot.slane %v2545, 7
        %v2650 = vmul.f32 %v2631, %v2648
        %v2651 = vadd.f32 %v2647, %v2650
        %v2653 = vrot.slane %v2651, 4
        %2654 = vrot.lane.b32.xlu0 %v2653, 96
        %v2655 = vpop.permute.xlu0 %2654
        %v2656 = vsel %vm1179, %v2655, 0
        %2658 = vmatprep.subr.mxu0 0.0
        %2659 = vmatpush1.msra.mxu0 %v2040
        %2660 = vmatprep.subr.mxu0 0.0
        %2661 = vmatpush1.msra.mxu0 %v2041
        %2662 = vmatprep.subr.mxu0 0.0
        %2663 = vmatpush1.msra.mxu0 %v2042
        %2664 = vmatprep.subr.mxu0 0.0
        %2665 = vmatpush1.msra.mxu0 %v2043
        %2666 = vmatprep.subr.mxu0 0.0
        %2667 = vmatpush1.msra.mxu0 0.0
        %2668 = vmatprep.subr.mxu0 0.0
        %2669 = vmatpush1.msra.mxu0 0.0
        %2670 = vmatprep.subr.mxu0 0.0
        %2671 = vmatpush1.msra.mxu0 0.0
        %2672 = vmatprep.subr.mxu0 0.0
        %2673 = vmatpush1.msra.mxu0 0.0
        %2674 = vmatprep.subr.mxu0 0.0
        %2675 = vmatpush1.msra.mxu0 0.0
        %2676 = vmatprep.subr.mxu0 0.0
        %2677 = vmatpush1.msra.mxu0 0.0
        %2678 = vmatprep.subr.mxu0 0.0
        %2679 = vmatpush1.msra.mxu0 0.0
        %2680 = vmatprep.subr.mxu0 0.0
        %2681 = vmatpush1.msra.mxu0 0.0
        %2682 = vmatprep.subr.mxu0 0.0
        %2683 = vmatpush1.msra.mxu0 0.0
        %2684 = vmatprep.subr.mxu0 0.0
        %2685 = vmatpush1.msra.mxu0 0.0
        %2686 = vmatprep.subr.mxu0 0.0
        %2687 = vmatpush1.msra.mxu0 0.0
        %2688 = vmatprep.subr.mxu0 0.0
        %2689 = vmatpush1.msra.mxu0 0.0
        %2690 = vmatprep.subr.mxu0 0.0
        %2691 = vmatpush1.msra.mxu0 0.0
        %2692 = vmatprep.subr.mxu0 0.0
        %2693 = vmatpush1.msra.mxu0 0.0
        %2694 = vmatprep.subr.mxu0 0.0
        %2695 = vmatpush1.msra.mxu0 0.0
        %2696 = vmatprep.subr.mxu0 0.0
        %2697 = vmatpush1.msra.mxu0 0.0
        %2698 = vmatprep.subr.mxu0 0.0
        %2699 = vmatpush1.msra.mxu0 0.0
        %2700 = vmatprep.subr.mxu0 0.0
        %2701 = vmatpush1.msra.mxu0 0.0
        %2702 = vmatprep.subr.mxu0 0.0
        %2703 = vmatpush1.msra.mxu0 0.0
        %2704 = vmatprep.subr.mxu0 0.0
        %2705 = vmatpush1.msra.mxu0 0.0
        %2706 = vmatprep.subr.mxu0 0.0
        %2707 = vmatpush1.msra.mxu0 0.0
        %2708 = vmatprep.subr.mxu0 0.0
        %2709 = vmatpush1.msra.mxu0 0.0
        %2710 = vmatprep.subr.mxu0 0.0
        %2711 = vmatpush1.msra.mxu0 0.0
        %2712 = vmatprep.subr.mxu0 0.0
        %2713 = vmatpush1.msra.mxu0 0.0
        %2714 = vmatprep.subr.mxu0 0.0
        %2715 = vmatpush1.msra.mxu0 0.0
        %2716 = vmatprep.subr.mxu0 0.0
        %2717 = vmatpush1.msra.mxu0 0.0
        %2718 = vmatprep.subr.mxu0 0.0
        %2719 = vmatpush1.msra.mxu0 0.0
        %2720 = vmatprep.subr.mxu0 0.0
        %2721 = vmatpush1.msra.mxu0 0.0
        %2722 = vmatprep.mubr.f32.mxu0 0.0
        %2723 = vmatmul.mubr.f32.gmra.mrb[0].mxu0 %v2656
        %v2724 = vpop.f32.mrb[0].mxu0
        %v2725 = vadd.f32 %v2045, %v2724
        %v2726 = vpop.f32.mrb[0].mxu0
        %2727 = vdwg.mxu0
        %v2729 = vrot.slane %v2725, 3
        %v2731 = vadd.f32 %v2124, %v2729
        %v2732 = vxor.u32 %v2731, 2147483648
        %v2733 = vmul.f32 %v2732, 1.442695
        %v2734 = vpow.pop %v2733
        %v2735 = vadd.f32 %v2734, 1.0
        %v2736 = vrcp.pop %v2735
        %v2737 = vmul.f32 1.0, %v2736
        %2738 = vrot.lane.b32.xlu0 %v2729, 64
        %v2739 = vpop.permute.xlu0 %2738
        %v2741 = vmul.f32 %v2737, %v2739
        %2743 = vrot.lane.b32.xlu0 %v2741, 64
        %v2744 = vpop.permute.xlu0 %2743
        %v2746 = vadd.f32 %v2124, %v2744
        %v2747 = vtanh.pop %v2746
        %v2748 = vsub.f32 1.0, %v2737
        %2750 = vrot.lane.b32.xlu0 %v2747, 96
        %v2751 = vpop.permute.xlu0 %2750
        %v2753 = vmul.f32 %v2748, %v2751
        %v2754 = vrot.slane %v2651, 7
        %v2756 = vmul.f32 %v2737, %v2754
        %v2757 = vadd.f32 %v2753, %v2756
        %v2759 = vrot.slane %v2757, 5
        %2760 = vrot.lane.b32.xlu0 %v2759, 96
        %v2761 = vpop.permute.xlu0 %2760
        %v2762 = vsel %vm1179, %v2761, 0
        %2764 = vmatprep.subr.mxu0 0.0
        %2765 = vmatpush1.msra.mxu0 %v2040
        %2766 = vmatprep.subr.mxu0 0.0
        %2767 = vmatpush1.msra.mxu0 %v2041
        %2768 = vmatprep.subr.mxu0 0.0
        %2769 = vmatpush1.msra.mxu0 %v2042
        %2770 = vmatprep.subr.mxu0 0.0
        %2771 = vmatpush1.msra.mxu0 %v2043
        %2772 = vmatprep.subr.mxu0 0.0
        %2773 = vmatpush1.msra.mxu0 0.0
        %2774 = vmatprep.subr.mxu0 0.0
        %2775 = vmatpush1.msra.mxu0 0.0
        %2776 = vmatprep.subr.mxu0 0.0
        %2777 = vmatpush1.msra.mxu0 0.0
        %2778 = vmatprep.subr.mxu0 0.0
        %2779 = vmatpush1.msra.mxu0 0.0
        %2780 = vmatprep.subr.mxu0 0.0
        %2781 = vmatpush1.msra.mxu0 0.0
        %2782 = vmatprep.subr.mxu0 0.0
        %2783 = vmatpush1.msra.mxu0 0.0
        %2784 = vmatprep.subr.mxu0 0.0
        %2785 = vmatpush1.msra.mxu0 0.0
        %2786 = vmatprep.subr.mxu0 0.0
        %2787 = vmatpush1.msra.mxu0 0.0
        %2788 = vmatprep.subr.mxu0 0.0
        %2789 = vmatpush1.msra.mxu0 0.0
        %2790 = vmatprep.subr.mxu0 0.0
        %2791 = vmatpush1.msra.mxu0 0.0
        %2792 = vmatprep.subr.mxu0 0.0
        %2793 = vmatpush1.msra.mxu0 0.0
        %2794 = vmatprep.subr.mxu0 0.0
        %2795 = vmatpush1.msra.mxu0 0.0
        %2796 = vmatprep.subr.mxu0 0.0
        %2797 = vmatpush1.msra.mxu0 0.0
        %2798 = vmatprep.subr.mxu0 0.0
        %2799 = vmatpush1.msra.mxu0 0.0
        %2800 = vmatprep.subr.mxu0 0.0
        %2801 = vmatpush1.msra.mxu0 0.0
        %2802 = vmatprep.subr.mxu0 0.0
        %2803 = vmatpush1.msra.mxu0 0.0
        %2804 = vmatprep.subr.mxu0 0.0
        %2805 = vmatpush1.msra.mxu0 0.0
        %2806 = vmatprep.subr.mxu0 0.0
        %2807 = vmatpush1.msra.mxu0 0.0
        %2808 = vmatprep.subr.mxu0 0.0
        %2809 = vmatpush1.msra.mxu0 0.0
        %2810 = vmatprep.subr.mxu0 0.0
        %2811 = vmatpush1.msra.mxu0 0.0
        %2812 = vmatprep.subr.mxu0 0.0
        %2813 = vmatpush1.msra.mxu0 0.0
        %2814 = vmatprep.subr.mxu0 0.0
        %2815 = vmatpush1.msra.mxu0 0.0
        %2816 = vmatprep.subr.mxu0 0.0
        %2817 = vmatpush1.msra.mxu0 0.0
        %2818 = vmatprep.subr.mxu0 0.0
        %2819 = vmatpush1.msra.mxu0 0.0
        %2820 = vmatprep.subr.mxu0 0.0
        %2821 = vmatpush1.msra.mxu0 0.0
        %2822 = vmatprep.subr.mxu0 0.0
        %2823 = vmatpush1.msra.mxu0 0.0
        %2824 = vmatprep.subr.mxu0 0.0
        %2825 = vmatpush1.msra.mxu0 0.0
        %2826 = vmatprep.subr.mxu0 0.0
        %2827 = vmatpush1.msra.mxu0 0.0
        %2828 = vmatprep.mubr.f32.mxu0 0.0
        %2829 = vmatmul.mubr.f32.gmra.mrb[0].mxu0 %v2762
        %v2830 = vpop.f32.mrb[0].mxu0
        %v2831 = vadd.f32 %v2045, %v2830
        %v2832 = vpop.f32.mrb[0].mxu0
        %2833 = vdwg.mxu0
        %v2835 = vrot.slane %v2831, 2
        %v2837 = vadd.f32 %v2124, %v2835
        %v2838 = vxor.u32 %v2837, 2147483648
        %v2839 = vmul.f32 %v2838, 1.442695
        %v2840 = vpow.pop %v2839
        %v2841 = vadd.f32 %v2840, 1.0
        %v2842 = vrcp.pop %v2841
        %v2843 = vmul.f32 1.0, %v2842
        %2844 = vrot.lane.b32.xlu0 %v2835, 64
        %v2845 = vpop.permute.xlu0 %2844
        %v2847 = vmul.f32 %v2843, %v2845
        %2849 = vrot.lane.b32.xlu0 %v2847, 64
        %v2850 = vpop.permute.xlu0 %2849
        %v2852 = vadd.f32 %v2124, %v2850
        %v2853 = vtanh.pop %v2852
        %v2854 = vsub.f32 1.0, %v2843
        %2856 = vrot.lane.b32.xlu0 %v2853, 96
        %v2857 = vpop.permute.xlu0 %2856
        %v2859 = vmul.f32 %v2854, %v2857
        %v2860 = vrot.slane %v2757, 7
        %v2862 = vmul.f32 %v2843, %v2860
        %v2863 = vadd.f32 %v2859, %v2862
        %v2865 = vrot.slane %v2863, 6
        %2866 = vrot.lane.b32.xlu0 %v2865, 96
        %v2867 = vpop.permute.xlu0 %2866
        %v2868 = vsel %vm1179, %v2867, 0
        %2870 = vmatprep.subr.mxu0 0.0
        %2871 = vmatpush1.msra.mxu0 %v2040
        %2872 = vmatprep.subr.mxu0 0.0
        %2873 = vmatpush1.msra.mxu0 %v2041
        %2874 = vmatprep.subr.mxu0 0.0
        %2875 = vmatpush1.msra.mxu0 %v2042
        %2876 = vmatprep.subr.mxu0 0.0
        %2877 = vmatpush1.msra.mxu0 %v2043
        %2878 = vmatprep.subr.mxu0 0.0
        %2879 = vmatpush1.msra.mxu0 0.0
        %2880 = vmatprep.subr.mxu0 0.0
        %2881 = vmatpush1.msra.mxu0 0.0
        %2882 = vmatprep.subr.mxu0 0.0
        %2883 = vmatpush1.msra.mxu0 0.0
        %2884 = vmatprep.subr.mxu0 0.0
        %2885 = vmatpush1.msra.mxu0 0.0
        %2886 = vmatprep.subr.mxu0 0.0
        %2887 = vmatpush1.msra.mxu0 0.0
        %2888 = vmatprep.subr.mxu0 0.0
        %2889 = vmatpush1.msra.mxu0 0.0
        %2890 = vmatprep.subr.mxu0 0.0
        %2891 = vmatpush1.msra.mxu0 0.0
        %2892 = vmatprep.subr.mxu0 0.0
        %2893 = vmatpush1.msra.mxu0 0.0
        %2894 = vmatprep.subr.mxu0 0.0
        %2895 = vmatpush1.msra.mxu0 0.0
        %2896 = vmatprep.subr.mxu0 0.0
        %2897 = vmatpush1.msra.mxu0 0.0
        %2898 = vmatprep.subr.mxu0 0.0
        %2899 = vmatpush1.msra.mxu0 0.0
        %2900 = vmatprep.subr.mxu0 0.0
        %2901 = vmatpush1.msra.mxu0 0.0
        %2902 = vmatprep.subr.mxu0 0.0
        %2903 = vmatpush1.msra.mxu0 0.0
        %2904 = vmatprep.subr.mxu0 0.0
        %2905 = vmatpush1.msra.mxu0 0.0
        %2906 = vmatprep.subr.mxu0 0.0
        %2907 = vmatpush1.msra.mxu0 0.0
        %2908 = vmatprep.subr.mxu0 0.0
        %2909 = vmatpush1.msra.mxu0 0.0
        %2910 = vmatprep.subr.mxu0 0.0
        %2911 = vmatpush1.msra.mxu0 0.0
        %2912 = vmatprep.subr.mxu0 0.0
        %2913 = vmatpush1.msra.mxu0 0.0
        %2914 = vmatprep.subr.mxu0 0.0
        %2915 = vmatpush1.msra.mxu0 0.0
        %2916 = vmatprep.subr.mxu0 0.0
        %2917 = vmatpush1.msra.mxu0 0.0
        %2918 = vmatprep.subr.mxu0 0.0
        %2919 = vmatpush1.msra.mxu0 0.0
        %2920 = vmatprep.subr.mxu0 0.0
        %2921 = vmatpush1.msra.mxu0 0.0
        %2922 = vmatprep.subr.mxu0 0.0
        %2923 = vmatpush1.msra.mxu0 0.0
        %2924 = vmatprep.subr.mxu0 0.0
        %2925 = vmatpush1.msra.mxu0 0.0
        %2926 = vmatprep.subr.mxu0 0.0
        %2927 = vmatpush1.msra.mxu0 0.0
        %2928 = vmatprep.subr.mxu0 0.0
        %2929 = vmatpush1.msra.mxu0 0.0
        %2930 = vmatprep.subr.mxu0 0.0
        %2931 = vmatpush1.msra.mxu0 0.0
        %2932 = vmatprep.subr.mxu0 0.0
        %2933 = vmatpush1.msra.mxu0 0.0
        %2934 = vmatprep.mubr.f32.mxu0 0.0
        %2935 = vmatmul.mubr.f32.gmra.mrb[0].mxu0 %v2868
        %v2936 = vpop.f32.mrb[0].mxu0
        %v2937 = vadd.f32 %v2045, %v2936
        %v2938 = vpop.f32.mrb[0].mxu0
        %2939 = vdwg.mxu0
        %v2941 = vrot.slane %v2937, 1
        %v2943 = vadd.f32 %v2124, %v2941
        %v2944 = vxor.u32 %v2943, 2147483648
        %v2945 = vmul.f32 %v2944, 1.442695
        %v2946 = vpow.pop %v2945
        %v2947 = vadd.f32 %v2946, 1.0
        %v2948 = vrcp.pop %v2947
        %v2949 = vmul.f32 1.0, %v2948
        %2950 = vrot.lane.b32.xlu0 %v2941, 64
        %v2951 = vpop.permute.xlu0 %2950
        %v2953 = vmul.f32 %v2949, %v2951
        %2955 = vrot.lane.b32.xlu0 %v2953, 64
        %v2956 = vpop.permute.xlu0 %2955
        %v2958 = vadd.f32 %v2124, %v2956
        %v2959 = vtanh.pop %v2958
        %v2960 = vsub.f32 1.0, %v2949
        %2962 = vrot.lane.b32.xlu0 %v2959, 96
        %v2963 = vpop.permute.xlu0 %2962
        %v2965 = vmul.f32 %v2960, %v2963
        %v2966 = vrot.slane %v2863, 7
        %v2968 = vmul.f32 %v2949, %v2966
        %v2969 = vadd.f32 %v2965, %v2968
        %v2970 = vsel %vm2023, %v2228, %v2333
        %v2971 = vsel %vm2025, %v2970, %v2439
        %v2972 = vsel %vm2027, %v2971, %v2545
        %v2973 = vsel %vm704, %v2972, %v2651
        %v2974 = vsel %vm2030, %v2973, %v2757
        %v2975 = vsel %vm2032, %v2974, %v2863
        %v2976 = vsel %vm2034, %v2975, %v2969
        %v2978 = vrot.slane %v2022, 7
        %v2981 = vrot.slane %v2969, 6
        %v2983 = vsel %vm2023, %v2978, %v2981
        %2985 = vrot.lane.b32.xlu0 %v2983, 96
        %v2986 = vpop.permute.xlu0 %2985
        %vm2988 = vcmask 254976
        %2989 = vst.msk [vmem:[%s692] sm:$0x3] %vm2988, %v2986
        %v2990 = vld [vmem:[%s16] sm:$0xff]
        %v2991 = vld [vmem:[%s16 + $0x8] sm:$0xff]
        %v2992 = vld [vmem:[%s16 + $0x10] sm:$0xff]
        %v2993 = vld [vmem:[%s16 + $0x18] sm:$0xff]
        %v2994 = vld [vmem:[%s17] sm:$0x1]
        %v2996 = vlaneseq
        %v2997 = vshrl.u32 %v2996, 7
        %v2998 = vsub.s32 0, %v2997
        %v2999 = vrot.slane %v2994, %v2998
        %3002 = vrot.lane.b32.xlu0 %v2976, 96
        %v3003 = vpop.permute.xlu0 %3002
        %v3004 = vsel %vm1179, %v3003, 0
        %3006 = vmatprep.subr.mxu0 0.0
        %3007 = vmatpush1.msra.mxu0 %v2990
        %3008 = vmatprep.subr.mxu0 0.0
        %3009 = vmatpush1.msra.mxu0 %v2991
        %3010 = vmatprep.subr.mxu0 0.0
        %3011 = vmatpush1.msra.mxu0 %v2992
        %3012 = vmatprep.subr.mxu0 0.0
        %3013 = vmatpush1.msra.mxu0 %v2993
        %3014 = vmatprep.subr.mxu0 0.0
        %3015 = vmatpush1.msra.mxu0 0.0
        %3016 = vmatprep.subr.mxu0 0.0
        %3017 = vmatpush1.msra.mxu0 0.0
        %3018 = vmatprep.subr.mxu0 0.0
        %3019 = vmatpush1.msra.mxu0 0.0
        %3020 = vmatprep.subr.mxu0 0.0
        %3021 = vmatpush1.msra.mxu0 0.0
        %3022 = vmatprep.subr.mxu0 0.0
        %3023 = vmatpush1.msra.mxu0 0.0
        %3024 = vmatprep.subr.mxu0 0.0
        %3025 = vmatpush1.msra.mxu0 0.0
        %3026 = vmatprep.subr.mxu0 0.0
        %3027 = vmatpush1.msra.mxu0 0.0
        %3028 = vmatprep.subr.mxu0 0.0
        %3029 = vmatpush1.msra.mxu0 0.0
        %3030 = vmatprep.subr.mxu0 0.0
        %3031 = vmatpush1.msra.mxu0 0.0
        %3032 = vmatprep.subr.mxu0 0.0
        %3033 = vmatpush1.msra.mxu0 0.0
        %3034 = vmatprep.subr.mxu0 0.0
        %3035 = vmatpush1.msra.mxu0 0.0
        %3036 = vmatprep.subr.mxu0 0.0
        %3037 = vmatpush1.msra.mxu0 0.0
        %3038 = vmatprep.subr.mxu0 0.0
        %3039 = vmatpush1.msra.mxu0 0.0
        %3040 = vmatprep.subr.mxu0 0.0
        %3041 = vmatpush1.msra.mxu0 0.0
        %3042 = vmatprep.subr.mxu0 0.0
        %3043 = vmatpush1.msra.mxu0 0.0
        %3044 = vmatprep.subr.mxu0 0.0
        %3045 = vmatpush1.msra.mxu0 0.0
        %3046 = vmatprep.subr.mxu0 0.0
        %3047 = vmatpush1.msra.mxu0 0.0
        %3048 = vmatprep.subr.mxu0 0.0
        %3049 = vmatpush1.msra.mxu0 0.0
        %3050 = vmatprep.subr.mxu0 0.0
        %3051 = vmatpush1.msra.mxu0 0.0
        %3052 = vmatprep.subr.mxu0 0.0
        %3053 = vmatpush1.msra.mxu0 0.0
        %3054 = vmatprep.subr.mxu0 0.0
        %3055 = vmatpush1.msra.mxu0 0.0
        %3056 = vmatprep.subr.mxu0 0.0
        %3057 = vmatpush1.msra.mxu0 0.0
        %3058 = vmatprep.subr.mxu0 0.0
        %3059 = vmatpush1.msra.mxu0 0.0
        %3060 = vmatprep.subr.mxu0 0.0
        %3061 = vmatpush1.msra.mxu0 0.0
        %3062 = vmatprep.subr.mxu0 0.0
        %3063 = vmatpush1.msra.mxu0 0.0
        %3064 = vmatprep.subr.mxu0 0.0
        %3065 = vmatpush1.msra.mxu0 0.0
        %3066 = vmatprep.subr.mxu0 0.0
        %3067 = vmatpush1.msra.mxu0 0.0
        %3068 = vmatprep.subr.mxu0 0.0
        %3069 = vmatpush1.msra.mxu0 0.0
        %3070 = vmatprep.mubr.f32.mxu0 0.0
        %3071 = vmatmul.mubr.f32.gmra.mrb[0].mxu0 %v3004
        %v3072 = vpop.f32.mrb[0].mxu0
        %v3073 = vadd.f32 %v2999, %v3072
        %v3074 = vpop.f32.mrb[0].mxu0
        %3075 = vdwg.mxu0
        %vm3076 = vcmp.gt.f32.partialorder %v3073, 88.0
        %v3077 = vsel %vm3076, 88.0, %v3073
        %v3078 = vxor.u32 %v3073, 2147483648
        %v3079 = vmul.f32 %v3078, 1.442695
        %v3080 = vpow.pop %v3079
        %v3081 = vadd.f32 %v3080, 1.0
        %v3082 = vrcp.pop %v3081
        %v3083 = vmul.f32 1.0, %v3082
        %v3084 = vsel %vm700, %v3077, -inf
        %3085 = vmax.xlane.f32.xlu0 %v3084
        %v3086 = vpop.xlane.xlu0 %3085
        %v3087 = vsub.f32 %v3077, %v3086
        %v3088 = vmul.f32 %v3087, 1.442695
        %v3089 = vpow.pop %v3088
        %v3090 = vsel %vm700, %v3089, 0.0
        %3091 = vadd.xlane.f32.xlu0 %v3090
        %v3092 = vpop.xlane.xlu0 %3091
        %v3093 = vrcp.pop %v3092
        %v3094 = vmul.f32 %v3089, %v3093
        %3096 = vrot.lane.b32.xlu0 %v3083, 124
        %v3097 = vpop.permute.xlu0 %3096
        %3099 = vxpose.xlu0.b32.start [1/16] %v3097, 128
        %3100 = vxpose.xlu0.b32.cont [2/16] 0.0, 128
        %3101 = vxpose.xlu0.b32.cont [3/16] 0.0, 128
        %3102 = vxpose.xlu0.b32.cont [4/16] 0.0, 128
        %3103 = vxpose.xlu0.b32.cont [5/16] 0.0, 128
        %3104 = vxpose.xlu0.b32.cont [6/16] 0.0, 128
        %3105 = vxpose.xlu0.b32.cont [7/16] 0.0, 128
        %3106 = vxpose.xlu0.b32.cont [8/16] 0.0, 128
        %3107 = vxpose.xlu0.b32.cont [9/16] 0.0, 128
        %3108 = vxpose.xlu0.b32.cont [10/16] 0.0, 128
        %3109 = vxpose.xlu0.b32.cont [11/16] 0.0, 128
        %3110 = vxpose.xlu0.b32.cont [12/16] 0.0, 128
        %3111 = vxpose.xlu0.b32.cont [13/16] 0.0, 128
        %3112 = vxpose.xlu0.b32.cont [14/16] 0.0, 128
        %3113 = vxpose.xlu0.b32.cont [15/16] 0.0, 128
        %3114 = vxpose.xlu0.b32.end [16/16] 0.0, 128
        %v3115 = vpop.trf.xlu0
        %v3116 = vpop.trf.xlu0
        %v3117 = vpop.trf.xlu0
        %v3118 = vpop.trf.xlu0
        %v3119 = vpop.trf.xlu0
        %v3120 = vpop.trf.xlu0
        %v3121 = vpop.trf.xlu0
        %v3122 = vpop.trf.xlu0
        %v3123 = vpop.trf.xlu0
        %v3124 = vpop.trf.xlu0
        %v3125 = vpop.trf.xlu0
        %v3126 = vpop.trf.xlu0
        %v3127 = vpop.trf.xlu0
        %v3128 = vpop.trf.xlu0
        %v3129 = vpop.trf.xlu0
        %v3130 = vpop.trf.xlu0
        %3131 = vxpose.xlu0.b32.start [1/16] %v3094, 128
        %3132 = vxpose.xlu0.b32.cont [2/16] 0.0, 128
        %3133 = vxpose.xlu0.b32.cont [3/16] 0.0, 128
        %3134 = vxpose.xlu0.b32.cont [4/16] 0.0, 128
        %3135 = vxpose.xlu0.b32.cont [5/16] 0.0, 128
        %3136 = vxpose.xlu0.b32.cont [6/16] 0.0, 128
        %3137 = vxpose.xlu0.b32.cont [7/16] 0.0, 128
        %3138 = vxpose.xlu0.b32.cont [8/16] 0.0, 128
        %3139 = vxpose.xlu0.b32.cont [9/16] 0.0, 128
        %3140 = vxpose.xlu0.b32.cont [10/16] 0.0, 128
        %3141 = vxpose.xlu0.b32.cont [11/16] 0.0, 128
        %3142 = vxpose.xlu0.b32.cont [12/16] 0.0, 128
        %3143 = vxpose.xlu0.b32.cont [13/16] 0.0, 128
        %3144 = vxpose.xlu0.b32.cont [14/16] 0.0, 128
        %3145 = vxpose.xlu0.b32.cont [15/16] 0.0, 128
        %3146 = vxpose.xlu0.b32.end [16/16] 0.0, 128
        %v3147 = vpop.trf.xlu0
        %v3148 = vpop.trf.xlu0
        %v3149 = vpop.trf.xlu0
        %v3150 = vpop.trf.xlu0
        %v3151 = vpop.trf.xlu0
        %v3152 = vpop.trf.xlu0
        %v3153 = vpop.trf.xlu0
        %v3154 = vpop.trf.xlu0
        %v3155 = vpop.trf.xlu0
        %v3156 = vpop.trf.xlu0
        %v3157 = vpop.trf.xlu0
        %v3158 = vpop.trf.xlu0
        %v3159 = vpop.trf.xlu0
        %v3160 = vpop.trf.xlu0
        %v3161 = vpop.trf.xlu0
        %v3162 = vpop.trf.xlu0
        %v3163 = vsub.f32 1.0, %v3115
        %v3164 = vlaneseq
        %v3165 = vshrl.u32 %v3164, 7
        %v3166 = vsub.s32 0, %v3165
        %v3167 = vrot.slane %v3163, %v3166
        %v3168 = vmul.f32 %v3147, %v3167
        %v3169 = vlaneseq
        %v3170 = vshrl.u32 %v3169, 7
        %v3171 = vsub.s32 0, %v3170
        %v3172 = vrot.slane %v3115, %v3171
        %v3173 = vmul.f32 %v693, %v3172
        %v3174 = vadd.f32 %v3168, %v3173
        %vm3175 = vcmask 60416
        %3176 = vst.msk [vmem:[%s668] sm:$0xf] %vm3175, %v3174
        %s3177 = sand.u32 %s450, 1
        %s3178 = scalar_lea.sflag [#allocation5], %s3177
        %s3179 = sand.u32 %s450, 1
        %s3180 = smul.addr %s3179, 4
        %s3181 = scalar_lea.vmem [#allocation6], %s3180
        %p3182 = scmp.lt.s32.totalorder %s39, 1
        %s3183 = scalar_select %p3182, %s39, 1
        %s3184 = smul.addr %s3183, 2
        %s3185 = scalar_lea.vmem %s19, %s3184
        // Predicated region
        $region97: #{chemp_forward.1} parent=91 // pred_check
          %p3186 = pneg %p460
        $region98: #{chemp_forward.1} parent=91 // pred_check_branch
          %3188 = sbr.rel (%p3186) target = $region100
        $region99: #{chemp_forward.1} parent=91 // pred_region
          %s3190 = ssub.s32 64, 64
          %3191 = vsyncadd %s3178, %s3190
          %s3192 = smul.addr %s39, 64
          %s3193 = scalar_lea.hbm %s18, %s3192
          %s3195 = sshll.u32 %s3181, 4
          %s3196 = int_to_ptr.vmem [resolvable:$true] %s3195
          %3198 = dma.vmem_to_hbm [thread:$0]  %s3196, 64, %s3193, %s3178
        $region100: #{chemp_forward.1} parent=91 // pred_fallthru
          _
        // Predicated region
        $region101: #{chemp_forward.1} parent=91 // pred_check
          %p3199 = pneg %p486
        $region102: #{chemp_forward.1} parent=91 // pred_check_branch
          %3201 = sbr.rel (%p3199) target = $region104
        $region103: #{chemp_forward.1} parent=91 // pred_region
          _
        $region104: #{chemp_forward.1} parent=91 // pred_fallthru
          _
      $region92: #{chemp_forward.1} parent=5 // pred_fallthru
        _
      %p3202 = scmp.le.s32.totalorder 2, %s34
      // Predicated region
      $region105: #{chemp_forward.1} parent=5 // pred_check
        %p3203 = pneg %p3202
      $region106: #{chemp_forward.1} parent=5 // pred_check_branch
        %3205 = sbr.rel (%p3203) target = $region108
      $region107: #{chemp_forward.1} parent=5 // pred_region
        %s3206 = ssub.s32 %s34, 2
        // Predicated region
        $region109: #{chemp_forward.1} parent=107 // pred_check
          %p3207 = pneg %p466
        $region110: #{chemp_forward.1} parent=107 // pred_check_branch
          %3209 = sbr.rel (%p3207) target = $region112
        $region111: #{chemp_forward.1} parent=107 // pred_region
          %s3210 = sand.u32 %s451, 1
          %s3211 = scalar_lea.sflag [#allocation5], %s3210
          %s3212 = sand.u32 %s451, 1
          %s3213 = smul.addr %s3212, 4
          %s3214 = scalar_lea.vmem [#allocation6], %s3213
          %3215 = dma.done %s3211, 64
        $region112: #{chemp_forward.1} parent=107 // pred_fallthru
          _
        // Predicated region
        $region113: #{chemp_forward.1} parent=107 // pred_check
          %p3216 = pneg %p492
        $region114: #{chemp_forward.1} parent=107 // pred_check_branch
          %3218 = sbr.rel (%p3216) target = $region116
        $region115: #{chemp_forward.1} parent=107 // pred_region
          %p3219 = scmp.lt.s32.totalorder %s40, 1
          %s3220 = scalar_select %p3219, %s40, 1
          %s3221 = smul.addr %s3220, 2
          %s3222 = scalar_lea.vmem %s19, %s3221
        $region116: #{chemp_forward.1} parent=107 // pred_fallthru
          _
      $region108: #{chemp_forward.1} parent=5 // pred_fallthru
        _
    $region6: #{chemp_forward.1} parent=1 // loop_footer
      %s38 = sadd.s32 1, %s34
    $region7: #{chemp_forward.1} parent=1 // loop_footer_branch
      %33 = sbr.rel target = $region3
    $region8: #{chemp_forward.1} parent=1 // loop_exit
      _
    %3223 = vsyncpa [#allocation4], 1
    %s3224 = scalar_lea.sflag [#allocation4], 1
    %3225 = vsyncpa %s3224, 1
    %3226 = vsyncpa [#allocation5], 1
    %s3227 = scalar_lea.sflag [#allocation5], 1
    %3228 = vsyncpa %s3227, 1

</llo_original>
